<compile_context>
chip_gen: v6e
topology: v6e:2x2x1
jax: 0.10.0
libtpu: 0.0.40
codegen_flags: <defaults>
</compile_context>

<pallas_src>
import math
import functools

import jax
import jax.numpy as jnp
from jax.experimental import pallas as pl
from jax.experimental.pallas import tpu as pltpu


# ----------------------------- in-kernel math ------------------------------

def _silu(x):
    return x * jax.nn.sigmoid(x)


def _softplus(x):
    # matches torch.nn.functional.softplus(beta=1, threshold=20)
    return jnp.where(x > 20.0, x, jnp.log1p(jnp.exp(jnp.minimum(x, 20.0))))


# ------------------------------ fused kernel --------------------------------
#
# SwiGLU order (17 total) for the packed conditioning matmul:
#   0: ou_dec
#   1..6:  down0_in, down0_out, down1_in, down1_out, down2_in, down2_out
#   7..8:  flat0_in, flat0_out
#   9..14: up0_in, up0_out, up1_in, up1_out, up2_in, up2_out
#   15..16: flat1_in, flat1_out
#
# Per-SwiGLU remaining (x-path) weights passed to the kernel:
#   ou_dec      : (wo, bo)                       -- x-path is empty
#   others (16) : (w1x, wo, bo)                  -- b1 folded into packed bias

def _make_kernel(seg_off, seg_width):
    # seg_off / seg_width: static Python tuples of lane offsets / widths of
    # each SwiGLU's segment inside the packed conditioning activation hc.

    def kernel(x_ref, t_ref, cond_ref, freqs_ref, ou_const_ref,
               wc_ref, bc_ref, *rest):
        out_ref = rest[-1]
        w_refs = rest[:-1]
        ou_wo, ou_bo = w_refs[0], w_refs[1]
        blk = [tuple(w_refs[2 + 3 * i: 2 + 3 * i + 3]) for i in range(16)]
        (d0_in, d0_out, d1_in, d1_out, d2_in, d2_out,
         f0_in, f0_out,
         u0_in, u0_out, u1_in, u1_out, u2_in, u2_out,
         f1_in, f1_out) = blk

        x = x_ref[...]                                   # (B, x_dim)
        cond = cond_ref[...]                             # (B, cond_dim)

        # --- time embedding + const, fused in-kernel (sin/cos -> EUP) ---
        # TODO(synk): coatiLDM's get_time_embedding source is not provided;
        # this is the standard DDPM sinusoidal embedding (sin | cos halves),
        # with the t/time_max scaling folded into freqs on the host side.
        targ = t_ref[...] * freqs_ref[...]               # (B,1)*(1,half)->(B,half)
        time = jnp.concatenate([jnp.sin(targ), jnp.cos(targ)], axis=-1)
        const = jnp.concatenate([time, cond], axis=-1)   # (B, time_dim+cond_dim)

        # ONE matmul for every SwiGLU's conditioning contribution (+ b1).
        hc = (jnp.dot(const, wc_ref[...], preferred_element_type=jnp.float32)
              + bc_ref[...])                             # (B, sum_i 2*d_out_i)

        def cslice(i):
            off, w = seg_off[i], seg_width[i]
            return hc[:, off:off + w]

        def swiglu_tail(h, wo, bo):
            # TODO(synk): SwiGLUNet internals are not shipped with the module
            # source; this is the standard SwiGLU MLP reconstruction
            # (dropout=0, no weight norm, no internal residual).
            d = wo.shape[0]
            g = h[:, :d]
            v = h[:, d:]
            return jnp.dot(_silu(g) * v, wo[...],
                           preferred_element_type=jnp.float32) + bo[...]

        def swiglu(xin, i, w3):
            # SwiGLUNet applied to concat([xin, const], -1); const part comes
            # from the packed matmul segment i, b1 already folded in.
            w1x, wo, bo = w3
            h = (jnp.dot(xin, w1x[...], preferred_element_type=jnp.float32)
                 + cslice(i))
            return swiglu_tail(h, wo, bo)

        # --- OU prior decoder (input is exactly [time|cond] == const) ---
        fac = _softplus(swiglu_tail(cslice(0), ou_wo, ou_bo))
        z0 = (x - ou_const_ref[...]) * fac

        # --- block bodies (BottleNeck / Flat / Up forward semantics) ---
        def bottleneck(xb, i0, w_in, w_out):
            z = swiglu(xb, i0, w_in)
            z2 = swiglu(_silu(z), i0 + 1, w_out)
            return xb + z2, z

        def flat(xb, i0, w_in, w_out):
            z = swiglu(xb, i0, w_in)
            z2 = swiglu(xb + _silu(z), i0 + 1, w_out)
            return xb + z2

        def up(xb, i0, w_in, w_out):
            z = swiglu(xb, i0, w_in)
            z2 = swiglu(_silu(z), i0 + 1, w_out)
            return z + z2

        # --- U-Net wiring ---
        x0, d0 = bottleneck(x, 1, d0_in, d0_out)
        x1, d1 = bottleneck(d0, 3, d1_in, d1_out)
        x2, d2 = bottleneck(d1, 5, d2_in, d2_out)
        x3 = flat(d2, 7, f0_in, f0_out)
        y2 = up(x3, 9, u0_in, u0_out)
        y1 = up(y2 + x2, 11, u1_in, u1_out)
        y0 = up(x1 + y1, 13, u2_in, u2_out)
        out = flat(x0 + y0 + z0, 15, f1_in, f1_out)
        out_ref[...] = out.astype(out_ref.dtype)

    return kernel


# ------------------------------ call wrapper ---------------------------------

def _swiglu_order(params):
    # Fixed SwiGLU ordering (ou first).  Each entry: (w1x, w1c, b1, wo, bo).
    order = [params["ou_dec"]]
    for w_in, w_out in params["down"]:
        order += [w_in, w_out]
    order += [params["flat0"][0], params["flat0"][1]]
    for w_in, w_out in params["up"]:
        order += [w_in, w_out]
    order += [params["flat1"][0], params["flat1"][1]]
    return order


def non_conv_unet_forward(params, x, t, cond, *, time_max, time_dim):
    B, x_dim = x.shape
    half = time_dim // 2
    # DDPM frequencies with the t/time_max scaling folded in.
    freqs = (jnp.exp(-math.log(10000.0)
                     * jnp.arange(half, dtype=jnp.float32) / max(half - 1, 1))
             / time_max)[None, :]                        # (1, half)
    t2 = t.astype(jnp.float32).reshape(B, 1)             # (B, 1)

    sw = _swiglu_order(params)

    # Pack every SwiGLU's [time|cond] first-layer weight / bias along the
    # output axis -> one conditioning matmul in-kernel.
    wc_parts, bc_parts, widths = [], [], []
    for i, (w1x, w1c, b1, wo, bo) in enumerate(sw):
        if i == 0:   # OU decoder: its whole input is [time|cond]
            wc_parts.append(jnp.concatenate([w1x, w1c], axis=0))
        else:
            wc_parts.append(w1c)
        bc_parts.append(b1)
        widths.append(b1.shape[1])
    wc_all = jnp.concatenate(wc_parts, axis=1)           # (c_dim, sum 2*d_out)
    bc_all = jnp.concatenate(bc_parts, axis=1)           # (1,     sum 2*d_out)
    offs, o = [], 0
    for w in widths:
        offs.append(o)
        o += w
    seg_off, seg_width = tuple(offs), tuple(widths)

    # Remaining per-SwiGLU weights: ou -> (wo, bo); others -> (w1x, wo, bo).
    weights = [sw[0][3], sw[0][4]]
    for (w1x, w1c, b1, wo, bo) in sw[1:]:
        weights += [w1x, wo, bo]

    args = [x, t2, cond, freqs, params["ou_const"], wc_all, bc_all] + weights

    # Batch tiling: full batch if small, otherwise a multiple-of-8 tile so the
    # grid pipelines activation tiles and shards over v7x's two TensorCores.
    tile_b = B
    for cand in (256, 128, 64, 32, 16, 8):
        if B % cand == 0:
            tile_b = cand
            break
    grid = (B // tile_b,)

    def batch_spec(arr):
        nd = arr.ndim
        return pl.BlockSpec((tile_b,) + arr.shape[1:],
                            lambda i, _nd=nd: (i,) + (0,) * (_nd - 1))

    def resident_spec(arr):
        nd = arr.ndim
        return pl.BlockSpec(arr.shape, lambda i, _nd=nd: (0,) * _nd)

    in_specs = ([batch_spec(x), batch_spec(t2), batch_spec(cond),
                 resident_spec(freqs), resident_spec(params["ou_const"]),
                 resident_spec(wc_all), resident_spec(bc_all)]
                + [resident_spec(w) for w in weights])
    out_specs = pl.BlockSpec((tile_b, x_dim), lambda i: (i, 0))

    return pl.pallas_call(
        _make_kernel(seg_off, seg_width),
        grid=grid,
        in_specs=in_specs,
        out_specs=out_specs,
        out_shape=jax.ShapeDtypeStruct((B, x_dim), jnp.float32),
        compiler_params=pltpu.CompilerParams(
            dimension_semantics=("parallel",)),
    )(*args)


# ------------------------------ params ---------------------------------------

def _init_linear(key, d_in, d_out):
    kw, kb = jax.random.split(key)
    lim = 1.0 / math.sqrt(d_in)
    w = jax.random.uniform(kw, (d_in, d_out), jnp.float32, -lim, lim)
    b = jax.random.uniform(kb, (1, d_out), jnp.float32, -lim, lim)
    return w, b


def _init_swiglu_packed(key, d_x, d_c, d_out):
    # SwiGLUNet(d_x + d_c -> d_out): gate/value first-layer weights packed
    # along the output axis and split along the contraction axis at d_x.
    k1, k2, k3 = jax.random.split(key, 3)
    wg, bg = _init_linear(k1, d_x + d_c, d_out)
    wv, bv = _init_linear(k2, d_x + d_c, d_out)
    wo, bo = _init_linear(k3, d_out, d_out)
    w1 = jnp.concatenate([wg, wv], axis=1)   # (d_x+d_c, 2*d_out)
    b1 = jnp.concatenate([bg, bv], axis=1)   # (1, 2*d_out)
    return (w1[:d_x], w1[d_x:], b1, wo, bo)


def init_params(key, x_dim, cond_dim, time_dim):
    c_dim = time_dim + cond_dim
    keys = jax.random.split(key, 18)
    dims = [x_dim, x_dim // 2, x_dim // 4, x_dim // 8]
    p = {}
    p["ou_const"] = jax.random.normal(keys[0], (1, x_dim), jnp.float32)
    p["ou_dec"] = _init_swiglu_packed(keys[1], time_dim, cond_dim, x_dim)
    ki = 2
    p["down"] = []
    for i in range(3):
        w_in = _init_swiglu_packed(keys[ki], dims[i], c_dim, dims[i + 1]); ki += 1
        w_out = _init_swiglu_packed(keys[ki], dims[i + 1], c_dim, dims[i]); ki += 1
        p["down"].append((w_in, w_out))
    p["flat0"] = (_init_swiglu_packed(keys[ki], dims[3], c_dim, dims[3]),
                  _init_swiglu_packed(keys[ki + 1], dims[3], c_dim, dims[3]))
    ki += 2
    p["flat1"] = (_init_swiglu_packed(keys[ki], dims[0], c_dim, dims[0]),
                  _init_swiglu_packed(keys[ki + 1], dims[0], c_dim, dims[0]))
    ki += 2
    p["up"] = []
    for i in range(3):
        d_in, d_out = dims[3 - i], dims[2 - i]
        w_in = _init_swiglu_packed(keys[ki], d_in, c_dim, d_out); ki += 1
        w_out = _init_swiglu_packed(keys[ki], d_out, c_dim, d_out); ki += 1
        p["up"].append((w_in, w_out))
    return p


# ---------------------------------- main -------------------------------------

if __name__ == "__main__":
    x_dim, cond_dim, time_dim, time_max = 32, 4, 8, 1.0
    batch = 2

    key = jax.random.PRNGKey(0)
    kp, kx, kt, kc = jax.random.split(key, 4)
    params = init_params(kp, x_dim, cond_dim, time_dim)
    x = jax.random.normal(kx, (batch, x_dim), jnp.float32)
    t = jax.random.uniform(kt, (batch,), jnp.float32, 0.0, time_max)
    cond = jax.random.normal(kc, (batch, cond_dim), jnp.float32)

    fwd = jax.jit(functools.partial(non_conv_unet_forward,
                                    time_max=time_max, time_dim=time_dim))
    out = fwd(params, x, t, cond)
    jax.block_until_ready(out)
    assert out.shape == (batch, x_dim) and out.dtype == jnp.float32
    assert bool(jnp.all(jnp.isfinite(out)))
    print("KERNEL_OK")
</pallas_src>

<mosaic_0001>
module attributes {stable_mosaic.version = 11 : i64} {
  func.func @kernel(%arg0: i32, %arg1: memref<2x32xf32, #tpu.memory_space<vmem>>, %arg2: memref<2x1xf32, #tpu.memory_space<vmem>>, %arg3: memref<2x4xf32, #tpu.memory_space<vmem>>, %arg4: memref<1x4xf32, #tpu.memory_space<vmem>>, %arg5: memref<1x32xf32, #tpu.memory_space<vmem>>, %arg6: memref<12x600xf32, #tpu.memory_space<vmem>>, %arg7: memref<1x600xf32, #tpu.memory_space<vmem>>, %arg8: memref<32x32xf32, #tpu.memory_space<vmem>>, %arg9: memref<1x32xf32, #tpu.memory_space<vmem>>, %arg10: memref<32x32xf32, #tpu.memory_space<vmem>>, %arg11: memref<16x16xf32, #tpu.memory_space<vmem>>, %arg12: memref<1x16xf32, #tpu.memory_space<vmem>>, %arg13: memref<16x64xf32, #tpu.memory_space<vmem>>, %arg14: memref<32x32xf32, #tpu.memory_space<vmem>>, %arg15: memref<1x32xf32, #tpu.memory_space<vmem>>, %arg16: memref<16x16xf32, #tpu.memory_space<vmem>>, %arg17: memref<8x8xf32, #tpu.memory_space<vmem>>, %arg18: memref<1x8xf32, #tpu.memory_space<vmem>>, %arg19: memref<8x32xf32, #tpu.memory_space<vmem>>, %arg20: memref<16x16xf32, #tpu.memory_space<vmem>>, %arg21: memref<1x16xf32, #tpu.memory_space<vmem>>, %arg22: memref<8x8xf32, #tpu.memory_space<vmem>>, %arg23: memref<4x4xf32, #tpu.memory_space<vmem>>, %arg24: memref<1x4xf32, #tpu.memory_space<vmem>>, %arg25: memref<4x16xf32, #tpu.memory_space<vmem>>, %arg26: memref<8x8xf32, #tpu.memory_space<vmem>>, %arg27: memref<1x8xf32, #tpu.memory_space<vmem>>, %arg28: memref<4x8xf32, #tpu.memory_space<vmem>>, %arg29: memref<4x4xf32, #tpu.memory_space<vmem>>, %arg30: memref<1x4xf32, #tpu.memory_space<vmem>>, %arg31: memref<4x8xf32, #tpu.memory_space<vmem>>, %arg32: memref<4x4xf32, #tpu.memory_space<vmem>>, %arg33: memref<1x4xf32, #tpu.memory_space<vmem>>, %arg34: memref<4x16xf32, #tpu.memory_space<vmem>>, %arg35: memref<8x8xf32, #tpu.memory_space<vmem>>, %arg36: memref<1x8xf32, #tpu.memory_space<vmem>>, %arg37: memref<8x16xf32, #tpu.memory_space<vmem>>, %arg38: memref<8x8xf32, #tpu.memory_space<vmem>>, %arg39: memref<1x8xf32, #tpu.memory_space<vmem>>, %arg40: memref<8x32xf32, #tpu.memory_space<vmem>>, %arg41: memref<16x16xf32, #tpu.memory_space<vmem>>, %arg42: memref<1x16xf32, #tpu.memory_space<vmem>>, %arg43: memref<16x32xf32, #tpu.memory_space<vmem>>, %arg44: memref<16x16xf32, #tpu.memory_space<vmem>>, %arg45: memref<1x16xf32, #tpu.memory_space<vmem>>, %arg46: memref<16x64xf32, #tpu.memory_space<vmem>>, %arg47: memref<32x32xf32, #tpu.memory_space<vmem>>, %arg48: memref<1x32xf32, #tpu.memory_space<vmem>>, %arg49: memref<32x64xf32, #tpu.memory_space<vmem>>, %arg50: memref<32x32xf32, #tpu.memory_space<vmem>>, %arg51: memref<1x32xf32, #tpu.memory_space<vmem>>, %arg52: memref<32x64xf32, #tpu.memory_space<vmem>>, %arg53: memref<32x32xf32, #tpu.memory_space<vmem>>, %arg54: memref<1x32xf32, #tpu.memory_space<vmem>>, %arg55: memref<32x64xf32, #tpu.memory_space<vmem>>, %arg56: memref<32x32xf32, #tpu.memory_space<vmem>>, %arg57: memref<1x32xf32, #tpu.memory_space<vmem>>, %arg58: memref<2x32xf32, #tpu.memory_space<vmem>>) attributes {dimension_semantics = [#tpu.dimension_semantics<parallel>], iteration_bounds = array<i64: 1>, scalar_prefetch = 0 : i64, scratch_operands = 0 : i64, tpu.core_type = #tpu.core_type<tc>, window_params = [{transform_indices = @transform_0, window_bounds = array<i64: 2, 32>}, {transform_indices = @transform_1, window_bounds = array<i64: 2, 1>}, {transform_indices = @transform_2, window_bounds = array<i64: 2, 4>}, {pipeline_mode = #tpu.pipeline_mode<synchronous>, transform_indices = @transform_3, window_bounds = array<i64: 1, 4>}, {pipeline_mode = #tpu.pipeline_mode<synchronous>, transform_indices = @transform_4, window_bounds = array<i64: 1, 32>}, {pipeline_mode = #tpu.pipeline_mode<synchronous>, transform_indices = @transform_5, window_bounds = array<i64: 12, 600>}, {pipeline_mode = #tpu.pipeline_mode<synchronous>, transform_indices = @transform_6, window_bounds = array<i64: 1, 600>}, {pipeline_mode = #tpu.pipeline_mode<synchronous>, transform_indices = @transform_7, window_bounds = array<i64: 32, 32>}, {pipeline_mode = #tpu.pipeline_mode<synchronous>, transform_indices = @transform_8, window_bounds = array<i64: 1, 32>}, {pipeline_mode = #tpu.pipeline_mode<synchronous>, transform_indices = @transform_9, window_bounds = array<i64: 32, 32>}, {pipeline_mode = #tpu.pipeline_mode<synchronous>, transform_indices = @transform_10, window_bounds = array<i64: 16, 16>}, {pipeline_mode = #tpu.pipeline_mode<synchronous>, transform_indices = @transform_11, window_bounds = array<i64: 1, 16>}, {pipeline_mode = #tpu.pipeline_mode<synchronous>, transform_indices = @transform_12, window_bounds = array<i64: 16, 64>}, {pipeline_mode = #tpu.pipeline_mode<synchronous>, transform_indices = @transform_13, window_bounds = array<i64: 32, 32>}, {pipeline_mode = #tpu.pipeline_mode<synchronous>, transform_indices = @transform_14, window_bounds = array<i64: 1, 32>}, {pipeline_mode = #tpu.pipeline_mode<synchronous>, transform_indices = @transform_15, window_bounds = array<i64: 16, 16>}, {pipeline_mode = #tpu.pipeline_mode<synchronous>, transform_indices = @transform_16, window_bounds = array<i64: 8, 8>}, {pipeline_mode = #tpu.pipeline_mode<synchronous>, transform_indices = @transform_17, window_bounds = array<i64: 1, 8>}, {pipeline_mode = #tpu.pipeline_mode<synchronous>, transform_indices = @transform_18, window_bounds = array<i64: 8, 32>}, {pipeline_mode = #tpu.pipeline_mode<synchronous>, transform_indices = @transform_19, window_bounds = array<i64: 16, 16>}, {pipeline_mode = #tpu.pipeline_mode<synchronous>, transform_indices = @transform_20, window_bounds = array<i64: 1, 16>}, {pipeline_mode = #tpu.pipeline_mode<synchronous>, transform_indices = @transform_21, window_bounds = array<i64: 8, 8>}, {pipeline_mode = #tpu.pipeline_mode<synchronous>, transform_indices = @transform_22, window_bounds = array<i64: 4, 4>}, {pipeline_mode = #tpu.pipeline_mode<synchronous>, transform_indices = @transform_23, window_bounds = array<i64: 1, 4>}, {pipeline_mode = #tpu.pipeline_mode<synchronous>, transform_indices = @transform_24, window_bounds = array<i64: 4, 16>}, {pipeline_mode = #tpu.pipeline_mode<synchronous>, transform_indices = @transform_25, window_bounds = array<i64: 8, 8>}, {pipeline_mode = #tpu.pipeline_mode<synchronous>, transform_indices = @transform_26, window_bounds = array<i64: 1, 8>}, {pipeline_mode = #tpu.pipeline_mode<synchronous>, transform_indices = @transform_27, window_bounds = array<i64: 4, 8>}, {pipeline_mode = #tpu.pipeline_mode<synchronous>, transform_indices = @transform_28, window_bounds = array<i64: 4, 4>}, {pipeline_mode = #tpu.pipeline_mode<synchronous>, transform_indices = @transform_29, window_bounds = array<i64: 1, 4>}, {pipeline_mode = #tpu.pipeline_mode<synchronous>, transform_indices = @transform_30, window_bounds = array<i64: 4, 8>}, {pipeline_mode = #tpu.pipeline_mode<synchronous>, transform_indices = @transform_31, window_bounds = array<i64: 4, 4>}, {pipeline_mode = #tpu.pipeline_mode<synchronous>, transform_indices = @transform_32, window_bounds = array<i64: 1, 4>}, {pipeline_mode = #tpu.pipeline_mode<synchronous>, transform_indices = @transform_33, window_bounds = array<i64: 4, 16>}, {pipeline_mode = #tpu.pipeline_mode<synchronous>, transform_indices = @transform_34, window_bounds = array<i64: 8, 8>}, {pipeline_mode = #tpu.pipeline_mode<synchronous>, transform_indices = @transform_35, window_bounds = array<i64: 1, 8>}, {pipeline_mode = #tpu.pipeline_mode<synchronous>, transform_indices = @transform_36, window_bounds = array<i64: 8, 16>}, {pipeline_mode = #tpu.pipeline_mode<synchronous>, transform_indices = @transform_37, window_bounds = array<i64: 8, 8>}, {pipeline_mode = #tpu.pipeline_mode<synchronous>, transform_indices = @transform_38, window_bounds = array<i64: 1, 8>}, {pipeline_mode = #tpu.pipeline_mode<synchronous>, transform_indices = @transform_39, window_bounds = array<i64: 8, 32>}, {pipeline_mode = #tpu.pipeline_mode<synchronous>, transform_indices = @transform_40, window_bounds = array<i64: 16, 16>}, {pipeline_mode = #tpu.pipeline_mode<synchronous>, transform_indices = @transform_41, window_bounds = array<i64: 1, 16>}, {pipeline_mode = #tpu.pipeline_mode<synchronous>, transform_indices = @transform_42, window_bounds = array<i64: 16, 32>}, {pipeline_mode = #tpu.pipeline_mode<synchronous>, transform_indices = @transform_43, window_bounds = array<i64: 16, 16>}, {pipeline_mode = #tpu.pipeline_mode<synchronous>, transform_indices = @transform_44, window_bounds = array<i64: 1, 16>}, {pipeline_mode = #tpu.pipeline_mode<synchronous>, transform_indices = @transform_45, window_bounds = array<i64: 16, 64>}, {pipeline_mode = #tpu.pipeline_mode<synchronous>, transform_indices = @transform_46, window_bounds = array<i64: 32, 32>}, {pipeline_mode = #tpu.pipeline_mode<synchronous>, transform_indices = @transform_47, window_bounds = array<i64: 1, 32>}, {pipeline_mode = #tpu.pipeline_mode<synchronous>, transform_indices = @transform_48, window_bounds = array<i64: 32, 64>}, {pipeline_mode = #tpu.pipeline_mode<synchronous>, transform_indices = @transform_49, window_bounds = array<i64: 32, 32>}, {pipeline_mode = #tpu.pipeline_mode<synchronous>, transform_indices = @transform_50, window_bounds = array<i64: 1, 32>}, {pipeline_mode = #tpu.pipeline_mode<synchronous>, transform_indices = @transform_51, window_bounds = array<i64: 32, 64>}, {pipeline_mode = #tpu.pipeline_mode<synchronous>, transform_indices = @transform_52, window_bounds = array<i64: 32, 32>}, {pipeline_mode = #tpu.pipeline_mode<synchronous>, transform_indices = @transform_53, window_bounds = array<i64: 1, 32>}, {pipeline_mode = #tpu.pipeline_mode<synchronous>, transform_indices = @transform_54, window_bounds = array<i64: 32, 64>}, {pipeline_mode = #tpu.pipeline_mode<synchronous>, transform_indices = @transform_55, window_bounds = array<i64: 32, 32>}, {pipeline_mode = #tpu.pipeline_mode<synchronous>, transform_indices = @transform_56, window_bounds = array<i64: 1, 32>}, {transform_indices = @transform_57, window_bounds = array<i64: 2, 32>}]} {
    %c0 = arith.constant 0 : index
    %c0_0 = arith.constant 0 : index
    %0 = vector.load %arg1[%c0, %c0_0] : memref<2x32xf32, #tpu.memory_space<vmem>>, vector<2x32xf32>
    %c0_1 = arith.constant 0 : index
    %c0_2 = arith.constant 0 : index
    %1 = vector.load %arg3[%c0_1, %c0_2] : memref<2x4xf32, #tpu.memory_space<vmem>>, vector<2x4xf32>
    %c0_3 = arith.constant 0 : index
    %c0_4 = arith.constant 0 : index
    %2 = vector.load %arg2[%c0_3, %c0_4] : memref<2x1xf32, #tpu.memory_space<vmem>>, vector<2x1xf32>
    %c0_5 = arith.constant 0 : index
    %c0_6 = arith.constant 0 : index
    %3 = vector.load %arg4[%c0_5, %c0_6] : memref<1x4xf32, #tpu.memory_space<vmem>>, vector<1x4xf32>
    %4 = vector.broadcast %2 : vector<2x1xf32> to vector<2x4xf32>
    %5 = vector.broadcast %3 : vector<1x4xf32> to vector<2x4xf32>
    %6 = arith.mulf %4, %5 : vector<2x4xf32>
    %7 = math.sin %6 : vector<2x4xf32>
    %8 = math.cos %6 : vector<2x4xf32>
    %9 = tpu.concatenate %7, %8 in 1 : vector<2x4xf32>, vector<2x4xf32> -> vector<2x8xf32>
    %10 = tpu.concatenate %9, %1 in 1 : vector<2x8xf32>, vector<2x4xf32> -> vector<2x12xf32>
    %c0_7 = arith.constant 0 : index
    %c0_8 = arith.constant 0 : index
    %11 = vector.load %arg6[%c0_7, %c0_8] : memref<12x600xf32, #tpu.memory_space<vmem>>, vector<12x600xf32>
    %cst = arith.constant dense<0.000000e+00> : vector<2x600xf32>
    %12 = tpu.matmul %10, %11, %cst {dimension_numbers = #tpu.dot_dimension_numbers<[1], [0], [0], [1], [0, 0, 1, 1], [], []>} : vector<2x12xf32>, vector<12x600xf32>, vector<2x600xf32> -> vector<2x600xf32>
    %c0_9 = arith.constant 0 : index
    %c0_10 = arith.constant 0 : index
    %13 = vector.load %arg7[%c0_9, %c0_10] : memref<1x600xf32, #tpu.memory_space<vmem>>, vector<1x600xf32>
    %14 = vector.broadcast %13 : vector<1x600xf32> to vector<2x600xf32>
    %15 = arith.addf %12, %14 : vector<2x600xf32>
    %16 = vector.extract_strided_slice %15 {offsets = [0, 0], sizes = [2, 64], strides = [1, 1]} : vector<2x600xf32> to vector<2x64xf32>
    %17 = vector.extract_strided_slice %16 {offsets = [0, 0], sizes = [2, 32], strides = [1, 1]} : vector<2x64xf32> to vector<2x32xf32>
    %18 = vector.extract_strided_slice %16 {offsets = [0, 32], sizes = [2, 32], strides = [1, 1]} : vector<2x64xf32> to vector<2x32xf32>
    %19 = arith.negf %17 : vector<2x32xf32>
    %20 = math.exp %19 : vector<2x32xf32>
    %cst_11 = arith.constant 1.000000e+00 : f32
    %21 = vector.broadcast %cst_11 : f32 to vector<2x32xf32>
    %22 = arith.addf %21, %20 : vector<2x32xf32>
    %23 = arith.divf %21, %22 : vector<2x32xf32>
    %24 = arith.mulf %17, %23 : vector<2x32xf32>
    %25 = arith.mulf %24, %18 : vector<2x32xf32>
    %c0_12 = arith.constant 0 : index
    %c0_13 = arith.constant 0 : index
    %26 = vector.load %arg8[%c0_12, %c0_13] : memref<32x32xf32, #tpu.memory_space<vmem>>, vector<32x32xf32>
    %cst_14 = arith.constant dense<0.000000e+00> : vector<2x32xf32>
    %27 = tpu.matmul %25, %26, %cst_14 {dimension_numbers = #tpu.dot_dimension_numbers<[1], [0], [0], [1], [0, 0, 1, 1], [], []>} : vector<2x32xf32>, vector<32x32xf32>, vector<2x32xf32> -> vector<2x32xf32>
    %c0_15 = arith.constant 0 : index
    %c0_16 = arith.constant 0 : index
    %28 = vector.load %arg9[%c0_15, %c0_16] : memref<1x32xf32, #tpu.memory_space<vmem>>, vector<1x32xf32>
    %29 = vector.broadcast %28 : vector<1x32xf32> to vector<2x32xf32>
    %30 = arith.addf %27, %29 : vector<2x32xf32>
    %cst_17 = arith.constant 2.000000e+01 : f32
    %31 = vector.broadcast %cst_17 : f32 to vector<2x32xf32>
    %32 = arith.cmpf ogt, %30, %31 : vector<2x32xf32>
    %cst_18 = arith.constant 2.000000e+01 : f32
    %33 = vector.broadcast %cst_18 : f32 to vector<2x32xf32>
    %34 = arith.minimumf %30, %33 : vector<2x32xf32>
    %35 = math.exp %34 : vector<2x32xf32>
    %36 = math.log1p %35 : vector<2x32xf32>
    %37 = arith.select %32, %30, %36 : vector<2x32xi1>, vector<2x32xf32>
    %c0_19 = arith.constant 0 : index
    %c0_20 = arith.constant 0 : index
    %38 = vector.load %arg5[%c0_19, %c0_20] : memref<1x32xf32, #tpu.memory_space<vmem>>, vector<1x32xf32>
    %39 = vector.broadcast %38 : vector<1x32xf32> to vector<2x32xf32>
    %40 = arith.subf %0, %39 : vector<2x32xf32>
    %41 = arith.mulf %40, %37 : vector<2x32xf32>
    %c0_21 = arith.constant 0 : index
    %c0_22 = arith.constant 0 : index
    %42 = vector.load %arg10[%c0_21, %c0_22] : memref<32x32xf32, #tpu.memory_space<vmem>>, vector<32x32xf32>
    %cst_23 = arith.constant dense<0.000000e+00> : vector<2x32xf32>
    %43 = tpu.matmul %0, %42, %cst_23 {dimension_numbers = #tpu.dot_dimension_numbers<[1], [0], [0], [1], [0, 0, 1, 1], [], []>} : vector<2x32xf32>, vector<32x32xf32>, vector<2x32xf32> -> vector<2x32xf32>
    %44 = vector.extract_strided_slice %15 {offsets = [0, 64], sizes = [2, 32], strides = [1, 1]} : vector<2x600xf32> to vector<2x32xf32>
    %45 = arith.addf %43, %44 : vector<2x32xf32>
    %46 = vector.extract_strided_slice %45 {offsets = [0, 0], sizes = [2, 16], strides = [1, 1]} : vector<2x32xf32> to vector<2x16xf32>
    %47 = vector.extract_strided_slice %45 {offsets = [0, 16], sizes = [2, 16], strides = [1, 1]} : vector<2x32xf32> to vector<2x16xf32>
    %48 = arith.negf %46 : vector<2x16xf32>
    %49 = math.exp %48 : vector<2x16xf32>
    %cst_24 = arith.constant 1.000000e+00 : f32
    %50 = vector.broadcast %cst_24 : f32 to vector<2x16xf32>
    %51 = arith.addf %50, %49 : vector<2x16xf32>
    %52 = arith.divf %50, %51 : vector<2x16xf32>
    %53 = arith.mulf %46, %52 : vector<2x16xf32>
    %54 = arith.mulf %53, %47 : vector<2x16xf32>
    %c0_25 = arith.constant 0 : index
    %c0_26 = arith.constant 0 : index
    %55 = vector.load %arg11[%c0_25, %c0_26] : memref<16x16xf32, #tpu.memory_space<vmem>>, vector<16x16xf32>
    %cst_27 = arith.constant dense<0.000000e+00> : vector<2x16xf32>
    %56 = tpu.matmul %54, %55, %cst_27 {dimension_numbers = #tpu.dot_dimension_numbers<[1], [0], [0], [1], [0, 0, 1, 1], [], []>} : vector<2x16xf32>, vector<16x16xf32>, vector<2x16xf32> -> vector<2x16xf32>
    %c0_28 = arith.constant 0 : index
    %c0_29 = arith.constant 0 : index
    %57 = vector.load %arg12[%c0_28, %c0_29] : memref<1x16xf32, #tpu.memory_space<vmem>>, vector<1x16xf32>
    %58 = vector.broadcast %57 : vector<1x16xf32> to vector<2x16xf32>
    %59 = arith.addf %56, %58 : vector<2x16xf32>
    %60 = arith.negf %59 : vector<2x16xf32>
    %61 = math.exp %60 : vector<2x16xf32>
    %cst_30 = arith.constant 1.000000e+00 : f32
    %62 = vector.broadcast %cst_30 : f32 to vector<2x16xf32>
    %63 = arith.addf %62, %61 : vector<2x16xf32>
    %64 = arith.divf %62, %63 : vector<2x16xf32>
    %65 = arith.mulf %59, %64 : vector<2x16xf32>
    %c0_31 = arith.constant 0 : index
    %c0_32 = arith.constant 0 : index
    %66 = vector.load %arg13[%c0_31, %c0_32] : memref<16x64xf32, #tpu.memory_space<vmem>>, vector<16x64xf32>
    %cst_33 = arith.constant dense<0.000000e+00> : vector<2x64xf32>
    %67 = tpu.matmul %65, %66, %cst_33 {dimension_numbers = #tpu.dot_dimension_numbers<[1], [0], [0], [1], [0, 0, 1, 1], [], []>} : vector<2x16xf32>, vector<16x64xf32>, vector<2x64xf32> -> vector<2x64xf32>
    %68 = vector.extract_strided_slice %15 {offsets = [0, 96], sizes = [2, 64], strides = [1, 1]} : vector<2x600xf32> to vector<2x64xf32>
    %69 = arith.addf %67, %68 : vector<2x64xf32>
    %70 = vector.extract_strided_slice %69 {offsets = [0, 0], sizes = [2, 32], strides = [1, 1]} : vector<2x64xf32> to vector<2x32xf32>
    %71 = vector.extract_strided_slice %69 {offsets = [0, 32], sizes = [2, 32], strides = [1, 1]} : vector<2x64xf32> to vector<2x32xf32>
    %72 = arith.negf %70 : vector<2x32xf32>
    %73 = math.exp %72 : vector<2x32xf32>
    %cst_34 = arith.constant 1.000000e+00 : f32
    %74 = vector.broadcast %cst_34 : f32 to vector<2x32xf32>
    %75 = arith.addf %74, %73 : vector<2x32xf32>
    %76 = arith.divf %74, %75 : vector<2x32xf32>
    %77 = arith.mulf %70, %76 : vector<2x32xf32>
    %78 = arith.mulf %77, %71 : vector<2x32xf32>
    %c0_35 = arith.constant 0 : index
    %c0_36 = arith.constant 0 : index
    %79 = vector.load %arg14[%c0_35, %c0_36] : memref<32x32xf32, #tpu.memory_space<vmem>>, vector<32x32xf32>
    %cst_37 = arith.constant dense<0.000000e+00> : vector<2x32xf32>
    %80 = tpu.matmul %78, %79, %cst_37 {dimension_numbers = #tpu.dot_dimension_numbers<[1], [0], [0], [1], [0, 0, 1, 1], [], []>} : vector<2x32xf32>, vector<32x32xf32>, vector<2x32xf32> -> vector<2x32xf32>
    %c0_38 = arith.constant 0 : index
    %c0_39 = arith.constant 0 : index
    %81 = vector.load %arg15[%c0_38, %c0_39] : memref<1x32xf32, #tpu.memory_space<vmem>>, vector<1x32xf32>
    %82 = vector.broadcast %81 : vector<1x32xf32> to vector<2x32xf32>
    %83 = arith.addf %80, %82 : vector<2x32xf32>
    %84 = arith.addf %0, %83 : vector<2x32xf32>
    %c0_40 = arith.constant 0 : index
    %c0_41 = arith.constant 0 : index
    %85 = vector.load %arg16[%c0_40, %c0_41] : memref<16x16xf32, #tpu.memory_space<vmem>>, vector<16x16xf32>
    %cst_42 = arith.constant dense<0.000000e+00> : vector<2x16xf32>
    %86 = tpu.matmul %59, %85, %cst_42 {dimension_numbers = #tpu.dot_dimension_numbers<[1], [0], [0], [1], [0, 0, 1, 1], [], []>} : vector<2x16xf32>, vector<16x16xf32>, vector<2x16xf32> -> vector<2x16xf32>
    %87 = vector.extract_strided_slice %15 {offsets = [0, 160], sizes = [2, 16], strides = [1, 1]} : vector<2x600xf32> to vector<2x16xf32>
    %88 = arith.addf %86, %87 : vector<2x16xf32>
    %89 = vector.extract_strided_slice %88 {offsets = [0, 0], sizes = [2, 8], strides = [1, 1]} : vector<2x16xf32> to vector<2x8xf32>
    %90 = vector.extract_strided_slice %88 {offsets = [0, 8], sizes = [2, 8], strides = [1, 1]} : vector<2x16xf32> to vector<2x8xf32>
    %91 = arith.negf %89 : vector<2x8xf32>
    %92 = math.exp %91 : vector<2x8xf32>
    %cst_43 = arith.constant 1.000000e+00 : f32
    %93 = vector.broadcast %cst_43 : f32 to vector<2x8xf32>
    %94 = arith.addf %93, %92 : vector<2x8xf32>
    %95 = arith.divf %93, %94 : vector<2x8xf32>
    %96 = arith.mulf %89, %95 : vector<2x8xf32>
    %97 = arith.mulf %96, %90 : vector<2x8xf32>
    %c0_44 = arith.constant 0 : index
    %c0_45 = arith.constant 0 : index
    %98 = vector.load %arg17[%c0_44, %c0_45] : memref<8x8xf32, #tpu.memory_space<vmem>>, vector<8x8xf32>
    %cst_46 = arith.constant dense<0.000000e+00> : vector<2x8xf32>
    %99 = tpu.matmul %97, %98, %cst_46 {dimension_numbers = #tpu.dot_dimension_numbers<[1], [0], [0], [1], [0, 0, 1, 1], [], []>} : vector<2x8xf32>, vector<8x8xf32>, vector<2x8xf32> -> vector<2x8xf32>
    %c0_47 = arith.constant 0 : index
    %c0_48 = arith.constant 0 : index
    %100 = vector.load %arg18[%c0_47, %c0_48] : memref<1x8xf32, #tpu.memory_space<vmem>>, vector<1x8xf32>
    %101 = vector.broadcast %100 : vector<1x8xf32> to vector<2x8xf32>
    %102 = arith.addf %99, %101 : vector<2x8xf32>
    %103 = arith.negf %102 : vector<2x8xf32>
    %104 = math.exp %103 : vector<2x8xf32>
    %cst_49 = arith.constant 1.000000e+00 : f32
    %105 = vector.broadcast %cst_49 : f32 to vector<2x8xf32>
    %106 = arith.addf %105, %104 : vector<2x8xf32>
    %107 = arith.divf %105, %106 : vector<2x8xf32>
    %108 = arith.mulf %102, %107 : vector<2x8xf32>
    %c0_50 = arith.constant 0 : index
    %c0_51 = arith.constant 0 : index
    %109 = vector.load %arg19[%c0_50, %c0_51] : memref<8x32xf32, #tpu.memory_space<vmem>>, vector<8x32xf32>
    %cst_52 = arith.constant dense<0.000000e+00> : vector<2x32xf32>
    %110 = tpu.matmul %108, %109, %cst_52 {dimension_numbers = #tpu.dot_dimension_numbers<[1], [0], [0], [1], [0, 0, 1, 1], [], []>} : vector<2x8xf32>, vector<8x32xf32>, vector<2x32xf32> -> vector<2x32xf32>
    %111 = vector.extract_strided_slice %15 {offsets = [0, 176], sizes = [2, 32], strides = [1, 1]} : vector<2x600xf32> to vector<2x32xf32>
    %112 = arith.addf %110, %111 : vector<2x32xf32>
    %113 = vector.extract_strided_slice %112 {offsets = [0, 0], sizes = [2, 16], strides = [1, 1]} : vector<2x32xf32> to vector<2x16xf32>
    %114 = vector.extract_strided_slice %112 {offsets = [0, 16], sizes = [2, 16], strides = [1, 1]} : vector<2x32xf32> to vector<2x16xf32>
    %115 = arith.negf %113 : vector<2x16xf32>
    %116 = math.exp %115 : vector<2x16xf32>
    %cst_53 = arith.constant 1.000000e+00 : f32
    %117 = vector.broadcast %cst_53 : f32 to vector<2x16xf32>
    %118 = arith.addf %117, %116 : vector<2x16xf32>
    %119 = arith.divf %117, %118 : vector<2x16xf32>
    %120 = arith.mulf %113, %119 : vector<2x16xf32>
    %121 = arith.mulf %120, %114 : vector<2x16xf32>
    %c0_54 = arith.constant 0 : index
    %c0_55 = arith.constant 0 : index
    %122 = vector.load %arg20[%c0_54, %c0_55] : memref<16x16xf32, #tpu.memory_space<vmem>>, vector<16x16xf32>
    %cst_56 = arith.constant dense<0.000000e+00> : vector<2x16xf32>
    %123 = tpu.matmul %121, %122, %cst_56 {dimension_numbers = #tpu.dot_dimension_numbers<[1], [0], [0], [1], [0, 0, 1, 1], [], []>} : vector<2x16xf32>, vector<16x16xf32>, vector<2x16xf32> -> vector<2x16xf32>
    %c0_57 = arith.constant 0 : index
    %c0_58 = arith.constant 0 : index
    %124 = vector.load %arg21[%c0_57, %c0_58] : memref<1x16xf32, #tpu.memory_space<vmem>>, vector<1x16xf32>
    %125 = vector.broadcast %124 : vector<1x16xf32> to vector<2x16xf32>
    %126 = arith.addf %123, %125 : vector<2x16xf32>
    %127 = arith.addf %59, %126 : vector<2x16xf32>
    %c0_59 = arith.constant 0 : index
    %c0_60 = arith.constant 0 : index
    %128 = vector.load %arg22[%c0_59, %c0_60] : memref<8x8xf32, #tpu.memory_space<vmem>>, vector<8x8xf32>
    %cst_61 = arith.constant dense<0.000000e+00> : vector<2x8xf32>
    %129 = tpu.matmul %102, %128, %cst_61 {dimension_numbers = #tpu.dot_dimension_numbers<[1], [0], [0], [1], [0, 0, 1, 1], [], []>} : vector<2x8xf32>, vector<8x8xf32>, vector<2x8xf32> -> vector<2x8xf32>
    %130 = vector.extract_strided_slice %15 {offsets = [0, 208], sizes = [2, 8], strides = [1, 1]} : vector<2x600xf32> to vector<2x8xf32>
    %131 = arith.addf %129, %130 : vector<2x8xf32>
    %132 = vector.extract_strided_slice %131 {offsets = [0, 0], sizes = [2, 4], strides = [1, 1]} : vector<2x8xf32> to vector<2x4xf32>
    %133 = vector.extract_strided_slice %131 {offsets = [0, 4], sizes = [2, 4], strides = [1, 1]} : vector<2x8xf32> to vector<2x4xf32>
    %134 = arith.negf %132 : vector<2x4xf32>
    %135 = math.exp %134 : vector<2x4xf32>
    %cst_62 = arith.constant 1.000000e+00 : f32
    %136 = vector.broadcast %cst_62 : f32 to vector<2x4xf32>
    %137 = arith.addf %136, %135 : vector<2x4xf32>
    %138 = arith.divf %136, %137 : vector<2x4xf32>
    %139 = arith.mulf %132, %138 : vector<2x4xf32>
    %140 = arith.mulf %139, %133 : vector<2x4xf32>
    %c0_63 = arith.constant 0 : index
    %c0_64 = arith.constant 0 : index
    %141 = vector.load %arg23[%c0_63, %c0_64] : memref<4x4xf32, #tpu.memory_space<vmem>>, vector<4x4xf32>
    %cst_65 = arith.constant dense<0.000000e+00> : vector<2x4xf32>
    %142 = tpu.matmul %140, %141, %cst_65 {dimension_numbers = #tpu.dot_dimension_numbers<[1], [0], [0], [1], [0, 0, 1, 1], [], []>} : vector<2x4xf32>, vector<4x4xf32>, vector<2x4xf32> -> vector<2x4xf32>
    %c0_66 = arith.constant 0 : index
    %c0_67 = arith.constant 0 : index
    %143 = vector.load %arg24[%c0_66, %c0_67] : memref<1x4xf32, #tpu.memory_space<vmem>>, vector<1x4xf32>
    %144 = vector.broadcast %143 : vector<1x4xf32> to vector<2x4xf32>
    %145 = arith.addf %142, %144 : vector<2x4xf32>
    %146 = arith.negf %145 : vector<2x4xf32>
    %147 = math.exp %146 : vector<2x4xf32>
    %cst_68 = arith.constant 1.000000e+00 : f32
    %148 = vector.broadcast %cst_68 : f32 to vector<2x4xf32>
    %149 = arith.addf %148, %147 : vector<2x4xf32>
    %150 = arith.divf %148, %149 : vector<2x4xf32>
    %151 = arith.mulf %145, %150 : vector<2x4xf32>
    %c0_69 = arith.constant 0 : index
    %c0_70 = arith.constant 0 : index
    %152 = vector.load %arg25[%c0_69, %c0_70] : memref<4x16xf32, #tpu.memory_space<vmem>>, vector<4x16xf32>
    %cst_71 = arith.constant dense<0.000000e+00> : vector<2x16xf32>
    %153 = tpu.matmul %151, %152, %cst_71 {dimension_numbers = #tpu.dot_dimension_numbers<[1], [0], [0], [1], [0, 0, 1, 1], [], []>} : vector<2x4xf32>, vector<4x16xf32>, vector<2x16xf32> -> vector<2x16xf32>
    %154 = vector.extract_strided_slice %15 {offsets = [0, 216], sizes = [2, 16], strides = [1, 1]} : vector<2x600xf32> to vector<2x16xf32>
    %155 = arith.addf %153, %154 : vector<2x16xf32>
    %156 = vector.extract_strided_slice %155 {offsets = [0, 0], sizes = [2, 8], strides = [1, 1]} : vector<2x16xf32> to vector<2x8xf32>
    %157 = vector.extract_strided_slice %155 {offsets = [0, 8], sizes = [2, 8], strides = [1, 1]} : vector<2x16xf32> to vector<2x8xf32>
    %158 = arith.negf %156 : vector<2x8xf32>
    %159 = math.exp %158 : vector<2x8xf32>
    %cst_72 = arith.constant 1.000000e+00 : f32
    %160 = vector.broadcast %cst_72 : f32 to vector<2x8xf32>
    %161 = arith.addf %160, %159 : vector<2x8xf32>
    %162 = arith.divf %160, %161 : vector<2x8xf32>
    %163 = arith.mulf %156, %162 : vector<2x8xf32>
    %164 = arith.mulf %163, %157 : vector<2x8xf32>
    %c0_73 = arith.constant 0 : index
    %c0_74 = arith.constant 0 : index
    %165 = vector.load %arg26[%c0_73, %c0_74] : memref<8x8xf32, #tpu.memory_space<vmem>>, vector<8x8xf32>
    %cst_75 = arith.constant dense<0.000000e+00> : vector<2x8xf32>
    %166 = tpu.matmul %164, %165, %cst_75 {dimension_numbers = #tpu.dot_dimension_numbers<[1], [0], [0], [1], [0, 0, 1, 1], [], []>} : vector<2x8xf32>, vector<8x8xf32>, vector<2x8xf32> -> vector<2x8xf32>
    %c0_76 = arith.constant 0 : index
    %c0_77 = arith.constant 0 : index
    %167 = vector.load %arg27[%c0_76, %c0_77] : memref<1x8xf32, #tpu.memory_space<vmem>>, vector<1x8xf32>
    %168 = vector.broadcast %167 : vector<1x8xf32> to vector<2x8xf32>
    %169 = arith.addf %166, %168 : vector<2x8xf32>
    %170 = arith.addf %102, %169 : vector<2x8xf32>
    %c0_78 = arith.constant 0 : index
    %c0_79 = arith.constant 0 : index
    %171 = vector.load %arg28[%c0_78, %c0_79] : memref<4x8xf32, #tpu.memory_space<vmem>>, vector<4x8xf32>
    %cst_80 = arith.constant dense<0.000000e+00> : vector<2x8xf32>
    %172 = tpu.matmul %145, %171, %cst_80 {dimension_numbers = #tpu.dot_dimension_numbers<[1], [0], [0], [1], [0, 0, 1, 1], [], []>} : vector<2x4xf32>, vector<4x8xf32>, vector<2x8xf32> -> vector<2x8xf32>
    %173 = vector.extract_strided_slice %15 {offsets = [0, 232], sizes = [2, 8], strides = [1, 1]} : vector<2x600xf32> to vector<2x8xf32>
    %174 = arith.addf %172, %173 : vector<2x8xf32>
    %175 = vector.extract_strided_slice %174 {offsets = [0, 0], sizes = [2, 4], strides = [1, 1]} : vector<2x8xf32> to vector<2x4xf32>
    %176 = vector.extract_strided_slice %174 {offsets = [0, 4], sizes = [2, 4], strides = [1, 1]} : vector<2x8xf32> to vector<2x4xf32>
    %177 = arith.negf %175 : vector<2x4xf32>
    %178 = math.exp %177 : vector<2x4xf32>
    %cst_81 = arith.constant 1.000000e+00 : f32
    %179 = vector.broadcast %cst_81 : f32 to vector<2x4xf32>
    %180 = arith.addf %179, %178 : vector<2x4xf32>
    %181 = arith.divf %179, %180 : vector<2x4xf32>
    %182 = arith.mulf %175, %181 : vector<2x4xf32>
    %183 = arith.mulf %182, %176 : vector<2x4xf32>
    %c0_82 = arith.constant 0 : index
    %c0_83 = arith.constant 0 : index
    %184 = vector.load %arg29[%c0_82, %c0_83] : memref<4x4xf32, #tpu.memory_space<vmem>>, vector<4x4xf32>
    %cst_84 = arith.constant dense<0.000000e+00> : vector<2x4xf32>
    %185 = tpu.matmul %183, %184, %cst_84 {dimension_numbers = #tpu.dot_dimension_numbers<[1], [0], [0], [1], [0, 0, 1, 1], [], []>} : vector<2x4xf32>, vector<4x4xf32>, vector<2x4xf32> -> vector<2x4xf32>
    %c0_85 = arith.constant 0 : index
    %c0_86 = arith.constant 0 : index
    %186 = vector.load %arg30[%c0_85, %c0_86] : memref<1x4xf32, #tpu.memory_space<vmem>>, vector<1x4xf32>
    %187 = vector.broadcast %186 : vector<1x4xf32> to vector<2x4xf32>
    %188 = arith.addf %185, %187 : vector<2x4xf32>
    %189 = arith.negf %188 : vector<2x4xf32>
    %190 = math.exp %189 : vector<2x4xf32>
    %cst_87 = arith.constant 1.000000e+00 : f32
    %191 = vector.broadcast %cst_87 : f32 to vector<2x4xf32>
    %192 = arith.addf %191, %190 : vector<2x4xf32>
    %193 = arith.divf %191, %192 : vector<2x4xf32>
    %194 = arith.mulf %188, %193 : vector<2x4xf32>
    %195 = arith.addf %145, %194 : vector<2x4xf32>
    %c0_88 = arith.constant 0 : index
    %c0_89 = arith.constant 0 : index
    %196 = vector.load %arg31[%c0_88, %c0_89] : memref<4x8xf32, #tpu.memory_space<vmem>>, vector<4x8xf32>
    %cst_90 = arith.constant dense<0.000000e+00> : vector<2x8xf32>
    %197 = tpu.matmul %195, %196, %cst_90 {dimension_numbers = #tpu.dot_dimension_numbers<[1], [0], [0], [1], [0, 0, 1, 1], [], []>} : vector<2x4xf32>, vector<4x8xf32>, vector<2x8xf32> -> vector<2x8xf32>
    %198 = vector.extract_strided_slice %15 {offsets = [0, 240], sizes = [2, 8], strides = [1, 1]} : vector<2x600xf32> to vector<2x8xf32>
    %199 = arith.addf %197, %198 : vector<2x8xf32>
    %200 = vector.extract_strided_slice %199 {offsets = [0, 0], sizes = [2, 4], strides = [1, 1]} : vector<2x8xf32> to vector<2x4xf32>
    %201 = vector.extract_strided_slice %199 {offsets = [0, 4], sizes = [2, 4], strides = [1, 1]} : vector<2x8xf32> to vector<2x4xf32>
    %202 = arith.negf %200 : vector<2x4xf32>
    %203 = math.exp %202 : vector<2x4xf32>
    %cst_91 = arith.constant 1.000000e+00 : f32
    %204 = vector.broadcast %cst_91 : f32 to vector<2x4xf32>
    %205 = arith.addf %204, %203 : vector<2x4xf32>
    %206 = arith.divf %204, %205 : vector<2x4xf32>
    %207 = arith.mulf %200, %206 : vector<2x4xf32>
    %208 = arith.mulf %207, %201 : vector<2x4xf32>
    %c0_92 = arith.constant 0 : index
    %c0_93 = arith.constant 0 : index
    %209 = vector.load %arg32[%c0_92, %c0_93] : memref<4x4xf32, #tpu.memory_space<vmem>>, vector<4x4xf32>
    %cst_94 = arith.constant dense<0.000000e+00> : vector<2x4xf32>
    %210 = tpu.matmul %208, %209, %cst_94 {dimension_numbers = #tpu.dot_dimension_numbers<[1], [0], [0], [1], [0, 0, 1, 1], [], []>} : vector<2x4xf32>, vector<4x4xf32>, vector<2x4xf32> -> vector<2x4xf32>
    %c0_95 = arith.constant 0 : index
    %c0_96 = arith.constant 0 : index
    %211 = vector.load %arg33[%c0_95, %c0_96] : memref<1x4xf32, #tpu.memory_space<vmem>>, vector<1x4xf32>
    %212 = vector.broadcast %211 : vector<1x4xf32> to vector<2x4xf32>
    %213 = arith.addf %210, %212 : vector<2x4xf32>
    %214 = arith.addf %145, %213 : vector<2x4xf32>
    %c0_97 = arith.constant 0 : index
    %c0_98 = arith.constant 0 : index
    %215 = vector.load %arg34[%c0_97, %c0_98] : memref<4x16xf32, #tpu.memory_space<vmem>>, vector<4x16xf32>
    %cst_99 = arith.constant dense<0.000000e+00> : vector<2x16xf32>
    %216 = tpu.matmul %214, %215, %cst_99 {dimension_numbers = #tpu.dot_dimension_numbers<[1], [0], [0], [1], [0, 0, 1, 1], [], []>} : vector<2x4xf32>, vector<4x16xf32>, vector<2x16xf32> -> vector<2x16xf32>
    %217 = vector.extract_strided_slice %15 {offsets = [0, 248], sizes = [2, 16], strides = [1, 1]} : vector<2x600xf32> to vector<2x16xf32>
    %218 = arith.addf %216, %217 : vector<2x16xf32>
    %219 = vector.extract_strided_slice %218 {offsets = [0, 0], sizes = [2, 8], strides = [1, 1]} : vector<2x16xf32> to vector<2x8xf32>
    %220 = vector.extract_strided_slice %218 {offsets = [0, 8], sizes = [2, 8], strides = [1, 1]} : vector<2x16xf32> to vector<2x8xf32>
    %221 = arith.negf %219 : vector<2x8xf32>
    %222 = math.exp %221 : vector<2x8xf32>
    %cst_100 = arith.constant 1.000000e+00 : f32
    %223 = vector.broadcast %cst_100 : f32 to vector<2x8xf32>
    %224 = arith.addf %223, %222 : vector<2x8xf32>
    %225 = arith.divf %223, %224 : vector<2x8xf32>
    %226 = arith.mulf %219, %225 : vector<2x8xf32>
    %227 = arith.mulf %226, %220 : vector<2x8xf32>
    %c0_101 = arith.constant 0 : index
    %c0_102 = arith.constant 0 : index
    %228 = vector.load %arg35[%c0_101, %c0_102] : memref<8x8xf32, #tpu.memory_space<vmem>>, vector<8x8xf32>
    %cst_103 = arith.constant dense<0.000000e+00> : vector<2x8xf32>
    %229 = tpu.matmul %227, %228, %cst_103 {dimension_numbers = #tpu.dot_dimension_numbers<[1], [0], [0], [1], [0, 0, 1, 1], [], []>} : vector<2x8xf32>, vector<8x8xf32>, vector<2x8xf32> -> vector<2x8xf32>
    %c0_104 = arith.constant 0 : index
    %c0_105 = arith.constant 0 : index
    %230 = vector.load %arg36[%c0_104, %c0_105] : memref<1x8xf32, #tpu.memory_space<vmem>>, vector<1x8xf32>
    %231 = vector.broadcast %230 : vector<1x8xf32> to vector<2x8xf32>
    %232 = arith.addf %229, %231 : vector<2x8xf32>
    %233 = arith.negf %232 : vector<2x8xf32>
    %234 = math.exp %233 : vector<2x8xf32>
    %cst_106 = arith.constant 1.000000e+00 : f32
    %235 = vector.broadcast %cst_106 : f32 to vector<2x8xf32>
    %236 = arith.addf %235, %234 : vector<2x8xf32>
    %237 = arith.divf %235, %236 : vector<2x8xf32>
    %238 = arith.mulf %232, %237 : vector<2x8xf32>
    %c0_107 = arith.constant 0 : index
    %c0_108 = arith.constant 0 : index
    %239 = vector.load %arg37[%c0_107, %c0_108] : memref<8x16xf32, #tpu.memory_space<vmem>>, vector<8x16xf32>
    %cst_109 = arith.constant dense<0.000000e+00> : vector<2x16xf32>
    %240 = tpu.matmul %238, %239, %cst_109 {dimension_numbers = #tpu.dot_dimension_numbers<[1], [0], [0], [1], [0, 0, 1, 1], [], []>} : vector<2x8xf32>, vector<8x16xf32>, vector<2x16xf32> -> vector<2x16xf32>
    %241 = vector.extract_strided_slice %15 {offsets = [0, 264], sizes = [2, 16], strides = [1, 1]} : vector<2x600xf32> to vector<2x16xf32>
    %242 = arith.addf %240, %241 : vector<2x16xf32>
    %243 = vector.extract_strided_slice %242 {offsets = [0, 0], sizes = [2, 8], strides = [1, 1]} : vector<2x16xf32> to vector<2x8xf32>
    %244 = vector.extract_strided_slice %242 {offsets = [0, 8], sizes = [2, 8], strides = [1, 1]} : vector<2x16xf32> to vector<2x8xf32>
    %245 = arith.negf %243 : vector<2x8xf32>
    %246 = math.exp %245 : vector<2x8xf32>
    %cst_110 = arith.constant 1.000000e+00 : f32
    %247 = vector.broadcast %cst_110 : f32 to vector<2x8xf32>
    %248 = arith.addf %247, %246 : vector<2x8xf32>
    %249 = arith.divf %247, %248 : vector<2x8xf32>
    %250 = arith.mulf %243, %249 : vector<2x8xf32>
    %251 = arith.mulf %250, %244 : vector<2x8xf32>
    %c0_111 = arith.constant 0 : index
    %c0_112 = arith.constant 0 : index
    %252 = vector.load %arg38[%c0_111, %c0_112] : memref<8x8xf32, #tpu.memory_space<vmem>>, vector<8x8xf32>
    %cst_113 = arith.constant dense<0.000000e+00> : vector<2x8xf32>
    %253 = tpu.matmul %251, %252, %cst_113 {dimension_numbers = #tpu.dot_dimension_numbers<[1], [0], [0], [1], [0, 0, 1, 1], [], []>} : vector<2x8xf32>, vector<8x8xf32>, vector<2x8xf32> -> vector<2x8xf32>
    %c0_114 = arith.constant 0 : index
    %c0_115 = arith.constant 0 : index
    %254 = vector.load %arg39[%c0_114, %c0_115] : memref<1x8xf32, #tpu.memory_space<vmem>>, vector<1x8xf32>
    %255 = vector.broadcast %254 : vector<1x8xf32> to vector<2x8xf32>
    %256 = arith.addf %253, %255 : vector<2x8xf32>
    %257 = arith.addf %232, %256 : vector<2x8xf32>
    %258 = arith.addf %257, %170 : vector<2x8xf32>
    %c0_116 = arith.constant 0 : index
    %c0_117 = arith.constant 0 : index
    %259 = vector.load %arg40[%c0_116, %c0_117] : memref<8x32xf32, #tpu.memory_space<vmem>>, vector<8x32xf32>
    %cst_118 = arith.constant dense<0.000000e+00> : vector<2x32xf32>
    %260 = tpu.matmul %258, %259, %cst_118 {dimension_numbers = #tpu.dot_dimension_numbers<[1], [0], [0], [1], [0, 0, 1, 1], [], []>} : vector<2x8xf32>, vector<8x32xf32>, vector<2x32xf32> -> vector<2x32xf32>
    %261 = vector.extract_strided_slice %15 {offsets = [0, 280], sizes = [2, 32], strides = [1, 1]} : vector<2x600xf32> to vector<2x32xf32>
    %262 = arith.addf %260, %261 : vector<2x32xf32>
    %263 = vector.extract_strided_slice %262 {offsets = [0, 0], sizes = [2, 16], strides = [1, 1]} : vector<2x32xf32> to vector<2x16xf32>
    %264 = vector.extract_strided_slice %262 {offsets = [0, 16], sizes = [2, 16], strides = [1, 1]} : vector<2x32xf32> to vector<2x16xf32>
    %265 = arith.negf %263 : vector<2x16xf32>
    %266 = math.exp %265 : vector<2x16xf32>
    %cst_119 = arith.constant 1.000000e+00 : f32
    %267 = vector.broadcast %cst_119 : f32 to vector<2x16xf32>
    %268 = arith.addf %267, %266 : vector<2x16xf32>
    %269 = arith.divf %267, %268 : vector<2x16xf32>
    %270 = arith.mulf %263, %269 : vector<2x16xf32>
    %271 = arith.mulf %270, %264 : vector<2x16xf32>
    %c0_120 = arith.constant 0 : index
    %c0_121 = arith.constant 0 : index
    %272 = vector.load %arg41[%c0_120, %c0_121] : memref<16x16xf32, #tpu.memory_space<vmem>>, vector<16x16xf32>
    %cst_122 = arith.constant dense<0.000000e+00> : vector<2x16xf32>
    %273 = tpu.matmul %271, %272, %cst_122 {dimension_numbers = #tpu.dot_dimension_numbers<[1], [0], [0], [1], [0, 0, 1, 1], [], []>} : vector<2x16xf32>, vector<16x16xf32>, vector<2x16xf32> -> vector<2x16xf32>
    %c0_123 = arith.constant 0 : index
    %c0_124 = arith.constant 0 : index
    %274 = vector.load %arg42[%c0_123, %c0_124] : memref<1x16xf32, #tpu.memory_space<vmem>>, vector<1x16xf32>
    %275 = vector.broadcast %274 : vector<1x16xf32> to vector<2x16xf32>
    %276 = arith.addf %273, %275 : vector<2x16xf32>
    %277 = arith.negf %276 : vector<2x16xf32>
    %278 = math.exp %277 : vector<2x16xf32>
    %cst_125 = arith.constant 1.000000e+00 : f32
    %279 = vector.broadcast %cst_125 : f32 to vector<2x16xf32>
    %280 = arith.addf %279, %278 : vector<2x16xf32>
    %281 = arith.divf %279, %280 : vector<2x16xf32>
    %282 = arith.mulf %276, %281 : vector<2x16xf32>
    %c0_126 = arith.constant 0 : index
    %c0_127 = arith.constant 0 : index
    %283 = vector.load %arg43[%c0_126, %c0_127] : memref<16x32xf32, #tpu.memory_space<vmem>>, vector<16x32xf32>
    %cst_128 = arith.constant dense<0.000000e+00> : vector<2x32xf32>
    %284 = tpu.matmul %282, %283, %cst_128 {dimension_numbers = #tpu.dot_dimension_numbers<[1], [0], [0], [1], [0, 0, 1, 1], [], []>} : vector<2x16xf32>, vector<16x32xf32>, vector<2x32xf32> -> vector<2x32xf32>
    %285 = vector.extract_strided_slice %15 {offsets = [0, 312], sizes = [2, 32], strides = [1, 1]} : vector<2x600xf32> to vector<2x32xf32>
    %286 = arith.addf %284, %285 : vector<2x32xf32>
    %287 = vector.extract_strided_slice %286 {offsets = [0, 0], sizes = [2, 16], strides = [1, 1]} : vector<2x32xf32> to vector<2x16xf32>
    %288 = vector.extract_strided_slice %286 {offsets = [0, 16], sizes = [2, 16], strides = [1, 1]} : vector<2x32xf32> to vector<2x16xf32>
    %289 = arith.negf %287 : vector<2x16xf32>
    %290 = math.exp %289 : vector<2x16xf32>
    %cst_129 = arith.constant 1.000000e+00 : f32
    %291 = vector.broadcast %cst_129 : f32 to vector<2x16xf32>
    %292 = arith.addf %291, %290 : vector<2x16xf32>
    %293 = arith.divf %291, %292 : vector<2x16xf32>
    %294 = arith.mulf %287, %293 : vector<2x16xf32>
    %295 = arith.mulf %294, %288 : vector<2x16xf32>
    %c0_130 = arith.constant 0 : index
    %c0_131 = arith.constant 0 : index
    %296 = vector.load %arg44[%c0_130, %c0_131] : memref<16x16xf32, #tpu.memory_space<vmem>>, vector<16x16xf32>
    %cst_132 = arith.constant dense<0.000000e+00> : vector<2x16xf32>
    %297 = tpu.matmul %295, %296, %cst_132 {dimension_numbers = #tpu.dot_dimension_numbers<[1], [0], [0], [1], [0, 0, 1, 1], [], []>} : vector<2x16xf32>, vector<16x16xf32>, vector<2x16xf32> -> vector<2x16xf32>
    %c0_133 = arith.constant 0 : index
    %c0_134 = arith.constant 0 : index
    %298 = vector.load %arg45[%c0_133, %c0_134] : memref<1x16xf32, #tpu.memory_space<vmem>>, vector<1x16xf32>
    %299 = vector.broadcast %298 : vector<1x16xf32> to vector<2x16xf32>
    %300 = arith.addf %297, %299 : vector<2x16xf32>
    %301 = arith.addf %276, %300 : vector<2x16xf32>
    %302 = arith.addf %127, %301 : vector<2x16xf32>
    %c0_135 = arith.constant 0 : index
    %c0_136 = arith.constant 0 : index
    %303 = vector.load %arg46[%c0_135, %c0_136] : memref<16x64xf32, #tpu.memory_space<vmem>>, vector<16x64xf32>
    %cst_137 = arith.constant dense<0.000000e+00> : vector<2x64xf32>
    %304 = tpu.matmul %302, %303, %cst_137 {dimension_numbers = #tpu.dot_dimension_numbers<[1], [0], [0], [1], [0, 0, 1, 1], [], []>} : vector<2x16xf32>, vector<16x64xf32>, vector<2x64xf32> -> vector<2x64xf32>
    %305 = vector.extract_strided_slice %15 {offsets = [0, 344], sizes = [2, 64], strides = [1, 1]} : vector<2x600xf32> to vector<2x64xf32>
    %306 = arith.addf %304, %305 : vector<2x64xf32>
    %307 = vector.extract_strided_slice %306 {offsets = [0, 0], sizes = [2, 32], strides = [1, 1]} : vector<2x64xf32> to vector<2x32xf32>
    %308 = vector.extract_strided_slice %306 {offsets = [0, 32], sizes = [2, 32], strides = [1, 1]} : vector<2x64xf32> to vector<2x32xf32>
    %309 = arith.negf %307 : vector<2x32xf32>
    %310 = math.exp %309 : vector<2x32xf32>
    %cst_138 = arith.constant 1.000000e+00 : f32
    %311 = vector.broadcast %cst_138 : f32 to vector<2x32xf32>
    %312 = arith.addf %311, %310 : vector<2x32xf32>
    %313 = arith.divf %311, %312 : vector<2x32xf32>
    %314 = arith.mulf %307, %313 : vector<2x32xf32>
    %315 = arith.mulf %314, %308 : vector<2x32xf32>
    %c0_139 = arith.constant 0 : index
    %c0_140 = arith.constant 0 : index
    %316 = vector.load %arg47[%c0_139, %c0_140] : memref<32x32xf32, #tpu.memory_space<vmem>>, vector<32x32xf32>
    %cst_141 = arith.constant dense<0.000000e+00> : vector<2x32xf32>
    %317 = tpu.matmul %315, %316, %cst_141 {dimension_numbers = #tpu.dot_dimension_numbers<[1], [0], [0], [1], [0, 0, 1, 1], [], []>} : vector<2x32xf32>, vector<32x32xf32>, vector<2x32xf32> -> vector<2x32xf32>
    %c0_142 = arith.constant 0 : index
    %c0_143 = arith.constant 0 : index
    %318 = vector.load %arg48[%c0_142, %c0_143] : memref<1x32xf32, #tpu.memory_space<vmem>>, vector<1x32xf32>
    %319 = vector.broadcast %318 : vector<1x32xf32> to vector<2x32xf32>
    %320 = arith.addf %317, %319 : vector<2x32xf32>
    %321 = arith.negf %320 : vector<2x32xf32>
    %322 = math.exp %321 : vector<2x32xf32>
    %cst_144 = arith.constant 1.000000e+00 : f32
    %323 = vector.broadcast %cst_144 : f32 to vector<2x32xf32>
    %324 = arith.addf %323, %322 : vector<2x32xf32>
    %325 = arith.divf %323, %324 : vector<2x32xf32>
    %326 = arith.mulf %320, %325 : vector<2x32xf32>
    %c0_145 = arith.constant 0 : index
    %c0_146 = arith.constant 0 : index
    %327 = vector.load %arg49[%c0_145, %c0_146] : memref<32x64xf32, #tpu.memory_space<vmem>>, vector<32x64xf32>
    %cst_147 = arith.constant dense<0.000000e+00> : vector<2x64xf32>
    %328 = tpu.matmul %326, %327, %cst_147 {dimension_numbers = #tpu.dot_dimension_numbers<[1], [0], [0], [1], [0, 0, 1, 1], [], []>} : vector<2x32xf32>, vector<32x64xf32>, vector<2x64xf32> -> vector<2x64xf32>
    %329 = vector.extract_strided_slice %15 {offsets = [0, 408], sizes = [2, 64], strides = [1, 1]} : vector<2x600xf32> to vector<2x64xf32>
    %330 = arith.addf %328, %329 : vector<2x64xf32>
    %331 = vector.extract_strided_slice %330 {offsets = [0, 0], sizes = [2, 32], strides = [1, 1]} : vector<2x64xf32> to vector<2x32xf32>
    %332 = vector.extract_strided_slice %330 {offsets = [0, 32], sizes = [2, 32], strides = [1, 1]} : vector<2x64xf32> to vector<2x32xf32>
    %333 = arith.negf %331 : vector<2x32xf32>
    %334 = math.exp %333 : vector<2x32xf32>
    %cst_148 = arith.constant 1.000000e+00 : f32
    %335 = vector.broadcast %cst_148 : f32 to vector<2x32xf32>
    %336 = arith.addf %335, %334 : vector<2x32xf32>
    %337 = arith.divf %335, %336 : vector<2x32xf32>
    %338 = arith.mulf %331, %337 : vector<2x32xf32>
    %339 = arith.mulf %338, %332 : vector<2x32xf32>
    %c0_149 = arith.constant 0 : index
    %c0_150 = arith.constant 0 : index
    %340 = vector.load %arg50[%c0_149, %c0_150] : memref<32x32xf32, #tpu.memory_space<vmem>>, vector<32x32xf32>
    %cst_151 = arith.constant dense<0.000000e+00> : vector<2x32xf32>
    %341 = tpu.matmul %339, %340, %cst_151 {dimension_numbers = #tpu.dot_dimension_numbers<[1], [0], [0], [1], [0, 0, 1, 1], [], []>} : vector<2x32xf32>, vector<32x32xf32>, vector<2x32xf32> -> vector<2x32xf32>
    %c0_152 = arith.constant 0 : index
    %c0_153 = arith.constant 0 : index
    %342 = vector.load %arg51[%c0_152, %c0_153] : memref<1x32xf32, #tpu.memory_space<vmem>>, vector<1x32xf32>
    %343 = vector.broadcast %342 : vector<1x32xf32> to vector<2x32xf32>
    %344 = arith.addf %341, %343 : vector<2x32xf32>
    %345 = arith.addf %320, %344 : vector<2x32xf32>
    %346 = arith.addf %84, %345 : vector<2x32xf32>
    %347 = arith.addf %346, %41 : vector<2x32xf32>
    %c0_154 = arith.constant 0 : index
    %c0_155 = arith.constant 0 : index
    %348 = vector.load %arg52[%c0_154, %c0_155] : memref<32x64xf32, #tpu.memory_space<vmem>>, vector<32x64xf32>
    %cst_156 = arith.constant dense<0.000000e+00> : vector<2x64xf32>
    %349 = tpu.matmul %347, %348, %cst_156 {dimension_numbers = #tpu.dot_dimension_numbers<[1], [0], [0], [1], [0, 0, 1, 1], [], []>} : vector<2x32xf32>, vector<32x64xf32>, vector<2x64xf32> -> vector<2x64xf32>
    %350 = vector.extract_strided_slice %15 {offsets = [0, 472], sizes = [2, 64], strides = [1, 1]} : vector<2x600xf32> to vector<2x64xf32>
    %351 = arith.addf %349, %350 : vector<2x64xf32>
    %352 = vector.extract_strided_slice %351 {offsets = [0, 0], sizes = [2, 32], strides = [1, 1]} : vector<2x64xf32> to vector<2x32xf32>
    %353 = vector.extract_strided_slice %351 {offsets = [0, 32], sizes = [2, 32], strides = [1, 1]} : vector<2x64xf32> to vector<2x32xf32>
    %354 = arith.negf %352 : vector<2x32xf32>
    %355 = math.exp %354 : vector<2x32xf32>
    %cst_157 = arith.constant 1.000000e+00 : f32
    %356 = vector.broadcast %cst_157 : f32 to vector<2x32xf32>
    %357 = arith.addf %356, %355 : vector<2x32xf32>
    %358 = arith.divf %356, %357 : vector<2x32xf32>
    %359 = arith.mulf %352, %358 : vector<2x32xf32>
    %360 = arith.mulf %359, %353 : vector<2x32xf32>
    %c0_158 = arith.constant 0 : index
    %c0_159 = arith.constant 0 : index
    %361 = vector.load %arg53[%c0_158, %c0_159] : memref<32x32xf32, #tpu.memory_space<vmem>>, vector<32x32xf32>
    %cst_160 = arith.constant dense<0.000000e+00> : vector<2x32xf32>
    %362 = tpu.matmul %360, %361, %cst_160 {dimension_numbers = #tpu.dot_dimension_numbers<[1], [0], [0], [1], [0, 0, 1, 1], [], []>} : vector<2x32xf32>, vector<32x32xf32>, vector<2x32xf32> -> vector<2x32xf32>
    %c0_161 = arith.constant 0 : index
    %c0_162 = arith.constant 0 : index
    %363 = vector.load %arg54[%c0_161, %c0_162] : memref<1x32xf32, #tpu.memory_space<vmem>>, vector<1x32xf32>
    %364 = vector.broadcast %363 : vector<1x32xf32> to vector<2x32xf32>
    %365 = arith.addf %362, %364 : vector<2x32xf32>
    %366 = arith.negf %365 : vector<2x32xf32>
    %367 = math.exp %366 : vector<2x32xf32>
    %cst_163 = arith.constant 1.000000e+00 : f32
    %368 = vector.broadcast %cst_163 : f32 to vector<2x32xf32>
    %369 = arith.addf %368, %367 : vector<2x32xf32>
    %370 = arith.divf %368, %369 : vector<2x32xf32>
    %371 = arith.mulf %365, %370 : vector<2x32xf32>
    %372 = arith.addf %347, %371 : vector<2x32xf32>
    %c0_164 = arith.constant 0 : index
    %c0_165 = arith.constant 0 : index
    %373 = vector.load %arg55[%c0_164, %c0_165] : memref<32x64xf32, #tpu.memory_space<vmem>>, vector<32x64xf32>
    %cst_166 = arith.constant dense<0.000000e+00> : vector<2x64xf32>
    %374 = tpu.matmul %372, %373, %cst_166 {dimension_numbers = #tpu.dot_dimension_numbers<[1], [0], [0], [1], [0, 0, 1, 1], [], []>} : vector<2x32xf32>, vector<32x64xf32>, vector<2x64xf32> -> vector<2x64xf32>
    %375 = vector.extract_strided_slice %15 {offsets = [0, 536], sizes = [2, 64], strides = [1, 1]} : vector<2x600xf32> to vector<2x64xf32>
    %376 = arith.addf %374, %375 : vector<2x64xf32>
    %377 = vector.extract_strided_slice %376 {offsets = [0, 0], sizes = [2, 32], strides = [1, 1]} : vector<2x64xf32> to vector<2x32xf32>
    %378 = vector.extract_strided_slice %376 {offsets = [0, 32], sizes = [2, 32], strides = [1, 1]} : vector<2x64xf32> to vector<2x32xf32>
    %379 = arith.negf %377 : vector<2x32xf32>
    %380 = math.exp %379 : vector<2x32xf32>
    %cst_167 = arith.constant 1.000000e+00 : f32
    %381 = vector.broadcast %cst_167 : f32 to vector<2x32xf32>
    %382 = arith.addf %381, %380 : vector<2x32xf32>
    %383 = arith.divf %381, %382 : vector<2x32xf32>
    %384 = arith.mulf %377, %383 : vector<2x32xf32>
    %385 = arith.mulf %384, %378 : vector<2x32xf32>
    %c0_168 = arith.constant 0 : index
    %c0_169 = arith.constant 0 : index
    %386 = vector.load %arg56[%c0_168, %c0_169] : memref<32x32xf32, #tpu.memory_space<vmem>>, vector<32x32xf32>
    %cst_170 = arith.constant dense<0.000000e+00> : vector<2x32xf32>
    %387 = tpu.matmul %385, %386, %cst_170 {dimension_numbers = #tpu.dot_dimension_numbers<[1], [0], [0], [1], [0, 0, 1, 1], [], []>} : vector<2x32xf32>, vector<32x32xf32>, vector<2x32xf32> -> vector<2x32xf32>
    %c0_171 = arith.constant 0 : index
    %c0_172 = arith.constant 0 : index
    %388 = vector.load %arg57[%c0_171, %c0_172] : memref<1x32xf32, #tpu.memory_space<vmem>>, vector<1x32xf32>
    %389 = vector.broadcast %388 : vector<1x32xf32> to vector<2x32xf32>
    %390 = arith.addf %387, %389 : vector<2x32xf32>
    %391 = arith.addf %347, %390 : vector<2x32xf32>
    %c0_173 = arith.constant 0 : index
    %c0_174 = arith.constant 0 : index
    %392 = vector.load %arg58[%c0_173, %c0_174] : memref<2x32xf32, #tpu.memory_space<vmem>>, vector<2x32xf32>
    tpu.vector_store %arg58[%c0_173, %c0_174], %391 {strides = array<i32>} : memref<2x32xf32, #tpu.memory_space<vmem>>, vector<2x32xf32>,
    return
  }
  func.func @transform_0(%arg0: i32) -> (i32, i32) {
    %c0_i32 = arith.constant 0 : i32
    %c0_i32_0 = arith.constant 0 : i32
    return %arg0, %c0_i32 : i32, i32
  }
  func.func @transform_1(%arg0: i32) -> (i32, i32) {
    %c0_i32 = arith.constant 0 : i32
    %c0_i32_0 = arith.constant 0 : i32
    return %arg0, %c0_i32 : i32, i32
  }
  func.func @transform_2(%arg0: i32) -> (i32, i32) {
    %c0_i32 = arith.constant 0 : i32
    %c0_i32_0 = arith.constant 0 : i32
    return %arg0, %c0_i32 : i32, i32
  }
  func.func @transform_3(%arg0: i32) -> (i32, i32) {
    %c0_i32 = arith.constant 0 : i32
    %c0_i32_0 = arith.constant 0 : i32
    %c0_i32_1 = arith.constant 0 : i32
    return %c0_i32, %c0_i32_0 : i32, i32
  }
  func.func @transform_4(%arg0: i32) -> (i32, i32) {
    %c0_i32 = arith.constant 0 : i32
    %c0_i32_0 = arith.constant 0 : i32
    %c0_i32_1 = arith.constant 0 : i32
    return %c0_i32, %c0_i32_0 : i32, i32
  }
  func.func @transform_5(%arg0: i32) -> (i32, i32) {
    %c0_i32 = arith.constant 0 : i32
    %c0_i32_0 = arith.constant 0 : i32
    %c0_i32_1 = arith.constant 0 : i32
    return %c0_i32, %c0_i32_0 : i32, i32
  }
  func.func @transform_6(%arg0: i32) -> (i32, i32) {
    %c0_i32 = arith.constant 0 : i32
    %c0_i32_0 = arith.constant 0 : i32
    %c0_i32_1 = arith.constant 0 : i32
    return %c0_i32, %c0_i32_0 : i32, i32
  }
  func.func @transform_7(%arg0: i32) -> (i32, i32) {
    %c0_i32 = arith.constant 0 : i32
    %c0_i32_0 = arith.constant 0 : i32
    %c0_i32_1 = arith.constant 0 : i32
    return %c0_i32, %c0_i32_0 : i32, i32
  }
  func.func @transform_8(%arg0: i32) -> (i32, i32) {
    %c0_i32 = arith.constant 0 : i32
    %c0_i32_0 = arith.constant 0 : i32
    %c0_i32_1 = arith.constant 0 : i32
    return %c0_i32, %c0_i32_0 : i32, i32
  }
  func.func @transform_9(%arg0: i32) -> (i32, i32) {
    %c0_i32 = arith.constant 0 : i32
    %c0_i32_0 = arith.constant 0 : i32
    %c0_i32_1 = arith.constant 0 : i32
    return %c0_i32, %c0_i32_0 : i32, i32
  }
  func.func @transform_10(%arg0: i32) -> (i32, i32) {
    %c0_i32 = arith.constant 0 : i32
    %c0_i32_0 = arith.constant 0 : i32
    %c0_i32_1 = arith.constant 0 : i32
    return %c0_i32, %c0_i32_0 : i32, i32
  }
  func.func @transform_11(%arg0: i32) -> (i32, i32) {
    %c0_i32 = arith.constant 0 : i32
    %c0_i32_0 = arith.constant 0 : i32
    %c0_i32_1 = arith.constant 0 : i32
    return %c0_i32, %c0_i32_0 : i32, i32
  }
  func.func @transform_12(%arg0: i32) -> (i32, i32) {
    %c0_i32 = arith.constant 0 : i32
    %c0_i32_0 = arith.constant 0 : i32
    %c0_i32_1 = arith.constant 0 : i32
    return %c0_i32, %c0_i32_0 : i32, i32
  }
  func.func @transform_13(%arg0: i32) -> (i32, i32) {
    %c0_i32 = arith.constant 0 : i32
    %c0_i32_0 = arith.constant 0 : i32
    %c0_i32_1 = arith.constant 0 : i32
    return %c0_i32, %c0_i32_0 : i32, i32
  }
  func.func @transform_14(%arg0: i32) -> (i32, i32) {
    %c0_i32 = arith.constant 0 : i32
    %c0_i32_0 = arith.constant 0 : i32
    %c0_i32_1 = arith.constant 0 : i32
    return %c0_i32, %c0_i32_0 : i32, i32
  }
  func.func @transform_15(%arg0: i32) -> (i32, i32) {
    %c0_i32 = arith.constant 0 : i32
    %c0_i32_0 = arith.constant 0 : i32
    %c0_i32_1 = arith.constant 0 : i32
    return %c0_i32, %c0_i32_0 : i32, i32
  }
  func.func @transform_16(%arg0: i32) -> (i32, i32) {
    %c0_i32 = arith.constant 0 : i32
    %c0_i32_0 = arith.constant 0 : i32
    %c0_i32_1 = arith.constant 0 : i32
    return %c0_i32, %c0_i32_0 : i32, i32
  }
  func.func @transform_17(%arg0: i32) -> (i32, i32) {
    %c0_i32 = arith.constant 0 : i32
    %c0_i32_0 = arith.constant 0 : i32
    %c0_i32_1 = arith.constant 0 : i32
    return %c0_i32, %c0_i32_0 : i32, i32
  }
  func.func @transform_18(%arg0: i32) -> (i32, i32) {
    %c0_i32 = arith.constant 0 : i32
    %c0_i32_0 = arith.constant 0 : i32
    %c0_i32_1 = arith.constant 0 : i32
    return %c0_i32, %c0_i32_0 : i32, i32
  }
  func.func @transform_19(%arg0: i32) -> (i32, i32) {
    %c0_i32 = arith.constant 0 : i32
    %c0_i32_0 = arith.constant 0 : i32
    %c0_i32_1 = arith.constant 0 : i32
    return %c0_i32, %c0_i32_0 : i32, i32
  }
  func.func @transform_20(%arg0: i32) -> (i32, i32) {
    %c0_i32 = arith.constant 0 : i32
    %c0_i32_0 = arith.constant 0 : i32
    %c0_i32_1 = arith.constant 0 : i32
    return %c0_i32, %c0_i32_0 : i32, i32
  }
  func.func @transform_21(%arg0: i32) -> (i32, i32) {
    %c0_i32 = arith.constant 0 : i32
    %c0_i32_0 = arith.constant 0 : i32
    %c0_i32_1 = arith.constant 0 : i32
    return %c0_i32, %c0_i32_0 : i32, i32
  }
  func.func @transform_22(%arg0: i32) -> (i32, i32) {
    %c0_i32 = arith.constant 0 : i32
    %c0_i32_0 = arith.constant 0 : i32
    %c0_i32_1 = arith.constant 0 : i32
    return %c0_i32, %c0_i32_0 : i32, i32
  }
  func.func @transform_23(%arg0: i32) -> (i32, i32) {
    %c0_i32 = arith.constant 0 : i32
    %c0_i32_0 = arith.constant 0 : i32
    %c0_i32_1 = arith.constant 0 : i32
    return %c0_i32, %c0_i32_0 : i32, i32
  }
  func.func @transform_24(%arg0: i32) -> (i32, i32) {
    %c0_i32 = arith.constant 0 : i32
    %c0_i32_0 = arith.constant 0 : i32
    %c0_i32_1 = arith.constant 0 : i32
    return %c0_i32, %c0_i32_0 : i32, i32
  }
  func.func @transform_25(%arg0: i32) -> (i32, i32) {
    %c0_i32 = arith.constant 0 : i32
    %c0_i32_0 = arith.constant 0 : i32
    %c0_i32_1 = arith.constant 0 : i32
    return %c0_i32, %c0_i32_0 : i32, i32
  }
  func.func @transform_26(%arg0: i32) -> (i32, i32) {
    %c0_i32 = arith.constant 0 : i32
    %c0_i32_0 = arith.constant 0 : i32
    %c0_i32_1 = arith.constant 0 : i32
    return %c0_i32, %c0_i32_0 : i32, i32
  }
  func.func @transform_27(%arg0: i32) -> (i32, i32) {
    %c0_i32 = arith.constant 0 : i32
    %c0_i32_0 = arith.constant 0 : i32
    %c0_i32_1 = arith.constant 0 : i32
    return %c0_i32, %c0_i32_0 : i32, i32
  }
  func.func @transform_28(%arg0: i32) -> (i32, i32) {
    %c0_i32 = arith.constant 0 : i32
    %c0_i32_0 = arith.constant 0 : i32
    %c0_i32_1 = arith.constant 0 : i32
    return %c0_i32, %c0_i32_0 : i32, i32
  }
  func.func @transform_29(%arg0: i32) -> (i32, i32) {
    %c0_i32 = arith.constant 0 : i32
    %c0_i32_0 = arith.constant 0 : i32
    %c0_i32_1 = arith.constant 0 : i32
    return %c0_i32, %c0_i32_0 : i32, i32
  }
  func.func @transform_30(%arg0: i32) -> (i32, i32) {
    %c0_i32 = arith.constant 0 : i32
    %c0_i32_0 = arith.constant 0 : i32
    %c0_i32_1 = arith.constant 0 : i32
    return %c0_i32, %c0_i32_0 : i32, i32
  }
  func.func @transform_31(%arg0: i32) -> (i32, i32) {
    %c0_i32 = arith.constant 0 : i32
    %c0_i32_0 = arith.constant 0 : i32
    %c0_i32_1 = arith.constant 0 : i32
    return %c0_i32, %c0_i32_0 : i32, i32
  }
  func.func @transform_32(%arg0: i32) -> (i32, i32) {
    %c0_i32 = arith.constant 0 : i32
    %c0_i32_0 = arith.constant 0 : i32
    %c0_i32_1 = arith.constant 0 : i32
    return %c0_i32, %c0_i32_0 : i32, i32
  }
  func.func @transform_33(%arg0: i32) -> (i32, i32) {
    %c0_i32 = arith.constant 0 : i32
    %c0_i32_0 = arith.constant 0 : i32
    %c0_i32_1 = arith.constant 0 : i32
    return %c0_i32, %c0_i32_0 : i32, i32
  }
  func.func @transform_34(%arg0: i32) -> (i32, i32) {
    %c0_i32 = arith.constant 0 : i32
    %c0_i32_0 = arith.constant 0 : i32
    %c0_i32_1 = arith.constant 0 : i32
    return %c0_i32, %c0_i32_0 : i32, i32
  }
  func.func @transform_35(%arg0: i32) -> (i32, i32) {
    %c0_i32 = arith.constant 0 : i32
    %c0_i32_0 = arith.constant 0 : i32
    %c0_i32_1 = arith.constant 0 : i32
    return %c0_i32, %c0_i32_0 : i32, i32
  }
  func.func @transform_36(%arg0: i32) -> (i32, i32) {
    %c0_i32 = arith.constant 0 : i32
    %c0_i32_0 = arith.constant 0 : i32
    %c0_i32_1 = arith.constant 0 : i32
    return %c0_i32, %c0_i32_0 : i32, i32
  }
  func.func @transform_37(%arg0: i32) -> (i32, i32) {
    %c0_i32 = arith.constant 0 : i32
    %c0_i32_0 = arith.constant 0 : i32
    %c0_i32_1 = arith.constant 0 : i32
    return %c0_i32, %c0_i32_0 : i32, i32
  }
  func.func @transform_38(%arg0: i32) -> (i32, i32) {
    %c0_i32 = arith.constant 0 : i32
    %c0_i32_0 = arith.constant 0 : i32
    %c0_i32_1 = arith.constant 0 : i32
    return %c0_i32, %c0_i32_0 : i32, i32
  }
  func.func @transform_39(%arg0: i32) -> (i32, i32) {
    %c0_i32 = arith.constant 0 : i32
    %c0_i32_0 = arith.constant 0 : i32
    %c0_i32_1 = arith.constant 0 : i32
    return %c0_i32, %c0_i32_0 : i32, i32
  }
  func.func @transform_40(%arg0: i32) -> (i32, i32) {
    %c0_i32 = arith.constant 0 : i32
    %c0_i32_0 = arith.constant 0 : i32
    %c0_i32_1 = arith.constant 0 : i32
    return %c0_i32, %c0_i32_0 : i32, i32
  }
  func.func @transform_41(%arg0: i32) -> (i32, i32) {
    %c0_i32 = arith.constant 0 : i32
    %c0_i32_0 = arith.constant 0 : i32
    %c0_i32_1 = arith.constant 0 : i32
    return %c0_i32, %c0_i32_0 : i32, i32
  }
  func.func @transform_42(%arg0: i32) -> (i32, i32) {
    %c0_i32 = arith.constant 0 : i32
    %c0_i32_0 = arith.constant 0 : i32
    %c0_i32_1 = arith.constant 0 : i32
    return %c0_i32, %c0_i32_0 : i32, i32
  }
  func.func @transform_43(%arg0: i32) -> (i32, i32) {
    %c0_i32 = arith.constant 0 : i32
    %c0_i32_0 = arith.constant 0 : i32
    %c0_i32_1 = arith.constant 0 : i32
    return %c0_i32, %c0_i32_0 : i32, i32
  }
  func.func @transform_44(%arg0: i32) -> (i32, i32) {
    %c0_i32 = arith.constant 0 : i32
    %c0_i32_0 = arith.constant 0 : i32
    %c0_i32_1 = arith.constant 0 : i32
    return %c0_i32, %c0_i32_0 : i32, i32
  }
  func.func @transform_45(%arg0: i32) -> (i32, i32) {
    %c0_i32 = arith.constant 0 : i32
    %c0_i32_0 = arith.constant 0 : i32
    %c0_i32_1 = arith.constant 0 : i32
    return %c0_i32, %c0_i32_0 : i32, i32
  }
  func.func @transform_46(%arg0: i32) -> (i32, i32) {
    %c0_i32 = arith.constant 0 : i32
    %c0_i32_0 = arith.constant 0 : i32
    %c0_i32_1 = arith.constant 0 : i32
    return %c0_i32, %c0_i32_0 : i32, i32
  }
  func.func @transform_47(%arg0: i32) -> (i32, i32) {
    %c0_i32 = arith.constant 0 : i32
    %c0_i32_0 = arith.constant 0 : i32
    %c0_i32_1 = arith.constant 0 : i32
    return %c0_i32, %c0_i32_0 : i32, i32
  }
  func.func @transform_48(%arg0: i32) -> (i32, i32) {
    %c0_i32 = arith.constant 0 : i32
    %c0_i32_0 = arith.constant 0 : i32
    %c0_i32_1 = arith.constant 0 : i32
    return %c0_i32, %c0_i32_0 : i32, i32
  }
  func.func @transform_49(%arg0: i32) -> (i32, i32) {
    %c0_i32 = arith.constant 0 : i32
    %c0_i32_0 = arith.constant 0 : i32
    %c0_i32_1 = arith.constant 0 : i32
    return %c0_i32, %c0_i32_0 : i32, i32
  }
  func.func @transform_50(%arg0: i32) -> (i32, i32) {
    %c0_i32 = arith.constant 0 : i32
    %c0_i32_0 = arith.constant 0 : i32
    %c0_i32_1 = arith.constant 0 : i32
    return %c0_i32, %c0_i32_0 : i32, i32
  }
  func.func @transform_51(%arg0: i32) -> (i32, i32) {
    %c0_i32 = arith.constant 0 : i32
    %c0_i32_0 = arith.constant 0 : i32
    %c0_i32_1 = arith.constant 0 : i32
    return %c0_i32, %c0_i32_0 : i32, i32
  }
  func.func @transform_52(%arg0: i32) -> (i32, i32) {
    %c0_i32 = arith.constant 0 : i32
    %c0_i32_0 = arith.constant 0 : i32
    %c0_i32_1 = arith.constant 0 : i32
    return %c0_i32, %c0_i32_0 : i32, i32
  }
  func.func @transform_53(%arg0: i32) -> (i32, i32) {
    %c0_i32 = arith.constant 0 : i32
    %c0_i32_0 = arith.constant 0 : i32
    %c0_i32_1 = arith.constant 0 : i32
    return %c0_i32, %c0_i32_0 : i32, i32
  }
  func.func @transform_54(%arg0: i32) -> (i32, i32) {
    %c0_i32 = arith.constant 0 : i32
    %c0_i32_0 = arith.constant 0 : i32
    %c0_i32_1 = arith.constant 0 : i32
    return %c0_i32, %c0_i32_0 : i32, i32
  }
  func.func @transform_55(%arg0: i32) -> (i32, i32) {
    %c0_i32 = arith.constant 0 : i32
    %c0_i32_0 = arith.constant 0 : i32
    %c0_i32_1 = arith.constant 0 : i32
    return %c0_i32, %c0_i32_0 : i32, i32
  }
  func.func @transform_56(%arg0: i32) -> (i32, i32) {
    %c0_i32 = arith.constant 0 : i32
    %c0_i32_0 = arith.constant 0 : i32
    %c0_i32_1 = arith.constant 0 : i32
    return %c0_i32, %c0_i32_0 : i32, i32
  }
  func.func @transform_57(%arg0: i32) -> (i32, i32) {
    %c0_i32 = arith.constant 0 : i32
    %c0_i32_0 = arith.constant 0 : i32
    return %arg0, %c0_i32 : i32, i32
  }
}

</mosaic_0001>

<llo_original>
// kernel: non_conv_unet_forward.1
$region0: #{non_conv_unet_forward.1}
  #allocation0 [shape = 'u32[]', space=smem, size = 0x4, offset = 0x4, fixed_abs, tag = 'smem constant byte address 0x4 - core index']
  #allocation1 [shape = 'u32[144,128]{1,0:T(1,128)}', space=vmem, size = 0x12000, scoped, tag = 'internal scratch']
  %s0 = inlined_call_operand.smem [shape: u32[58], index: -1, kind: input, shape index: {}]
  %s1 = sld [smem:[%s0]]
  %s2 = scalar_lea.smem %s0, 1
  %s3 = sld [smem:[%s2]]
  %s4 = scalar_lea.smem %s0, 2
  %s5 = sld [smem:[%s4]]
  %s6 = scalar_lea.smem %s0, 3
  %s7 = sld [smem:[%s6]]
  %s8 = scalar_lea.smem %s0, 4
  %s9 = sld [smem:[%s8]]
  %s10 = scalar_lea.smem %s0, 5
  %s11 = sld [smem:[%s10]]
  %s12 = scalar_lea.smem %s0, 6
  %s13 = sld [smem:[%s12]]
  %s14 = scalar_lea.smem %s0, 7
  %s15 = sld [smem:[%s14]]
  %s16 = scalar_lea.smem %s0, 8
  %s17 = sld [smem:[%s16]]
  %s18 = scalar_lea.smem %s0, 9
  %s19 = sld [smem:[%s18]]
  %s20 = scalar_lea.smem %s0, 10
  %s21 = sld [smem:[%s20]]
  %s22 = scalar_lea.smem %s0, 11
  %s23 = sld [smem:[%s22]]
  %s24 = scalar_lea.smem %s0, 12
  %s25 = sld [smem:[%s24]]
  %s26 = scalar_lea.smem %s0, 13
  %s27 = sld [smem:[%s26]]
  %s28 = scalar_lea.smem %s0, 14
  %s29 = sld [smem:[%s28]]
  %s30 = scalar_lea.smem %s0, 15
  %s31 = sld [smem:[%s30]]
  %s32 = scalar_lea.smem %s0, 16
  %s33 = sld [smem:[%s32]]
  %s34 = scalar_lea.smem %s0, 17
  %s35 = sld [smem:[%s34]]
  %s36 = scalar_lea.smem %s0, 18
  %s37 = sld [smem:[%s36]]
  %s38 = scalar_lea.smem %s0, 19
  %s39 = sld [smem:[%s38]]
  %s40 = scalar_lea.smem %s0, 20
  %s41 = sld [smem:[%s40]]
  %s42 = scalar_lea.smem %s0, 21
  %s43 = sld [smem:[%s42]]
  %s44 = scalar_lea.smem %s0, 22
  %s45 = sld [smem:[%s44]]
  %s46 = scalar_lea.smem %s0, 23
  %s47 = sld [smem:[%s46]]
  %s48 = scalar_lea.smem %s0, 24
  %s49 = sld [smem:[%s48]]
  %s50 = scalar_lea.smem %s0, 25
  %s51 = sld [smem:[%s50]]
  %s52 = scalar_lea.smem %s0, 26
  %s53 = sld [smem:[%s52]]
  %s54 = scalar_lea.smem %s0, 27
  %s55 = sld [smem:[%s54]]
  %s56 = scalar_lea.smem %s0, 28
  %s57 = sld [smem:[%s56]]
  %s58 = scalar_lea.smem %s0, 29
  %s59 = sld [smem:[%s58]]
  %s60 = scalar_lea.smem %s0, 30
  %s61 = sld [smem:[%s60]]
  %s62 = scalar_lea.smem %s0, 31
  %s63 = sld [smem:[%s62]]
  %s64 = scalar_lea.smem %s0, 32
  %s65 = sld [smem:[%s64]]
  %s66 = scalar_lea.smem %s0, 33
  %s67 = sld [smem:[%s66]]
  %s68 = scalar_lea.smem %s0, 34
  %s69 = sld [smem:[%s68]]
  %s70 = scalar_lea.smem %s0, 35
  %s71 = sld [smem:[%s70]]
  %s72 = scalar_lea.smem %s0, 36
  %s73 = sld [smem:[%s72]]
  %s74 = scalar_lea.smem %s0, 37
  %s75 = sld [smem:[%s74]]
  %s76 = scalar_lea.smem %s0, 38
  %s77 = sld [smem:[%s76]]
  %s78 = scalar_lea.smem %s0, 39
  %s79 = sld [smem:[%s78]]
  %s80 = scalar_lea.smem %s0, 40
  %s81 = sld [smem:[%s80]]
  %s82 = scalar_lea.smem %s0, 41
  %s83 = sld [smem:[%s82]]
  %s84 = scalar_lea.smem %s0, 42
  %s85 = sld [smem:[%s84]]
  %s86 = scalar_lea.smem %s0, 43
  %s87 = sld [smem:[%s86]]
  %s88 = scalar_lea.smem %s0, 44
  %s89 = sld [smem:[%s88]]
  %s90 = scalar_lea.smem %s0, 45
  %s91 = sld [smem:[%s90]]
  %s92 = scalar_lea.smem %s0, 46
  %s93 = sld [smem:[%s92]]
  %s94 = scalar_lea.smem %s0, 47
  %s95 = sld [smem:[%s94]]
  %s96 = scalar_lea.smem %s0, 48
  %s97 = sld [smem:[%s96]]
  %s98 = scalar_lea.smem %s0, 49
  %s99 = sld [smem:[%s98]]
  %s100 = scalar_lea.smem %s0, 50
  %s101 = sld [smem:[%s100]]
  %s102 = scalar_lea.smem %s0, 51
  %s103 = sld [smem:[%s102]]
  %s104 = scalar_lea.smem %s0, 52
  %s105 = sld [smem:[%s104]]
  %s106 = scalar_lea.smem %s0, 53
  %s107 = sld [smem:[%s106]]
  %s108 = scalar_lea.smem %s0, 54
  %s109 = sld [smem:[%s108]]
  %s110 = scalar_lea.smem %s0, 55
  %s111 = sld [smem:[%s110]]
  %s112 = scalar_lea.smem %s0, 56
  %s113 = sld [smem:[%s112]]
  %s114 = scalar_lea.smem %s0, 57
  %s115 = sld [smem:[%s114]]
  %s116 = sld [smem:[#allocation0]]
  $region390: #{non_conv_unet_forward.1} parent=0
    _
  %s118 = ssub.s32 1, %s116
  %s119 = scalar_select 0, %s118, %s116
  $region1: #{non_conv_unet_forward.1} parent=0
    #allocation2 [shape = 'u8[1024]{0}', space=vmem, size = 0x400, scoped, tag = 'input window, operand 0, single buffered']
    #allocation3 [shape = 's32[1]{0}', space=sflag, size = 0x4, scoped, tag = 'scoped memory for non_conv_unet_forward.1']
    #allocation4 [shape = 's32[1]{0}', space=sflag, size = 0x4, scoped, tag = 'scoped memory for non_conv_unet_forward.1']
    #allocation5 [shape = 'u8[1024]{0}', space=vmem, size = 0x400, scoped, tag = 'input window, operand 2, single buffered']
    #allocation6 [shape = 's32[1]{0}', space=sflag, size = 0x4, scoped, tag = 'scoped memory for non_conv_unet_forward.1']
    #allocation7 [shape = 'u8[512]{0}', space=vmem, size = 0x400, scoped, tag = 'input window, operand 4, single buffered']
    #allocation8 [shape = 'u8[512]{0}', space=vmem, size = 0x400, scoped, tag = 'input window, operand 8, single buffered']
    #allocation9 [shape = 's32[1]{0}', space=sflag, size = 0x4, scoped, tag = 'scoped memory for non_conv_unet_forward.1']
    #allocation10 [shape = 'u8[512]{0}', space=vmem, size = 0x400, scoped, tag = 'input window, operand 11, single buffered']
    #allocation11 [shape = 'u8[512]{0}', space=vmem, size = 0x400, scoped, tag = 'input window, operand 14, single buffered']
    #allocation12 [shape = 's32[1]{0}', space=sflag, size = 0x4, scoped, tag = 'scoped memory for non_conv_unet_forward.1']
    #allocation13 [shape = 'u8[512]{0}', space=vmem, size = 0x400, scoped, tag = 'input window, operand 17, single buffered']
    #allocation14 [shape = 'u8[4096]{0}', space=vmem, size = 0x1000, scoped, tag = 'input window, operand 18, single buffered']
    #allocation15 [shape = 's32[1]{0}', space=sflag, size = 0x4, scoped, tag = 'scoped memory for non_conv_unet_forward.1']
    #allocation16 [shape = 'u8[8192]{0}', space=vmem, size = 0x2000, scoped, tag = 'input window, operand 19, single buffered']
    #allocation17 [shape = 'u8[512]{0}', space=vmem, size = 0x400, scoped, tag = 'input window, operand 20, single buffered']
    #allocation18 [shape = 's32[1]{0}', space=sflag, size = 0x4, scoped, tag = 'scoped memory for non_conv_unet_forward.1']
    #allocation19 [shape = 'u8[4096]{0}', space=vmem, size = 0x1000, scoped, tag = 'input window, operand 21, single buffered']
    #allocation20 [shape = 'u8[512]{0}', space=vmem, size = 0x400, scoped, tag = 'input window, operand 23, single buffered']
    #allocation21 [shape = 's32[1]{0}', space=sflag, size = 0x4, scoped, tag = 'scoped memory for non_conv_unet_forward.1']
    #allocation22 [shape = 'u8[2048]{0}', space=vmem, size = 0x800, scoped, tag = 'input window, operand 24, single buffered']
    #allocation23 [shape = 'u8[4096]{0}', space=vmem, size = 0x1000, scoped, tag = 'input window, operand 25, single buffered']
    #allocation24 [shape = 's32[1]{0}', space=sflag, size = 0x4, scoped, tag = 'scoped memory for non_conv_unet_forward.1']
    #allocation25 [shape = 'u8[512]{0}', space=vmem, size = 0x400, scoped, tag = 'input window, operand 26, single buffered']
    #allocation26 [shape = 'u8[2048]{0}', space=vmem, size = 0x800, scoped, tag = 'input window, operand 27, single buffered']
    #allocation27 [shape = 's32[1]{0}', space=sflag, size = 0x4, scoped, tag = 'scoped memory for non_conv_unet_forward.1']
    #allocation28 [shape = 'u8[2048]{0}', space=vmem, size = 0x800, scoped, tag = 'input window, operand 28, single buffered']
    #allocation29 [shape = 'u8[512]{0}', space=vmem, size = 0x400, scoped, tag = 'input window, operand 29, single buffered']
    #allocation30 [shape = 's32[1]{0}', space=sflag, size = 0x4, scoped, tag = 'scoped memory for non_conv_unet_forward.1']
    #allocation31 [shape = 'u8[2048]{0}', space=vmem, size = 0x800, scoped, tag = 'input window, operand 30, single buffered']
    #allocation32 [shape = 'u8[2048]{0}', space=vmem, size = 0x800, scoped, tag = 'input window, operand 31, single buffered']
    #allocation33 [shape = 's32[1]{0}', space=sflag, size = 0x4, scoped, tag = 'scoped memory for non_conv_unet_forward.1']
    #allocation34 [shape = 'u8[512]{0}', space=vmem, size = 0x400, scoped, tag = 'input window, operand 32, single buffered']
    #allocation35 [shape = 'u8[2048]{0}', space=vmem, size = 0x800, scoped, tag = 'input window, operand 33, single buffered']
    #allocation36 [shape = 's32[1]{0}', space=sflag, size = 0x4, scoped, tag = 'scoped memory for non_conv_unet_forward.1']
    #allocation37 [shape = 'u8[4096]{0}', space=vmem, size = 0x1000, scoped, tag = 'input window, operand 34, single buffered']
    #allocation38 [shape = 'u8[512]{0}', space=vmem, size = 0x400, scoped, tag = 'input window, operand 35, single buffered']
    #allocation39 [shape = 's32[1]{0}', space=sflag, size = 0x4, scoped, tag = 'scoped memory for non_conv_unet_forward.1']
    #allocation40 [shape = 'u8[4096]{0}', space=vmem, size = 0x1000, scoped, tag = 'input window, operand 36, single buffered']
    #allocation41 [shape = 'u8[4096]{0}', space=vmem, size = 0x1000, scoped, tag = 'input window, operand 37, single buffered']
    #allocation42 [shape = 's32[1]{0}', space=sflag, size = 0x4, scoped, tag = 'scoped memory for non_conv_unet_forward.1']
    #allocation43 [shape = 'u8[512]{0}', space=vmem, size = 0x400, scoped, tag = 'input window, operand 38, single buffered']
    #allocation44 [shape = 'u8[4096]{0}', space=vmem, size = 0x1000, scoped, tag = 'input window, operand 39, single buffered']
    #allocation45 [shape = 's32[1]{0}', space=sflag, size = 0x4, scoped, tag = 'scoped memory for non_conv_unet_forward.1']
    #allocation46 [shape = 'u8[8192]{0}', space=vmem, size = 0x2000, scoped, tag = 'input window, operand 40, single buffered']
    #allocation47 [shape = 'u8[512]{0}', space=vmem, size = 0x400, scoped, tag = 'input window, operand 41, single buffered']
    #allocation48 [shape = 's32[1]{0}', space=sflag, size = 0x4, scoped, tag = 'scoped memory for non_conv_unet_forward.1']
    #allocation49 [shape = 'u8[8192]{0}', space=vmem, size = 0x2000, scoped, tag = 'input window, operand 42, single buffered']
    #allocation50 [shape = 'u8[8192]{0}', space=vmem, size = 0x2000, scoped, tag = 'input window, operand 43, single buffered']
    #allocation51 [shape = 's32[1]{0}', space=sflag, size = 0x4, scoped, tag = 'scoped memory for non_conv_unet_forward.1']
    #allocation52 [shape = 'u8[512]{0}', space=vmem, size = 0x400, scoped, tag = 'input window, operand 44, single buffered']
    #allocation53 [shape = 'u8[8192]{0}', space=vmem, size = 0x2000, scoped, tag = 'input window, operand 45, single buffered']
    #allocation54 [shape = 's32[1]{0}', space=sflag, size = 0x4, scoped, tag = 'scoped memory for non_conv_unet_forward.1']
    #allocation55 [shape = 'u8[512]{0}', space=vmem, size = 0x400, scoped, tag = 'input window, operand 47, single buffered']
    #allocation56 [shape = 'u8[512]{0}', space=vmem, size = 0x400, scoped, tag = 'input window, operand 50, single buffered']
    #allocation57 [shape = 's32[1]{0}', space=sflag, size = 0x4, scoped, tag = 'scoped memory for non_conv_unet_forward.1']
    #allocation58 [shape = 'u8[512]{0}', space=vmem, size = 0x400, scoped, tag = 'input window, operand 53, single buffered']
    #allocation59 [shape = 'u8[512]{0}', space=vmem, size = 0x400, scoped, tag = 'input window, operand 56, single buffered']
    #allocation60 [shape = 's32[1]{0}', space=sflag, size = 0x4, scoped, tag = 'scoped memory for non_conv_unet_forward.1']
    #allocation61 [shape = 'u8[1024]{0}', space=vmem, size = 0x400, scoped, tag = 'output window, operand 0, single buffered']
    %120 = vsyncpa [#allocation3], 0
    %121 = vsyncpa [#allocation6], 0
    %122 = vsyncpa [#allocation9], 0
    %123 = vsyncpa [#allocation12], 0
    %124 = vsyncpa [#allocation15], 0
    %125 = vsyncpa [#allocation18], 0
    %126 = vsyncpa [#allocation21], 0
    %127 = vsyncpa [#allocation24], 0
    %128 = vsyncpa [#allocation27], 0
    %129 = vsyncpa [#allocation30], 0
    %130 = vsyncpa [#allocation33], 0
    %131 = vsyncpa [#allocation36], 0
    %132 = vsyncpa [#allocation39], 0
    %133 = vsyncpa [#allocation42], 0
    %134 = vsyncpa [#allocation45], 0
    %135 = vsyncpa [#allocation48], 0
    %136 = vsyncpa [#allocation51], 0
    %137 = vsyncpa [#allocation54], 0
    %138 = vsyncpa [#allocation57], 0
    %139 = vsyncpa [#allocation60], 0
    %140 = vsyncpa [#allocation4], 0
    // Predicated region
    $region2: #{non_conv_unet_forward.1} parent=1 // pred_check
      _
    $region3: #{non_conv_unet_forward.1} parent=1 // pred_check_branch
      %142 = sbr.rel (0) target = $region5
    $region4: #{non_conv_unet_forward.1} parent=1 // pred_region
      %s144 = ssub.s32 32, 32
      %145 = vsyncadd [#allocation3], %s144
      %s147 = sshll.u32 [#allocation2], 4
      %s148 = int_to_ptr.vmem [resolvable:$true] %s147
      %150 = dma.hbm_to_vmem [thread:$0]  %s1, 32, %s148, [#allocation3]
    $region5: #{non_conv_unet_forward.1} parent=1 // pred_fallthru
      _
    // Predicated region
    $region6: #{non_conv_unet_forward.1} parent=1 // pred_check
      _
    $region7: #{non_conv_unet_forward.1} parent=1 // pred_check_branch
      %152 = sbr.rel (0) target = $region9
    $region8: #{non_conv_unet_forward.1} parent=1 // pred_region
      _
    $region9: #{non_conv_unet_forward.1} parent=1 // pred_fallthru
      _
    // Predicated region
    $region10: #{non_conv_unet_forward.1} parent=1 // pred_check
      _
    $region11: #{non_conv_unet_forward.1} parent=1 // pred_check_branch
      %154 = sbr.rel (0) target = $region13
    $region12: #{non_conv_unet_forward.1} parent=1 // pred_region
      %s156 = ssub.s32 32, 32
      %157 = vsyncadd [#allocation6], %s156
      %s159 = sshll.u32 [#allocation5], 4
      %s160 = int_to_ptr.vmem [resolvable:$true] %s159
      %162 = dma.hbm_to_vmem [thread:$0]  %s5, 32, %s160, [#allocation6]
    $region13: #{non_conv_unet_forward.1} parent=1 // pred_fallthru
      _
    // Predicated region
    $region14: #{non_conv_unet_forward.1} parent=1 // pred_check
      _
    $region15: #{non_conv_unet_forward.1} parent=1 // pred_check_branch
      %164 = sbr.rel (0) target = $region17
    $region16: #{non_conv_unet_forward.1} parent=1 // pred_region
      _
    $region17: #{non_conv_unet_forward.1} parent=1 // pred_fallthru
      _
    // Predicated region
    $region18: #{non_conv_unet_forward.1} parent=1 // pred_check
      _
    $region19: #{non_conv_unet_forward.1} parent=1 // pred_check_branch
      %166 = sbr.rel (0) target = $region21
    $region20: #{non_conv_unet_forward.1} parent=1 // pred_region
      %s168 = ssub.s32 16, 16
      %169 = vsyncadd [#allocation6], %s168
      %s171 = sshll.u32 [#allocation7], 4
      %s172 = int_to_ptr.vmem [resolvable:$true] %s171
      %174 = dma.hbm_to_vmem [thread:$0]  %s9, 16, %s172, [#allocation6]
    $region21: #{non_conv_unet_forward.1} parent=1 // pred_fallthru
      _
    // Predicated region
    $region22: #{non_conv_unet_forward.1} parent=1 // pred_check
      _
    $region23: #{non_conv_unet_forward.1} parent=1 // pred_check_branch
      %176 = sbr.rel (0) target = $region25
    $region24: #{non_conv_unet_forward.1} parent=1 // pred_region
      _
    $region25: #{non_conv_unet_forward.1} parent=1 // pred_fallthru
      _
    // Predicated region
    $region26: #{non_conv_unet_forward.1} parent=1 // pred_check
      _
    $region27: #{non_conv_unet_forward.1} parent=1 // pred_check_branch
      %178 = sbr.rel (0) target = $region29
    $region28: #{non_conv_unet_forward.1} parent=1 // pred_region
      _
    $region29: #{non_conv_unet_forward.1} parent=1 // pred_fallthru
      _
    // Predicated region
    $region30: #{non_conv_unet_forward.1} parent=1 // pred_check
      _
    $region31: #{non_conv_unet_forward.1} parent=1 // pred_check_branch
      %180 = sbr.rel (0) target = $region33
    $region32: #{non_conv_unet_forward.1} parent=1 // pred_region
      _
    $region33: #{non_conv_unet_forward.1} parent=1 // pred_fallthru
      _
    // Predicated region
    $region34: #{non_conv_unet_forward.1} parent=1 // pred_check
      _
    $region35: #{non_conv_unet_forward.1} parent=1 // pred_check_branch
      %182 = sbr.rel (0) target = $region37
    $region36: #{non_conv_unet_forward.1} parent=1 // pred_region
      %s184 = ssub.s32 16, 16
      %185 = vsyncadd [#allocation9], %s184
      %s187 = sshll.u32 [#allocation8], 4
      %s188 = int_to_ptr.vmem [resolvable:$true] %s187
      %190 = dma.hbm_to_vmem [thread:$0]  %s17, 16, %s188, [#allocation9]
    $region37: #{non_conv_unet_forward.1} parent=1 // pred_fallthru
      _
    // Predicated region
    $region38: #{non_conv_unet_forward.1} parent=1 // pred_check
      _
    $region39: #{non_conv_unet_forward.1} parent=1 // pred_check_branch
      %192 = sbr.rel (0) target = $region41
    $region40: #{non_conv_unet_forward.1} parent=1 // pred_region
      _
    $region41: #{non_conv_unet_forward.1} parent=1 // pred_fallthru
      _
    // Predicated region
    $region42: #{non_conv_unet_forward.1} parent=1 // pred_check
      _
    $region43: #{non_conv_unet_forward.1} parent=1 // pred_check_branch
      %194 = sbr.rel (0) target = $region45
    $region44: #{non_conv_unet_forward.1} parent=1 // pred_region
      _
    $region45: #{non_conv_unet_forward.1} parent=1 // pred_fallthru
      _
    // Predicated region
    $region46: #{non_conv_unet_forward.1} parent=1 // pred_check
      _
    $region47: #{non_conv_unet_forward.1} parent=1 // pred_check_branch
      %196 = sbr.rel (0) target = $region49
    $region48: #{non_conv_unet_forward.1} parent=1 // pred_region
      %s198 = ssub.s32 16, 16
      %199 = vsyncadd [#allocation9], %s198
      %s201 = sshll.u32 [#allocation10], 4
      %s202 = int_to_ptr.vmem [resolvable:$true] %s201
      %204 = dma.hbm_to_vmem [thread:$0]  %s23, 16, %s202, [#allocation9]
    $region49: #{non_conv_unet_forward.1} parent=1 // pred_fallthru
      _
    // Predicated region
    $region50: #{non_conv_unet_forward.1} parent=1 // pred_check
      _
    $region51: #{non_conv_unet_forward.1} parent=1 // pred_check_branch
      %206 = sbr.rel (0) target = $region53
    $region52: #{non_conv_unet_forward.1} parent=1 // pred_region
      _
    $region53: #{non_conv_unet_forward.1} parent=1 // pred_fallthru
      _
    // Predicated region
    $region54: #{non_conv_unet_forward.1} parent=1 // pred_check
      _
    $region55: #{non_conv_unet_forward.1} parent=1 // pred_check_branch
      %208 = sbr.rel (0) target = $region57
    $region56: #{non_conv_unet_forward.1} parent=1 // pred_region
      _
    $region57: #{non_conv_unet_forward.1} parent=1 // pred_fallthru
      _
    // Predicated region
    $region58: #{non_conv_unet_forward.1} parent=1 // pred_check
      _
    $region59: #{non_conv_unet_forward.1} parent=1 // pred_check_branch
      %210 = sbr.rel (0) target = $region61
    $region60: #{non_conv_unet_forward.1} parent=1 // pred_region
      %s212 = ssub.s32 16, 16
      %213 = vsyncadd [#allocation12], %s212
      %s215 = sshll.u32 [#allocation11], 4
      %s216 = int_to_ptr.vmem [resolvable:$true] %s215
      %218 = dma.hbm_to_vmem [thread:$0]  %s29, 16, %s216, [#allocation12]
    $region61: #{non_conv_unet_forward.1} parent=1 // pred_fallthru
      _
    // Predicated region
    $region62: #{non_conv_unet_forward.1} parent=1 // pred_check
      _
    $region63: #{non_conv_unet_forward.1} parent=1 // pred_check_branch
      %220 = sbr.rel (0) target = $region65
    $region64: #{non_conv_unet_forward.1} parent=1 // pred_region
      _
    $region65: #{non_conv_unet_forward.1} parent=1 // pred_fallthru
      _
    // Predicated region
    $region66: #{non_conv_unet_forward.1} parent=1 // pred_check
      _
    $region67: #{non_conv_unet_forward.1} parent=1 // pred_check_branch
      %222 = sbr.rel (0) target = $region69
    $region68: #{non_conv_unet_forward.1} parent=1 // pred_region
      _
    $region69: #{non_conv_unet_forward.1} parent=1 // pred_fallthru
      _
    // Predicated region
    $region70: #{non_conv_unet_forward.1} parent=1 // pred_check
      _
    $region71: #{non_conv_unet_forward.1} parent=1 // pred_check_branch
      %224 = sbr.rel (0) target = $region73
    $region72: #{non_conv_unet_forward.1} parent=1 // pred_region
      %s226 = ssub.s32 16, 16
      %227 = vsyncadd [#allocation12], %s226
      %s229 = sshll.u32 [#allocation13], 4
      %s230 = int_to_ptr.vmem [resolvable:$true] %s229
      %232 = dma.hbm_to_vmem [thread:$0]  %s35, 16, %s230, [#allocation12]
    $region73: #{non_conv_unet_forward.1} parent=1 // pred_fallthru
      _
    // Predicated region
    $region74: #{non_conv_unet_forward.1} parent=1 // pred_check
      _
    $region75: #{non_conv_unet_forward.1} parent=1 // pred_check_branch
      %234 = sbr.rel (0) target = $region77
    $region76: #{non_conv_unet_forward.1} parent=1 // pred_region
      %s236 = ssub.s32 128, 128
      %237 = vsyncadd [#allocation15], %s236
      %s239 = sshll.u32 [#allocation14], 4
      %s240 = int_to_ptr.vmem [resolvable:$true] %s239
      %242 = dma.hbm_to_vmem [thread:$0]  %s37, 128, %s240, [#allocation15]
    $region77: #{non_conv_unet_forward.1} parent=1 // pred_fallthru
      _
    // Predicated region
    $region78: #{non_conv_unet_forward.1} parent=1 // pred_check
      _
    $region79: #{non_conv_unet_forward.1} parent=1 // pred_check_branch
      %244 = sbr.rel (0) target = $region81
    $region80: #{non_conv_unet_forward.1} parent=1 // pred_region
      %s246 = ssub.s32 256, 256
      %247 = vsyncadd [#allocation15], %s246
      %s248 = sshll.u32 [#allocation16], 4
      %s249 = int_to_ptr.vmem [resolvable:$true] %s248
      %254 = dma.hbm_to_vmem [thread:$0]  %s39, 256, %s249, [#allocation15], 128, 128, 8
    $region81: #{non_conv_unet_forward.1} parent=1 // pred_fallthru
      _
    // Predicated region
    $region82: #{non_conv_unet_forward.1} parent=1 // pred_check
      _
    $region83: #{non_conv_unet_forward.1} parent=1 // pred_check_branch
      %256 = sbr.rel (0) target = $region85
    $region84: #{non_conv_unet_forward.1} parent=1 // pred_region
      %s258 = ssub.s32 16, 16
      %259 = vsyncadd [#allocation18], %s258
      %s261 = sshll.u32 [#allocation17], 4
      %s262 = int_to_ptr.vmem [resolvable:$true] %s261
      %264 = dma.hbm_to_vmem [thread:$0]  %s41, 16, %s262, [#allocation18]
    $region85: #{non_conv_unet_forward.1} parent=1 // pred_fallthru
      _
    // Predicated region
    $region86: #{non_conv_unet_forward.1} parent=1 // pred_check
      _
    $region87: #{non_conv_unet_forward.1} parent=1 // pred_check_branch
      %266 = sbr.rel (0) target = $region89
    $region88: #{non_conv_unet_forward.1} parent=1 // pred_region
      %s268 = ssub.s32 128, 128
      %269 = vsyncadd [#allocation18], %s268
      %s271 = sshll.u32 [#allocation19], 4
      %s272 = int_to_ptr.vmem [resolvable:$true] %s271
      %274 = dma.hbm_to_vmem [thread:$0]  %s43, 128, %s272, [#allocation18]
    $region89: #{non_conv_unet_forward.1} parent=1 // pred_fallthru
      _
    // Predicated region
    $region90: #{non_conv_unet_forward.1} parent=1 // pred_check
      _
    $region91: #{non_conv_unet_forward.1} parent=1 // pred_check_branch
      %276 = sbr.rel (0) target = $region93
    $region92: #{non_conv_unet_forward.1} parent=1 // pred_region
      _
    $region93: #{non_conv_unet_forward.1} parent=1 // pred_fallthru
      _
    // Predicated region
    $region94: #{non_conv_unet_forward.1} parent=1 // pred_check
      _
    $region95: #{non_conv_unet_forward.1} parent=1 // pred_check_branch
      %278 = sbr.rel (0) target = $region97
    $region96: #{non_conv_unet_forward.1} parent=1 // pred_region
      %s280 = ssub.s32 16, 16
      %281 = vsyncadd [#allocation21], %s280
      %s283 = sshll.u32 [#allocation20], 4
      %s284 = int_to_ptr.vmem [resolvable:$true] %s283
      %286 = dma.hbm_to_vmem [thread:$0]  %s47, 16, %s284, [#allocation21]
    $region97: #{non_conv_unet_forward.1} parent=1 // pred_fallthru
      _
    // Predicated region
    $region98: #{non_conv_unet_forward.1} parent=1 // pred_check
      _
    $region99: #{non_conv_unet_forward.1} parent=1 // pred_check_branch
      %288 = sbr.rel (0) target = $region101
    $region100: #{non_conv_unet_forward.1} parent=1 // pred_region
      %s290 = ssub.s32 64, 64
      %291 = vsyncadd [#allocation21], %s290
      %s293 = sshll.u32 [#allocation22], 4
      %s294 = int_to_ptr.vmem [resolvable:$true] %s293
      %296 = dma.hbm_to_vmem [thread:$0]  %s49, 64, %s294, [#allocation21]
    $region101: #{non_conv_unet_forward.1} parent=1 // pred_fallthru
      _
    // Predicated region
    $region102: #{non_conv_unet_forward.1} parent=1 // pred_check
      _
    $region103: #{non_conv_unet_forward.1} parent=1 // pred_check_branch
      %298 = sbr.rel (0) target = $region105
    $region104: #{non_conv_unet_forward.1} parent=1 // pred_region
      %s300 = ssub.s32 128, 128
      %301 = vsyncadd [#allocation24], %s300
      %s303 = sshll.u32 [#allocation23], 4
      %s304 = int_to_ptr.vmem [resolvable:$true] %s303
      %306 = dma.hbm_to_vmem [thread:$0]  %s51, 128, %s304, [#allocation24]
    $region105: #{non_conv_unet_forward.1} parent=1 // pred_fallthru
      _
    // Predicated region
    $region106: #{non_conv_unet_forward.1} parent=1 // pred_check
      _
    $region107: #{non_conv_unet_forward.1} parent=1 // pred_check_branch
      %308 = sbr.rel (0) target = $region109
    $region108: #{non_conv_unet_forward.1} parent=1 // pred_region
      %s310 = ssub.s32 16, 16
      %311 = vsyncadd [#allocation24], %s310
      %s313 = sshll.u32 [#allocation25], 4
      %s314 = int_to_ptr.vmem [resolvable:$true] %s313
      %316 = dma.hbm_to_vmem [thread:$0]  %s53, 16, %s314, [#allocation24]
    $region109: #{non_conv_unet_forward.1} parent=1 // pred_fallthru
      _
    // Predicated region
    $region110: #{non_conv_unet_forward.1} parent=1 // pred_check
      _
    $region111: #{non_conv_unet_forward.1} parent=1 // pred_check_branch
      %318 = sbr.rel (0) target = $region113
    $region112: #{non_conv_unet_forward.1} parent=1 // pred_region
      %s320 = ssub.s32 64, 64
      %321 = vsyncadd [#allocation27], %s320
      %s323 = sshll.u32 [#allocation26], 4
      %s324 = int_to_ptr.vmem [resolvable:$true] %s323
      %326 = dma.hbm_to_vmem [thread:$0]  %s55, 64, %s324, [#allocation27]
    $region113: #{non_conv_unet_forward.1} parent=1 // pred_fallthru
      _
    // Predicated region
    $region114: #{non_conv_unet_forward.1} parent=1 // pred_check
      _
    $region115: #{non_conv_unet_forward.1} parent=1 // pred_check_branch
      %328 = sbr.rel (0) target = $region117
    $region116: #{non_conv_unet_forward.1} parent=1 // pred_region
      %s330 = ssub.s32 64, 64
      %331 = vsyncadd [#allocation27], %s330
      %s333 = sshll.u32 [#allocation28], 4
      %s334 = int_to_ptr.vmem [resolvable:$true] %s333
      %336 = dma.hbm_to_vmem [thread:$0]  %s57, 64, %s334, [#allocation27]
    $region117: #{non_conv_unet_forward.1} parent=1 // pred_fallthru
      _
    // Predicated region
    $region118: #{non_conv_unet_forward.1} parent=1 // pred_check
      _
    $region119: #{non_conv_unet_forward.1} parent=1 // pred_check_branch
      %338 = sbr.rel (0) target = $region121
    $region120: #{non_conv_unet_forward.1} parent=1 // pred_region
      %s340 = ssub.s32 16, 16
      %341 = vsyncadd [#allocation30], %s340
      %s343 = sshll.u32 [#allocation29], 4
      %s344 = int_to_ptr.vmem [resolvable:$true] %s343
      %346 = dma.hbm_to_vmem [thread:$0]  %s59, 16, %s344, [#allocation30]
    $region121: #{non_conv_unet_forward.1} parent=1 // pred_fallthru
      _
    // Predicated region
    $region122: #{non_conv_unet_forward.1} parent=1 // pred_check
      _
    $region123: #{non_conv_unet_forward.1} parent=1 // pred_check_branch
      %348 = sbr.rel (0) target = $region125
    $region124: #{non_conv_unet_forward.1} parent=1 // pred_region
      %s350 = ssub.s32 64, 64
      %351 = vsyncadd [#allocation30], %s350
      %s353 = sshll.u32 [#allocation31], 4
      %s354 = int_to_ptr.vmem [resolvable:$true] %s353
      %356 = dma.hbm_to_vmem [thread:$0]  %s61, 64, %s354, [#allocation30]
    $region125: #{non_conv_unet_forward.1} parent=1 // pred_fallthru
      _
    // Predicated region
    $region126: #{non_conv_unet_forward.1} parent=1 // pred_check
      _
    $region127: #{non_conv_unet_forward.1} parent=1 // pred_check_branch
      %358 = sbr.rel (0) target = $region129
    $region128: #{non_conv_unet_forward.1} parent=1 // pred_region
      %s360 = ssub.s32 64, 64
      %361 = vsyncadd [#allocation33], %s360
      %s363 = sshll.u32 [#allocation32], 4
      %s364 = int_to_ptr.vmem [resolvable:$true] %s363
      %366 = dma.hbm_to_vmem [thread:$0]  %s63, 64, %s364, [#allocation33]
    $region129: #{non_conv_unet_forward.1} parent=1 // pred_fallthru
      _
    // Predicated region
    $region130: #{non_conv_unet_forward.1} parent=1 // pred_check
      _
    $region131: #{non_conv_unet_forward.1} parent=1 // pred_check_branch
      %368 = sbr.rel (0) target = $region133
    $region132: #{non_conv_unet_forward.1} parent=1 // pred_region
      %s370 = ssub.s32 16, 16
      %371 = vsyncadd [#allocation33], %s370
      %s373 = sshll.u32 [#allocation34], 4
      %s374 = int_to_ptr.vmem [resolvable:$true] %s373
      %376 = dma.hbm_to_vmem [thread:$0]  %s65, 16, %s374, [#allocation33]
    $region133: #{non_conv_unet_forward.1} parent=1 // pred_fallthru
      _
    // Predicated region
    $region134: #{non_conv_unet_forward.1} parent=1 // pred_check
      _
    $region135: #{non_conv_unet_forward.1} parent=1 // pred_check_branch
      %378 = sbr.rel (0) target = $region137
    $region136: #{non_conv_unet_forward.1} parent=1 // pred_region
      %s380 = ssub.s32 64, 64
      %381 = vsyncadd [#allocation36], %s380
      %s383 = sshll.u32 [#allocation35], 4
      %s384 = int_to_ptr.vmem [resolvable:$true] %s383
      %386 = dma.hbm_to_vmem [thread:$0]  %s67, 64, %s384, [#allocation36]
    $region137: #{non_conv_unet_forward.1} parent=1 // pred_fallthru
      _
    // Predicated region
    $region138: #{non_conv_unet_forward.1} parent=1 // pred_check
      _
    $region139: #{non_conv_unet_forward.1} parent=1 // pred_check_branch
      %388 = sbr.rel (0) target = $region141
    $region140: #{non_conv_unet_forward.1} parent=1 // pred_region
      %s390 = ssub.s32 128, 128
      %391 = vsyncadd [#allocation36], %s390
      %s393 = sshll.u32 [#allocation37], 4
      %s394 = int_to_ptr.vmem [resolvable:$true] %s393
      %396 = dma.hbm_to_vmem [thread:$0]  %s69, 128, %s394, [#allocation36]
    $region141: #{non_conv_unet_forward.1} parent=1 // pred_fallthru
      _
    // Predicated region
    $region142: #{non_conv_unet_forward.1} parent=1 // pred_check
      _
    $region143: #{non_conv_unet_forward.1} parent=1 // pred_check_branch
      %398 = sbr.rel (0) target = $region145
    $region144: #{non_conv_unet_forward.1} parent=1 // pred_region
      %s400 = ssub.s32 16, 16
      %401 = vsyncadd [#allocation39], %s400
      %s403 = sshll.u32 [#allocation38], 4
      %s404 = int_to_ptr.vmem [resolvable:$true] %s403
      %406 = dma.hbm_to_vmem [thread:$0]  %s71, 16, %s404, [#allocation39]
    $region145: #{non_conv_unet_forward.1} parent=1 // pred_fallthru
      _
    // Predicated region
    $region146: #{non_conv_unet_forward.1} parent=1 // pred_check
      _
    $region147: #{non_conv_unet_forward.1} parent=1 // pred_check_branch
      %408 = sbr.rel (0) target = $region149
    $region148: #{non_conv_unet_forward.1} parent=1 // pred_region
      %s410 = ssub.s32 128, 128
      %411 = vsyncadd [#allocation39], %s410
      %s413 = sshll.u32 [#allocation40], 4
      %s414 = int_to_ptr.vmem [resolvable:$true] %s413
      %416 = dma.hbm_to_vmem [thread:$0]  %s73, 128, %s414, [#allocation39]
    $region149: #{non_conv_unet_forward.1} parent=1 // pred_fallthru
      _
    // Predicated region
    $region150: #{non_conv_unet_forward.1} parent=1 // pred_check
      _
    $region151: #{non_conv_unet_forward.1} parent=1 // pred_check_branch
      %418 = sbr.rel (0) target = $region153
    $region152: #{non_conv_unet_forward.1} parent=1 // pred_region
      %s420 = ssub.s32 128, 128
      %421 = vsyncadd [#allocation42], %s420
      %s423 = sshll.u32 [#allocation41], 4
      %s424 = int_to_ptr.vmem [resolvable:$true] %s423
      %426 = dma.hbm_to_vmem [thread:$0]  %s75, 128, %s424, [#allocation42]
    $region153: #{non_conv_unet_forward.1} parent=1 // pred_fallthru
      _
    // Predicated region
    $region154: #{non_conv_unet_forward.1} parent=1 // pred_check
      _
    $region155: #{non_conv_unet_forward.1} parent=1 // pred_check_branch
      %428 = sbr.rel (0) target = $region157
    $region156: #{non_conv_unet_forward.1} parent=1 // pred_region
      %s430 = ssub.s32 16, 16
      %431 = vsyncadd [#allocation42], %s430
      %s433 = sshll.u32 [#allocation43], 4
      %s434 = int_to_ptr.vmem [resolvable:$true] %s433
      %436 = dma.hbm_to_vmem [thread:$0]  %s77, 16, %s434, [#allocation42]
    $region157: #{non_conv_unet_forward.1} parent=1 // pred_fallthru
      _
    // Predicated region
    $region158: #{non_conv_unet_forward.1} parent=1 // pred_check
      _
    $region159: #{non_conv_unet_forward.1} parent=1 // pred_check_branch
      %438 = sbr.rel (0) target = $region161
    $region160: #{non_conv_unet_forward.1} parent=1 // pred_region
      %s440 = ssub.s32 128, 128
      %441 = vsyncadd [#allocation45], %s440
      %s443 = sshll.u32 [#allocation44], 4
      %s444 = int_to_ptr.vmem [resolvable:$true] %s443
      %446 = dma.hbm_to_vmem [thread:$0]  %s79, 128, %s444, [#allocation45]
    $region161: #{non_conv_unet_forward.1} parent=1 // pred_fallthru
      _
    // Predicated region
    $region162: #{non_conv_unet_forward.1} parent=1 // pred_check
      _
    $region163: #{non_conv_unet_forward.1} parent=1 // pred_check_branch
      %448 = sbr.rel (0) target = $region165
    $region164: #{non_conv_unet_forward.1} parent=1 // pred_region
      %s450 = ssub.s32 256, 256
      %451 = vsyncadd [#allocation45], %s450
      %s452 = sshll.u32 [#allocation46], 4
      %s453 = int_to_ptr.vmem [resolvable:$true] %s452
      %458 = dma.hbm_to_vmem [thread:$0]  %s81, 256, %s453, [#allocation45], 128, 128, 8
    $region165: #{non_conv_unet_forward.1} parent=1 // pred_fallthru
      _
    // Predicated region
    $region166: #{non_conv_unet_forward.1} parent=1 // pred_check
      _
    $region167: #{non_conv_unet_forward.1} parent=1 // pred_check_branch
      %460 = sbr.rel (0) target = $region169
    $region168: #{non_conv_unet_forward.1} parent=1 // pred_region
      %s462 = ssub.s32 16, 16
      %463 = vsyncadd [#allocation48], %s462
      %s465 = sshll.u32 [#allocation47], 4
      %s466 = int_to_ptr.vmem [resolvable:$true] %s465
      %468 = dma.hbm_to_vmem [thread:$0]  %s83, 16, %s466, [#allocation48]
    $region169: #{non_conv_unet_forward.1} parent=1 // pred_fallthru
      _
    // Predicated region
    $region170: #{non_conv_unet_forward.1} parent=1 // pred_check
      _
    $region171: #{non_conv_unet_forward.1} parent=1 // pred_check_branch
      %470 = sbr.rel (0) target = $region173
    $region172: #{non_conv_unet_forward.1} parent=1 // pred_region
      %s472 = ssub.s32 256, 256
      %473 = vsyncadd [#allocation48], %s472
      %s474 = sshll.u32 [#allocation49], 4
      %s475 = int_to_ptr.vmem [resolvable:$true] %s474
      %480 = dma.hbm_to_vmem [thread:$0]  %s85, 256, %s475, [#allocation48], 128, 128, 8
    $region173: #{non_conv_unet_forward.1} parent=1 // pred_fallthru
      _
    // Predicated region
    $region174: #{non_conv_unet_forward.1} parent=1 // pred_check
      _
    $region175: #{non_conv_unet_forward.1} parent=1 // pred_check_branch
      %482 = sbr.rel (0) target = $region177
    $region176: #{non_conv_unet_forward.1} parent=1 // pred_region
      %s484 = ssub.s32 256, 256
      %485 = vsyncadd [#allocation51], %s484
      %s486 = sshll.u32 [#allocation50], 4
      %s487 = int_to_ptr.vmem [resolvable:$true] %s486
      %492 = dma.hbm_to_vmem [thread:$0]  %s87, 256, %s487, [#allocation51], 128, 128, 8
    $region177: #{non_conv_unet_forward.1} parent=1 // pred_fallthru
      _
    // Predicated region
    $region178: #{non_conv_unet_forward.1} parent=1 // pred_check
      _
    $region179: #{non_conv_unet_forward.1} parent=1 // pred_check_branch
      %494 = sbr.rel (0) target = $region181
    $region180: #{non_conv_unet_forward.1} parent=1 // pred_region
      %s496 = ssub.s32 16, 16
      %497 = vsyncadd [#allocation51], %s496
      %s499 = sshll.u32 [#allocation52], 4
      %s500 = int_to_ptr.vmem [resolvable:$true] %s499
      %502 = dma.hbm_to_vmem [thread:$0]  %s89, 16, %s500, [#allocation51]
    $region181: #{non_conv_unet_forward.1} parent=1 // pred_fallthru
      _
    // Predicated region
    $region182: #{non_conv_unet_forward.1} parent=1 // pred_check
      _
    $region183: #{non_conv_unet_forward.1} parent=1 // pred_check_branch
      %504 = sbr.rel (0) target = $region185
    $region184: #{non_conv_unet_forward.1} parent=1 // pred_region
      %s506 = ssub.s32 256, 256
      %507 = vsyncadd [#allocation54], %s506
      %s508 = sshll.u32 [#allocation53], 4
      %s509 = int_to_ptr.vmem [resolvable:$true] %s508
      %514 = dma.hbm_to_vmem [thread:$0]  %s91, 256, %s509, [#allocation54], 128, 128, 8
    $region185: #{non_conv_unet_forward.1} parent=1 // pred_fallthru
      _
    // Predicated region
    $region186: #{non_conv_unet_forward.1} parent=1 // pred_check
      _
    $region187: #{non_conv_unet_forward.1} parent=1 // pred_check_branch
      %516 = sbr.rel (0) target = $region189
    $region188: #{non_conv_unet_forward.1} parent=1 // pred_region
      _
    $region189: #{non_conv_unet_forward.1} parent=1 // pred_fallthru
      _
    // Predicated region
    $region190: #{non_conv_unet_forward.1} parent=1 // pred_check
      _
    $region191: #{non_conv_unet_forward.1} parent=1 // pred_check_branch
      %518 = sbr.rel (0) target = $region193
    $region192: #{non_conv_unet_forward.1} parent=1 // pred_region
      %s520 = ssub.s32 16, 16
      %521 = vsyncadd [#allocation54], %s520
      %s523 = sshll.u32 [#allocation55], 4
      %s524 = int_to_ptr.vmem [resolvable:$true] %s523
      %526 = dma.hbm_to_vmem [thread:$0]  %s95, 16, %s524, [#allocation54]
    $region193: #{non_conv_unet_forward.1} parent=1 // pred_fallthru
      _
    // Predicated region
    $region194: #{non_conv_unet_forward.1} parent=1 // pred_check
      _
    $region195: #{non_conv_unet_forward.1} parent=1 // pred_check_branch
      %528 = sbr.rel (0) target = $region197
    $region196: #{non_conv_unet_forward.1} parent=1 // pred_region
      _
    $region197: #{non_conv_unet_forward.1} parent=1 // pred_fallthru
      _
    // Predicated region
    $region198: #{non_conv_unet_forward.1} parent=1 // pred_check
      _
    $region199: #{non_conv_unet_forward.1} parent=1 // pred_check_branch
      %530 = sbr.rel (0) target = $region201
    $region200: #{non_conv_unet_forward.1} parent=1 // pred_region
      _
    $region201: #{non_conv_unet_forward.1} parent=1 // pred_fallthru
      _
    // Predicated region
    $region202: #{non_conv_unet_forward.1} parent=1 // pred_check
      _
    $region203: #{non_conv_unet_forward.1} parent=1 // pred_check_branch
      %532 = sbr.rel (0) target = $region205
    $region204: #{non_conv_unet_forward.1} parent=1 // pred_region
      %s534 = ssub.s32 16, 16
      %535 = vsyncadd [#allocation57], %s534
      %s537 = sshll.u32 [#allocation56], 4
      %s538 = int_to_ptr.vmem [resolvable:$true] %s537
      %540 = dma.hbm_to_vmem [thread:$0]  %s101, 16, %s538, [#allocation57]
    $region205: #{non_conv_unet_forward.1} parent=1 // pred_fallthru
      _
    // Predicated region
    $region206: #{non_conv_unet_forward.1} parent=1 // pred_check
      _
    $region207: #{non_conv_unet_forward.1} parent=1 // pred_check_branch
      %542 = sbr.rel (0) target = $region209
    $region208: #{non_conv_unet_forward.1} parent=1 // pred_region
      _
    $region209: #{non_conv_unet_forward.1} parent=1 // pred_fallthru
      _
    // Predicated region
    $region210: #{non_conv_unet_forward.1} parent=1 // pred_check
      _
    $region211: #{non_conv_unet_forward.1} parent=1 // pred_check_branch
      %544 = sbr.rel (0) target = $region213
    $region212: #{non_conv_unet_forward.1} parent=1 // pred_region
      _
    $region213: #{non_conv_unet_forward.1} parent=1 // pred_fallthru
      _
    // Predicated region
    $region214: #{non_conv_unet_forward.1} parent=1 // pred_check
      _
    $region215: #{non_conv_unet_forward.1} parent=1 // pred_check_branch
      %546 = sbr.rel (0) target = $region217
    $region216: #{non_conv_unet_forward.1} parent=1 // pred_region
      %s548 = ssub.s32 16, 16
      %549 = vsyncadd [#allocation57], %s548
      %s551 = sshll.u32 [#allocation58], 4
      %s552 = int_to_ptr.vmem [resolvable:$true] %s551
      %554 = dma.hbm_to_vmem [thread:$0]  %s107, 16, %s552, [#allocation57]
    $region217: #{non_conv_unet_forward.1} parent=1 // pred_fallthru
      _
    // Predicated region
    $region218: #{non_conv_unet_forward.1} parent=1 // pred_check
      _
    $region219: #{non_conv_unet_forward.1} parent=1 // pred_check_branch
      %556 = sbr.rel (0) target = $region221
    $region220: #{non_conv_unet_forward.1} parent=1 // pred_region
      _
    $region221: #{non_conv_unet_forward.1} parent=1 // pred_fallthru
      _
    // Predicated region
    $region222: #{non_conv_unet_forward.1} parent=1 // pred_check
      _
    $region223: #{non_conv_unet_forward.1} parent=1 // pred_check_branch
      %558 = sbr.rel (0) target = $region225
    $region224: #{non_conv_unet_forward.1} parent=1 // pred_region
      _
    $region225: #{non_conv_unet_forward.1} parent=1 // pred_fallthru
      _
    // Predicated region
    $region226: #{non_conv_unet_forward.1} parent=1 // pred_check
      _
    $region227: #{non_conv_unet_forward.1} parent=1 // pred_check_branch
      %560 = sbr.rel (0) target = $region229
    $region228: #{non_conv_unet_forward.1} parent=1 // pred_region
      %s562 = ssub.s32 16, 16
      %563 = vsyncadd [#allocation60], %s562
      %s565 = sshll.u32 [#allocation59], 4
      %s566 = int_to_ptr.vmem [resolvable:$true] %s565
      %568 = dma.hbm_to_vmem [thread:$0]  %s113, 16, %s566, [#allocation60]
    $region229: #{non_conv_unet_forward.1} parent=1 // pred_fallthru
      _
    // Predicated region
    $region230: #{non_conv_unet_forward.1} parent=1 // pred_check
      _
    $region231: #{non_conv_unet_forward.1} parent=1 // pred_check_branch
      %570 = sbr.rel (0) target = $region233
    $region232: #{non_conv_unet_forward.1} parent=1 // pred_region
      %571 = dma.done [#allocation3], 32
    $region233: #{non_conv_unet_forward.1} parent=1 // pred_fallthru
      _
    // Predicated region
    $region234: #{non_conv_unet_forward.1} parent=1 // pred_check
      _
    $region235: #{non_conv_unet_forward.1} parent=1 // pred_check_branch
      %573 = sbr.rel (0) target = $region237
    $region236: #{non_conv_unet_forward.1} parent=1 // pred_region
      %574 = dma.done [#allocation6], 32
    $region237: #{non_conv_unet_forward.1} parent=1 // pred_fallthru
      _
    // Predicated region
    $region238: #{non_conv_unet_forward.1} parent=1 // pred_check
      _
    $region239: #{non_conv_unet_forward.1} parent=1 // pred_check_branch
      %576 = sbr.rel (0) target = $region241
    $region240: #{non_conv_unet_forward.1} parent=1 // pred_region
      %577 = dma.done [#allocation6], 16
    $region241: #{non_conv_unet_forward.1} parent=1 // pred_fallthru
      _
    // Predicated region
    $region242: #{non_conv_unet_forward.1} parent=1 // pred_check
      _
    $region243: #{non_conv_unet_forward.1} parent=1 // pred_check_branch
      %579 = sbr.rel (0) target = $region245
    $region244: #{non_conv_unet_forward.1} parent=1 // pred_region
      %580 = dma.done [#allocation9], 16
    $region245: #{non_conv_unet_forward.1} parent=1 // pred_fallthru
      _
    // Predicated region
    $region246: #{non_conv_unet_forward.1} parent=1 // pred_check
      _
    $region247: #{non_conv_unet_forward.1} parent=1 // pred_check_branch
      %582 = sbr.rel (0) target = $region249
    $region248: #{non_conv_unet_forward.1} parent=1 // pred_region
      %583 = dma.done [#allocation9], 16
    $region249: #{non_conv_unet_forward.1} parent=1 // pred_fallthru
      _
    // Predicated region
    $region250: #{non_conv_unet_forward.1} parent=1 // pred_check
      _
    $region251: #{non_conv_unet_forward.1} parent=1 // pred_check_branch
      %585 = sbr.rel (0) target = $region253
    $region252: #{non_conv_unet_forward.1} parent=1 // pred_region
      %586 = dma.done [#allocation12], 16
    $region253: #{non_conv_unet_forward.1} parent=1 // pred_fallthru
      _
    // Predicated region
    $region254: #{non_conv_unet_forward.1} parent=1 // pred_check
      _
    $region255: #{non_conv_unet_forward.1} parent=1 // pred_check_branch
      %588 = sbr.rel (0) target = $region257
    $region256: #{non_conv_unet_forward.1} parent=1 // pred_region
      %589 = dma.done [#allocation12], 16
    $region257: #{non_conv_unet_forward.1} parent=1 // pred_fallthru
      _
    // Predicated region
    $region258: #{non_conv_unet_forward.1} parent=1 // pred_check
      _
    $region259: #{non_conv_unet_forward.1} parent=1 // pred_check_branch
      %591 = sbr.rel (0) target = $region261
    $region260: #{non_conv_unet_forward.1} parent=1 // pred_region
      %592 = dma.done [#allocation15], 128
    $region261: #{non_conv_unet_forward.1} parent=1 // pred_fallthru
      _
    // Predicated region
    $region262: #{non_conv_unet_forward.1} parent=1 // pred_check
      _
    $region263: #{non_conv_unet_forward.1} parent=1 // pred_check_branch
      %594 = sbr.rel (0) target = $region265
    $region264: #{non_conv_unet_forward.1} parent=1 // pred_region
      %595 = dma.done [#allocation15], 256
    $region265: #{non_conv_unet_forward.1} parent=1 // pred_fallthru
      _
    // Predicated region
    $region266: #{non_conv_unet_forward.1} parent=1 // pred_check
      _
    $region267: #{non_conv_unet_forward.1} parent=1 // pred_check_branch
      %597 = sbr.rel (0) target = $region269
    $region268: #{non_conv_unet_forward.1} parent=1 // pred_region
      %598 = dma.done [#allocation18], 16
    $region269: #{non_conv_unet_forward.1} parent=1 // pred_fallthru
      _
    // Predicated region
    $region270: #{non_conv_unet_forward.1} parent=1 // pred_check
      _
    $region271: #{non_conv_unet_forward.1} parent=1 // pred_check_branch
      %600 = sbr.rel (0) target = $region273
    $region272: #{non_conv_unet_forward.1} parent=1 // pred_region
      %601 = dma.done [#allocation18], 128
    $region273: #{non_conv_unet_forward.1} parent=1 // pred_fallthru
      _
    // Predicated region
    $region274: #{non_conv_unet_forward.1} parent=1 // pred_check
      _
    $region275: #{non_conv_unet_forward.1} parent=1 // pred_check_branch
      %603 = sbr.rel (0) target = $region277
    $region276: #{non_conv_unet_forward.1} parent=1 // pred_region
      %604 = dma.done [#allocation21], 16
    $region277: #{non_conv_unet_forward.1} parent=1 // pred_fallthru
      _
    // Predicated region
    $region278: #{non_conv_unet_forward.1} parent=1 // pred_check
      _
    $region279: #{non_conv_unet_forward.1} parent=1 // pred_check_branch
      %606 = sbr.rel (0) target = $region281
    $region280: #{non_conv_unet_forward.1} parent=1 // pred_region
      %607 = dma.done [#allocation21], 64
    $region281: #{non_conv_unet_forward.1} parent=1 // pred_fallthru
      _
    // Predicated region
    $region282: #{non_conv_unet_forward.1} parent=1 // pred_check
      _
    $region283: #{non_conv_unet_forward.1} parent=1 // pred_check_branch
      %609 = sbr.rel (0) target = $region285
    $region284: #{non_conv_unet_forward.1} parent=1 // pred_region
      %610 = dma.done [#allocation24], 128
    $region285: #{non_conv_unet_forward.1} parent=1 // pred_fallthru
      _
    // Predicated region
    $region286: #{non_conv_unet_forward.1} parent=1 // pred_check
      _
    $region287: #{non_conv_unet_forward.1} parent=1 // pred_check_branch
      %612 = sbr.rel (0) target = $region289
    $region288: #{non_conv_unet_forward.1} parent=1 // pred_region
      %613 = dma.done [#allocation24], 16
    $region289: #{non_conv_unet_forward.1} parent=1 // pred_fallthru
      _
    // Predicated region
    $region290: #{non_conv_unet_forward.1} parent=1 // pred_check
      _
    $region291: #{non_conv_unet_forward.1} parent=1 // pred_check_branch
      %615 = sbr.rel (0) target = $region293
    $region292: #{non_conv_unet_forward.1} parent=1 // pred_region
      %616 = dma.done [#allocation27], 64
    $region293: #{non_conv_unet_forward.1} parent=1 // pred_fallthru
      _
    // Predicated region
    $region294: #{non_conv_unet_forward.1} parent=1 // pred_check
      _
    $region295: #{non_conv_unet_forward.1} parent=1 // pred_check_branch
      %618 = sbr.rel (0) target = $region297
    $region296: #{non_conv_unet_forward.1} parent=1 // pred_region
      %619 = dma.done [#allocation27], 64
    $region297: #{non_conv_unet_forward.1} parent=1 // pred_fallthru
      _
    // Predicated region
    $region298: #{non_conv_unet_forward.1} parent=1 // pred_check
      _
    $region299: #{non_conv_unet_forward.1} parent=1 // pred_check_branch
      %621 = sbr.rel (0) target = $region301
    $region300: #{non_conv_unet_forward.1} parent=1 // pred_region
      %622 = dma.done [#allocation30], 16
    $region301: #{non_conv_unet_forward.1} parent=1 // pred_fallthru
      _
    // Predicated region
    $region302: #{non_conv_unet_forward.1} parent=1 // pred_check
      _
    $region303: #{non_conv_unet_forward.1} parent=1 // pred_check_branch
      %624 = sbr.rel (0) target = $region305
    $region304: #{non_conv_unet_forward.1} parent=1 // pred_region
      %625 = dma.done [#allocation30], 64
    $region305: #{non_conv_unet_forward.1} parent=1 // pred_fallthru
      _
    // Predicated region
    $region306: #{non_conv_unet_forward.1} parent=1 // pred_check
      _
    $region307: #{non_conv_unet_forward.1} parent=1 // pred_check_branch
      %627 = sbr.rel (0) target = $region309
    $region308: #{non_conv_unet_forward.1} parent=1 // pred_region
      %628 = dma.done [#allocation33], 64
    $region309: #{non_conv_unet_forward.1} parent=1 // pred_fallthru
      _
    // Predicated region
    $region310: #{non_conv_unet_forward.1} parent=1 // pred_check
      _
    $region311: #{non_conv_unet_forward.1} parent=1 // pred_check_branch
      %630 = sbr.rel (0) target = $region313
    $region312: #{non_conv_unet_forward.1} parent=1 // pred_region
      %631 = dma.done [#allocation33], 16
    $region313: #{non_conv_unet_forward.1} parent=1 // pred_fallthru
      _
    // Predicated region
    $region314: #{non_conv_unet_forward.1} parent=1 // pred_check
      _
    $region315: #{non_conv_unet_forward.1} parent=1 // pred_check_branch
      %633 = sbr.rel (0) target = $region317
    $region316: #{non_conv_unet_forward.1} parent=1 // pred_region
      %634 = dma.done [#allocation36], 64
    $region317: #{non_conv_unet_forward.1} parent=1 // pred_fallthru
      _
    // Predicated region
    $region318: #{non_conv_unet_forward.1} parent=1 // pred_check
      _
    $region319: #{non_conv_unet_forward.1} parent=1 // pred_check_branch
      %636 = sbr.rel (0) target = $region321
    $region320: #{non_conv_unet_forward.1} parent=1 // pred_region
      %637 = dma.done [#allocation36], 128
    $region321: #{non_conv_unet_forward.1} parent=1 // pred_fallthru
      _
    // Predicated region
    $region322: #{non_conv_unet_forward.1} parent=1 // pred_check
      _
    $region323: #{non_conv_unet_forward.1} parent=1 // pred_check_branch
      %639 = sbr.rel (0) target = $region325
    $region324: #{non_conv_unet_forward.1} parent=1 // pred_region
      %640 = dma.done [#allocation39], 16
    $region325: #{non_conv_unet_forward.1} parent=1 // pred_fallthru
      _
    // Predicated region
    $region326: #{non_conv_unet_forward.1} parent=1 // pred_check
      _
    $region327: #{non_conv_unet_forward.1} parent=1 // pred_check_branch
      %642 = sbr.rel (0) target = $region329
    $region328: #{non_conv_unet_forward.1} parent=1 // pred_region
      %643 = dma.done [#allocation39], 128
    $region329: #{non_conv_unet_forward.1} parent=1 // pred_fallthru
      _
    // Predicated region
    $region330: #{non_conv_unet_forward.1} parent=1 // pred_check
      _
    $region331: #{non_conv_unet_forward.1} parent=1 // pred_check_branch
      %645 = sbr.rel (0) target = $region333
    $region332: #{non_conv_unet_forward.1} parent=1 // pred_region
      %646 = dma.done [#allocation42], 128
    $region333: #{non_conv_unet_forward.1} parent=1 // pred_fallthru
      _
    // Predicated region
    $region334: #{non_conv_unet_forward.1} parent=1 // pred_check
      _
    $region335: #{non_conv_unet_forward.1} parent=1 // pred_check_branch
      %648 = sbr.rel (0) target = $region337
    $region336: #{non_conv_unet_forward.1} parent=1 // pred_region
      %649 = dma.done [#allocation42], 16
    $region337: #{non_conv_unet_forward.1} parent=1 // pred_fallthru
      _
    // Predicated region
    $region338: #{non_conv_unet_forward.1} parent=1 // pred_check
      _
    $region339: #{non_conv_unet_forward.1} parent=1 // pred_check_branch
      %651 = sbr.rel (0) target = $region341
    $region340: #{non_conv_unet_forward.1} parent=1 // pred_region
      %652 = dma.done [#allocation45], 128
    $region341: #{non_conv_unet_forward.1} parent=1 // pred_fallthru
      _
    // Predicated region
    $region342: #{non_conv_unet_forward.1} parent=1 // pred_check
      _
    $region343: #{non_conv_unet_forward.1} parent=1 // pred_check_branch
      %654 = sbr.rel (0) target = $region345
    $region344: #{non_conv_unet_forward.1} parent=1 // pred_region
      %655 = dma.done [#allocation45], 256
    $region345: #{non_conv_unet_forward.1} parent=1 // pred_fallthru
      _
    // Predicated region
    $region346: #{non_conv_unet_forward.1} parent=1 // pred_check
      _
    $region347: #{non_conv_unet_forward.1} parent=1 // pred_check_branch
      %657 = sbr.rel (0) target = $region349
    $region348: #{non_conv_unet_forward.1} parent=1 // pred_region
      %658 = dma.done [#allocation48], 16
    $region349: #{non_conv_unet_forward.1} parent=1 // pred_fallthru
      _
    // Predicated region
    $region350: #{non_conv_unet_forward.1} parent=1 // pred_check
      _
    $region351: #{non_conv_unet_forward.1} parent=1 // pred_check_branch
      %660 = sbr.rel (0) target = $region353
    $region352: #{non_conv_unet_forward.1} parent=1 // pred_region
      %661 = dma.done [#allocation48], 256
    $region353: #{non_conv_unet_forward.1} parent=1 // pred_fallthru
      _
    // Predicated region
    $region354: #{non_conv_unet_forward.1} parent=1 // pred_check
      _
    $region355: #{non_conv_unet_forward.1} parent=1 // pred_check_branch
      %663 = sbr.rel (0) target = $region357
    $region356: #{non_conv_unet_forward.1} parent=1 // pred_region
      %664 = dma.done [#allocation51], 256
    $region357: #{non_conv_unet_forward.1} parent=1 // pred_fallthru
      _
    // Predicated region
    $region358: #{non_conv_unet_forward.1} parent=1 // pred_check
      _
    $region359: #{non_conv_unet_forward.1} parent=1 // pred_check_branch
      %666 = sbr.rel (0) target = $region361
    $region360: #{non_conv_unet_forward.1} parent=1 // pred_region
      %667 = dma.done [#allocation51], 16
    $region361: #{non_conv_unet_forward.1} parent=1 // pred_fallthru
      _
    // Predicated region
    $region362: #{non_conv_unet_forward.1} parent=1 // pred_check
      _
    $region363: #{non_conv_unet_forward.1} parent=1 // pred_check_branch
      %669 = sbr.rel (0) target = $region365
    $region364: #{non_conv_unet_forward.1} parent=1 // pred_region
      %670 = dma.done [#allocation54], 256
    $region365: #{non_conv_unet_forward.1} parent=1 // pred_fallthru
      _
    // Predicated region
    $region366: #{non_conv_unet_forward.1} parent=1 // pred_check
      _
    $region367: #{non_conv_unet_forward.1} parent=1 // pred_check_branch
      %672 = sbr.rel (0) target = $region369
    $region368: #{non_conv_unet_forward.1} parent=1 // pred_region
      %673 = dma.done [#allocation54], 16
    $region369: #{non_conv_unet_forward.1} parent=1 // pred_fallthru
      _
    // Predicated region
    $region370: #{non_conv_unet_forward.1} parent=1 // pred_check
      _
    $region371: #{non_conv_unet_forward.1} parent=1 // pred_check_branch
      %675 = sbr.rel (0) target = $region373
    $region372: #{non_conv_unet_forward.1} parent=1 // pred_region
      %676 = dma.done [#allocation57], 16
    $region373: #{non_conv_unet_forward.1} parent=1 // pred_fallthru
      _
    // Predicated region
    $region374: #{non_conv_unet_forward.1} parent=1 // pred_check
      _
    $region375: #{non_conv_unet_forward.1} parent=1 // pred_check_branch
      %678 = sbr.rel (0) target = $region377
    $region376: #{non_conv_unet_forward.1} parent=1 // pred_region
      %679 = dma.done [#allocation57], 16
    $region377: #{non_conv_unet_forward.1} parent=1 // pred_fallthru
      _
    // Predicated region
    $region378: #{non_conv_unet_forward.1} parent=1 // pred_check
      _
    $region379: #{non_conv_unet_forward.1} parent=1 // pred_check_branch
      %681 = sbr.rel (0) target = $region381
    $region380: #{non_conv_unet_forward.1} parent=1 // pred_region
      %682 = dma.done [#allocation60], 16
    $region381: #{non_conv_unet_forward.1} parent=1 // pred_fallthru
      _
    %v683 = vld [vmem:[#allocation2] sm:$0x3]
    %v684 = vld [vmem:[#allocation5] sm:$0x3]
    %v685 = vld [vmem:[%s3] sm:$0x3]
    %v686 = vld [vmem:[%s7] sm:$0x1]
    %688 = vset.pattern.permute.xlu0 0
    %689 = vperm.xlu0 %688, %v685
    %v690 = vpop.permute.xlu0 %689
    %v693 = vlaneseq
    %v694 = vshrl.u32 %v693, 7
    %v695 = vsub.s32 0, %v694
    %v696 = vrot.slane %v686, %v695
    %v698 = vmul.f32 %v690, %v696
    %v699 = vand.u32 2147483647, %v698
    %vm700 = vcmp.le.f32.partialorder %v699, 0.7853982
    %vm701 = vcmp.lt.s32.totalorder %v698, 0
    %v702 = vand.u32 %v698, 2139095040
    %v703 = vshrl.u32 %v702, 23
    %v704 = vsub.s32 %v703, 127
    %v705 = vand.u32 2147483647, %v698
    %v706 = vand.u32 %v705, 8388607
    %v707 = vor.u32 %v706, 8388608
    %v708 = vsub.s32 0, %v707
    %v709 = vadd.s32 %v704, 1
    %vm710 = vcmp.gt.s32.totalorder %v709, 0
    %v711 = vsel %vm710, %v709, 0
    %v712 = vshrl.u32 %v711, 5
    %v713 = vand.u32 %v711, 31
    %v714 = vsub.s32 32, %v713
    %v715 = vshrl.u32 683565275, %v714
    %v716 = vshll.u32 683565275, %v713
    %v717 = vshrl.u32 2475754826, %v714
    %v718 = vor.u32 %v716, %v717
    %v719 = vshll.u32 2475754826, %v713
    %v720 = vshrl.u32 2131351028, %v714
    %v721 = vor.u32 %v719, %v720
    %v722 = vshll.u32 2131351028, %v713
    %v723 = vshrl.u32 2102212464, %v714
    %v724 = vor.u32 %v722, %v723
    %v725 = vshll.u32 2102212464, %v713
    %v726 = vshrl.u32 920167782, %v714
    %v727 = vor.u32 %v725, %v726
    %v728 = vshll.u32 920167782, %v713
    %v729 = vshrl.u32 1326507024, %v714
    %v730 = vor.u32 %v728, %v729
    %vm731 = vcmp.lt.s32.totalorder %v712, 1
    %vm732 = vcmp.lt.s32.totalorder %v712, 2
    %vm733 = vcmp.lt.s32.totalorder %v712, 3
    %vm734 = vcmp.lt.s32.totalorder %v712, 4
    %v735 = vsel %vm731, %v715, %v718
    %v736 = vsel %vm734, %v724, 2102212464
    %v737 = vsel %vm733, %v721, %v736
    %v738 = vsel %vm732, %v735, %v737
    %v739 = vsel %vm731, %v718, %v721
    %v740 = vsel %vm734, %v727, 920167782
    %v741 = vsel %vm733, %v724, %v740
    %v742 = vsel %vm732, %v739, %v741
    %v743 = vsel %vm731, %v721, %v724
    %v744 = vsel %vm734, %v730, 1326507024
    %v745 = vsel %vm733, %v727, %v744
    %v746 = vsel %vm732, %v743, %v745
    %v747 = vshll.u32 %v707, 8
    %v748 = vmul.u32.u64.compose %v747, %v746
    %v749 = vextract.low.u32 %v748
    %v750 = vextract.high.u32 %v748
    %v751 = vmul.u32.u64.compose %v747, %v742
    %v752 = vextract.low.u32 %v751
    %v753 = vextract.high.u32 %v751
    %v754 = vmul.u32 %v747, %v738
    %v755 = vadd.s32 %v750, %v752
    %vm756 = vc.u32 %v750, %v752
    %v757 = vadd.s32 %v753, 1
    %v758 = vsel %vm756, %v757, %v753
    %v759 = vadd.s32 %v754, %v758
    %v760 = vadd.s32 %v759, 536870912
    %v761 = vshrl.u32 %v760, 30
    %v762 = vshll.u32 %v761, 30
    %v763 = vsub.s32 %v759, %v762
    %vm764 = vcmp.lt.s32.totalorder %v763, 0
    %v765 = vsub.s32 0, %v763
    %v766 = vsel %vm764, %v765, %v763
    %v767 = vclz %v766
    %v768 = vsub.s32 %v767, 2
    %vm769 = vcmp.gt.s32.totalorder 0, %v768
    %v770 = vsel %vm769, 0, %v768
    %v771 = vsub.s32 32, %v770
    %v772 = vshll.u32 %v763, %v770
    %v773 = vshrl.u32 %v755, %v771
    %v774 = vor.u32 %v772, %v773
    %v775 = vsub.s32 4294967266, %v770
    %v776 = vadd.s32 %v775, 127
    %v777 = vshll.u32 %v776, 23
    %v778 = vor.u32 4788187, %v777
    %v779 = vand.u32 2147483647, %v778
    %v781 = vcvt.s32.f32 %v774
    %v782 = vmul.f32 %v781, %v779
    %v783 = vxor.u32 %v782, 2147483648
    %v784 = vsel %vm701, %v783, %v782
    %v785 = vsub.s32 4, %v761
    %v786 = vsel %vm701, %v785, %v761
    %v787 = vsel %vm700, %v698, %v784
    %v788 = vsel %vm700, 0, %v786
    %v789 = vcosq.f32.pop %v787
    %v790 = vsinq.f32.pop %v787
    %vm791 = vweird.f32 %v698
    %v792 = vadd.s32 %v788, 3
    %v793 = vand.u32 %v792, 3
    %vm794 = vcmp.lt.s32.totalorder %v793, 2
    %vm795 = vcmp.eq.s32.totalorder %v793, 0
    %v796 = vxor.u32 %v790, 2147483648
    %v797 = vsel %vm795, %v789, %v796
    %vm798 = vcmp.eq.s32.totalorder %v793, 2
    %v799 = vxor.u32 %v789, 2147483648
    %v800 = vsel %vm798, %v799, %v790
    %v801 = vsel %vm794, %v797, %v800
    %v802 = vsel %vm791, nan, %v801
    %v803 = vand.u32 2147483647, %v698
    %vm804 = vcmp.le.f32.partialorder %v803, 0.7853982
    %vm805 = vcmp.lt.s32.totalorder %v698, 0
    %v806 = vand.u32 %v698, 2139095040
    %v807 = vshrl.u32 %v806, 23
    %v808 = vsub.s32 %v807, 127
    %v809 = vand.u32 2147483647, %v698
    %v810 = vand.u32 %v809, 8388607
    %v811 = vor.u32 %v810, 8388608
    %v812 = vsub.s32 0, %v811
    %v813 = vadd.s32 %v808, 1
    %vm814 = vcmp.gt.s32.totalorder %v813, 0
    %v815 = vsel %vm814, %v813, 0
    %v816 = vshrl.u32 %v815, 5
    %v817 = vand.u32 %v815, 31
    %v818 = vsub.s32 32, %v817
    %v819 = vshrl.u32 683565275, %v818
    %v820 = vshll.u32 683565275, %v817
    %v821 = vshrl.u32 2475754826, %v818
    %v822 = vor.u32 %v820, %v821
    %v823 = vshll.u32 2475754826, %v817
    %v824 = vshrl.u32 2131351028, %v818
    %v825 = vor.u32 %v823, %v824
    %v826 = vshll.u32 2131351028, %v817
    %v827 = vshrl.u32 2102212464, %v818
    %v828 = vor.u32 %v826, %v827
    %v829 = vshll.u32 2102212464, %v817
    %v830 = vshrl.u32 920167782, %v818
    %v831 = vor.u32 %v829, %v830
    %v832 = vshll.u32 920167782, %v817
    %v833 = vshrl.u32 1326507024, %v818
    %v834 = vor.u32 %v832, %v833
    %vm835 = vcmp.lt.s32.totalorder %v816, 1
    %vm836 = vcmp.lt.s32.totalorder %v816, 2
    %vm837 = vcmp.lt.s32.totalorder %v816, 3
    %vm838 = vcmp.lt.s32.totalorder %v816, 4
    %v839 = vsel %vm835, %v819, %v822
    %v840 = vsel %vm838, %v828, 2102212464
    %v841 = vsel %vm837, %v825, %v840
    %v842 = vsel %vm836, %v839, %v841
    %v843 = vsel %vm835, %v822, %v825
    %v844 = vsel %vm838, %v831, 920167782
    %v845 = vsel %vm837, %v828, %v844
    %v846 = vsel %vm836, %v843, %v845
    %v847 = vsel %vm835, %v825, %v828
    %v848 = vsel %vm838, %v834, 1326507024
    %v849 = vsel %vm837, %v831, %v848
    %v850 = vsel %vm836, %v847, %v849
    %v851 = vshll.u32 %v811, 8
    %v852 = vmul.u32.u64.compose %v851, %v850
    %v853 = vextract.low.u32 %v852
    %v854 = vextract.high.u32 %v852
    %v855 = vmul.u32.u64.compose %v851, %v846
    %v856 = vextract.low.u32 %v855
    %v857 = vextract.high.u32 %v855
    %v858 = vmul.u32 %v851, %v842
    %v859 = vadd.s32 %v854, %v856
    %vm860 = vc.u32 %v854, %v856
    %v861 = vadd.s32 %v857, 1
    %v862 = vsel %vm860, %v861, %v857
    %v863 = vadd.s32 %v858, %v862
    %v864 = vadd.s32 %v863, 536870912
    %v865 = vshrl.u32 %v864, 30
    %v866 = vshll.u32 %v865, 30
    %v867 = vsub.s32 %v863, %v866
    %vm868 = vcmp.lt.s32.totalorder %v867, 0
    %v869 = vsub.s32 0, %v867
    %v870 = vsel %vm868, %v869, %v867
    %v871 = vclz %v870
    %v872 = vsub.s32 %v871, 2
    %vm873 = vcmp.gt.s32.totalorder 0, %v872
    %v874 = vsel %vm873, 0, %v872
    %v875 = vsub.s32 32, %v874
    %v876 = vshll.u32 %v867, %v874
    %v877 = vshrl.u32 %v859, %v875
    %v878 = vor.u32 %v876, %v877
    %v879 = vsub.s32 4294967266, %v874
    %v880 = vadd.s32 %v879, 127
    %v881 = vshll.u32 %v880, 23
    %v882 = vor.u32 4788187, %v881
    %v883 = vand.u32 2147483647, %v882
    %v885 = vcvt.s32.f32 %v878
    %v886 = vmul.f32 %v885, %v883
    %v887 = vxor.u32 %v886, 2147483648
    %v888 = vsel %vm805, %v887, %v886
    %v889 = vsub.s32 4, %v865
    %v890 = vsel %vm805, %v889, %v865
    %v891 = vsel %vm804, %v698, %v888
    %v892 = vsel %vm804, 0, %v890
    %v893 = vcosq.f32.pop %v891
    %v894 = vsinq.f32.pop %v891
    %vm895 = vweird.f32 %v698
    %v896 = vand.u32 %v892, 3
    %vm897 = vcmp.lt.s32.totalorder %v896, 2
    %vm898 = vcmp.eq.s32.totalorder %v896, 0
    %v899 = vxor.u32 %v894, 2147483648
    %v900 = vsel %vm898, %v893, %v899
    %vm901 = vcmp.eq.s32.totalorder %v896, 2
    %v902 = vxor.u32 %v893, 2147483648
    %v903 = vsel %vm901, %v902, %v894
    %v904 = vsel %vm897, %v900, %v903
    %v905 = vsel %vm895, nan, %v904
    %907 = vrot.lane.b32.xlu0 %v905, 4
    %v908 = vpop.permute.xlu0 %907
    %vm910 = vcmask 31744
    %v911 = vsel %vm910, %v802, %v908
    %913 = vrot.lane.b32.xlu0 %v684, 8
    %v914 = vpop.permute.xlu0 %913
    %vm916 = vcmask 64512
    %v917 = vsel %vm916, %v911, %v914
    %v918 = vld [vmem:[%s11] sm:$0xff]
    %v919 = vld [vmem:[%s11 + $0x8] sm:$0xff]
    %v920 = vld [vmem:[%s11 + $0x10] sm:$0xff]
    %v921 = vld [vmem:[%s11 + $0x18] sm:$0xff]
    %v922 = vld [vmem:[%s11 + $0x20] sm:$0xff]
    %v923 = vld [vmem:[%s11 + $0x28] sm:$0xf]
    %v924 = vld [vmem:[%s11 + $0x30] sm:$0xf]
    %v925 = vld [vmem:[%s11 + $0x38] sm:$0xf]
    %v926 = vld [vmem:[%s11 + $0x40] sm:$0xf]
    %v927 = vld [vmem:[%s11 + $0x48] sm:$0xf]
    %v928 = vld [vmem:[%s13] sm:$0x1f]
    %v930 = vlaneseq
    %v931 = vshrl.u32 %v930, 7
    %v932 = vsub.s32 0, %v931
    %v933 = vrot.slane %v928, %v932
    %v934 = vlaneseq
    %v935 = vshrl.u32 %v934, 7
    %v936 = vsub.s32 1, %v935
    %v937 = vrot.slane %v928, %v936
    %v938 = vlaneseq
    %v939 = vshrl.u32 %v938, 7
    %v940 = vsub.s32 2, %v939
    %v941 = vrot.slane %v928, %v940
    %v942 = vlaneseq
    %v943 = vshrl.u32 %v942, 7
    %v944 = vsub.s32 3, %v943
    %v945 = vrot.slane %v928, %v944
    %v946 = vlaneseq
    %v947 = vshrl.u32 %v946, 7
    %v948 = vsub.s32 4, %v947
    %v949 = vrot.slane %v928, %v948
    %vm955 = vcmask 97280
    %v957 = vsel %vm955, %v917, 0
    %vm959 = vcmask 1043456
    %v961 = vsel %vm959, %v923, 0
    %v964 = vsel %vm959, %v924, 0
    %v967 = vsel %vm959, %v925, 0
    %v970 = vsel %vm959, %v926, 0
    %v973 = vsel %vm959, %v927, 0
    %975 = vmatprep.subr.mxu0 0.0
    %976 = vmatpush1.msra.mxu0 0.0
    %977 = vmatprep.subr.mxu0 0.0
    %978 = vmatpush1.msra.mxu0 0.0
    %979 = vmatprep.subr.mxu0 0.0
    %980 = vmatpush1.msra.mxu0 0.0
    %981 = vmatprep.subr.mxu0 0.0
    %982 = vmatpush1.msra.mxu0 0.0
    %983 = vmatprep.subr.mxu0 0.0
    %984 = vmatpush1.msra.mxu0 0.0
    %985 = vmatprep.subr.mxu0 0.0
    %986 = vmatpush1.msra.mxu0 0.0
    %987 = vmatprep.subr.mxu0 0.0
    %988 = vmatpush1.msra.mxu0 0.0
    %989 = vmatprep.subr.mxu0 0.0
    %990 = vmatpush1.msra.mxu0 0.0
    %991 = vmatprep.subr.mxu0 0.0
    %992 = vmatpush1.msra.mxu0 0.0
    %993 = vmatprep.subr.mxu0 0.0
    %994 = vmatpush1.msra.mxu0 0.0
    %995 = vmatprep.subr.mxu0 0.0
    %996 = vmatpush1.msra.mxu0 0.0
    %997 = vmatprep.subr.mxu0 0.0
    %998 = vmatpush1.msra.mxu0 0.0
    %999 = vmatprep.subr.mxu0 0.0
    %1000 = vmatpush1.msra.mxu0 0.0
    %1001 = vmatprep.subr.mxu0 0.0
    %1002 = vmatpush1.msra.mxu0 0.0
    %1003 = vmatprep.subr.mxu0 %v964
    %1004 = vmatpush1.msra.mxu0 %v961
    %1005 = vmatprep.subr.mxu0 %v919
    %1006 = vmatpush1.msra.mxu0 %v918
    %1007 = vmatprep.subr.mxu0 0.0
    %1008 = vmatpush2.msra.mxu0 0.0
    %1009 = vmatprep.subr.mxu0 0.0
    %1010 = vmatpush2.msra.mxu0 0.0
    %1011 = vmatprep.subr.mxu0 0.0
    %1012 = vmatpush2.msra.mxu0 0.0
    %1013 = vmatprep.subr.mxu0 0.0
    %1014 = vmatpush2.msra.mxu0 0.0
    %1015 = vmatprep.subr.mxu0 0.0
    %1016 = vmatpush2.msra.mxu0 0.0
    %1017 = vmatprep.subr.mxu0 0.0
    %1018 = vmatpush2.msra.mxu0 0.0
    %1019 = vmatprep.subr.mxu0 0.0
    %1020 = vmatpush2.msra.mxu0 0.0
    %1021 = vmatprep.subr.mxu0 0.0
    %1022 = vmatpush2.msra.mxu0 0.0
    %1023 = vmatprep.subr.mxu0 0.0
    %1024 = vmatpush2.msra.mxu0 0.0
    %1025 = vmatprep.subr.mxu0 0.0
    %1026 = vmatpush2.msra.mxu0 0.0
    %1027 = vmatprep.subr.mxu0 0.0
    %1028 = vmatpush2.msra.mxu0 0.0
    %1029 = vmatprep.subr.mxu0 0.0
    %1030 = vmatpush2.msra.mxu0 0.0
    %1031 = vmatprep.subr.mxu0 0.0
    %1032 = vmatpush2.msra.mxu0 0.0
    %1033 = vmatprep.subr.mxu0 0.0
    %1034 = vmatpush2.msra.mxu0 0.0
    %1035 = vmatprep.subr.mxu0 0.0
    %1036 = vmatpush2.msra.mxu0 0.0
    %1037 = vmatprep.subr.mxu0 0.0
    %1038 = vmatpush2.msra.mxu0 0.0
    %1039 = vmatprep.mubr.f32.mxu0 0.0
    %1040 = vmatmul.mubr.f32.gmra.mxu0 %v957
    %v1041 = vpop.f32.mrf.mxu0
    %v1042 = vadd.f32 %v933, %v1041
    %v1043 = vpop.f32.mrf.mxu0
    %v1044 = vadd.f32 %v937, %v1043
    %1045 = vdwg.mxu0
    %1046 = vmatprep.subr.mxu0 0.0
    %1047 = vmatpush1.msra.mxu0 0.0
    %1048 = vmatprep.subr.mxu0 0.0
    %1049 = vmatpush1.msra.mxu0 0.0
    %1050 = vmatprep.subr.mxu0 0.0
    %1051 = vmatpush1.msra.mxu0 0.0
    %1052 = vmatprep.subr.mxu0 0.0
    %1053 = vmatpush1.msra.mxu0 0.0
    %1054 = vmatprep.subr.mxu0 0.0
    %1055 = vmatpush1.msra.mxu0 0.0
    %1056 = vmatprep.subr.mxu0 0.0
    %1057 = vmatpush1.msra.mxu0 0.0
    %1058 = vmatprep.subr.mxu0 0.0
    %1059 = vmatpush1.msra.mxu0 0.0
    %1060 = vmatprep.subr.mxu0 0.0
    %1061 = vmatpush1.msra.mxu0 0.0
    %1062 = vmatprep.subr.mxu0 0.0
    %1063 = vmatpush1.msra.mxu0 0.0
    %1064 = vmatprep.subr.mxu0 0.0
    %1065 = vmatpush1.msra.mxu0 0.0
    %1066 = vmatprep.subr.mxu0 0.0
    %1067 = vmatpush1.msra.mxu0 0.0
    %1068 = vmatprep.subr.mxu0 0.0
    %1069 = vmatpush1.msra.mxu0 0.0
    %1070 = vmatprep.subr.mxu0 0.0
    %1071 = vmatpush1.msra.mxu0 0.0
    %1072 = vmatprep.subr.mxu0 0.0
    %1073 = vmatpush1.msra.mxu0 0.0
    %1074 = vmatprep.subr.mxu0 %v970
    %1075 = vmatpush1.msra.mxu0 %v967
    %1076 = vmatprep.subr.mxu0 %v921
    %1077 = vmatpush1.msra.mxu0 %v920
    %1078 = vmatprep.subr.mxu0 0.0
    %1079 = vmatpush2.msra.mxu0 0.0
    %1080 = vmatprep.subr.mxu0 0.0
    %1081 = vmatpush2.msra.mxu0 0.0
    %1082 = vmatprep.subr.mxu0 0.0
    %1083 = vmatpush2.msra.mxu0 0.0
    %1084 = vmatprep.subr.mxu0 0.0
    %1085 = vmatpush2.msra.mxu0 0.0
    %1086 = vmatprep.subr.mxu0 0.0
    %1087 = vmatpush2.msra.mxu0 0.0
    %1088 = vmatprep.subr.mxu0 0.0
    %1089 = vmatpush2.msra.mxu0 0.0
    %1090 = vmatprep.subr.mxu0 0.0
    %1091 = vmatpush2.msra.mxu0 0.0
    %1092 = vmatprep.subr.mxu0 0.0
    %1093 = vmatpush2.msra.mxu0 0.0
    %1094 = vmatprep.subr.mxu0 0.0
    %1095 = vmatpush2.msra.mxu0 0.0
    %1096 = vmatprep.subr.mxu0 0.0
    %1097 = vmatpush2.msra.mxu0 0.0
    %1098 = vmatprep.subr.mxu0 0.0
    %1099 = vmatpush2.msra.mxu0 0.0
    %1100 = vmatprep.subr.mxu0 0.0
    %1101 = vmatpush2.msra.mxu0 0.0
    %1102 = vmatprep.subr.mxu0 0.0
    %1103 = vmatpush2.msra.mxu0 0.0
    %1104 = vmatprep.subr.mxu0 0.0
    %1105 = vmatpush2.msra.mxu0 0.0
    %1106 = vmatprep.subr.mxu0 0.0
    %1107 = vmatpush2.msra.mxu0 0.0
    %1108 = vmatprep.subr.mxu0 0.0
    %1109 = vmatpush2.msra.mxu0 0.0
    %1110 = vmatprep.mubr.f32.mxu0 0.0
    %1111 = vmatmul.mubr.f32.gmra.mxu0 %v957
    %v1112 = vpop.f32.mrf.mxu0
    %v1113 = vadd.f32 %v941, %v1112
    %v1114 = vpop.f32.mrf.mxu0
    %v1115 = vadd.f32 %v945, %v1114
    %1116 = vdwg.mxu0
    %1117 = vmatprep.subr.mxu0 0.0
    %1118 = vmatpush1.msra.mxu0 0.0
    %1119 = vmatprep.subr.mxu0 0.0
    %1120 = vmatpush1.msra.mxu0 0.0
    %1121 = vmatprep.subr.mxu0 0.0
    %1122 = vmatpush1.msra.mxu0 0.0
    %1123 = vmatprep.subr.mxu0 0.0
    %1124 = vmatpush1.msra.mxu0 0.0
    %1125 = vmatprep.subr.mxu0 0.0
    %1126 = vmatpush1.msra.mxu0 0.0
    %1127 = vmatprep.subr.mxu0 0.0
    %1128 = vmatpush1.msra.mxu0 0.0
    %1129 = vmatprep.subr.mxu0 0.0
    %1130 = vmatpush1.msra.mxu0 0.0
    %1131 = vmatprep.subr.mxu0 0.0
    %1132 = vmatpush1.msra.mxu0 0.0
    %1133 = vmatprep.subr.mxu0 0.0
    %1134 = vmatpush1.msra.mxu0 0.0
    %1135 = vmatprep.subr.mxu0 0.0
    %1136 = vmatpush1.msra.mxu0 0.0
    %1137 = vmatprep.subr.mxu0 0.0
    %1138 = vmatpush1.msra.mxu0 0.0
    %1139 = vmatprep.subr.mxu0 0.0
    %1140 = vmatpush1.msra.mxu0 0.0
    %1141 = vmatprep.subr.mxu0 0.0
    %1142 = vmatpush1.msra.mxu0 0.0
    %1143 = vmatprep.subr.mxu0 0.0
    %1144 = vmatpush1.msra.mxu0 0.0
    %1145 = vmatprep.subr.mxu0 0.0
    %1146 = vmatpush1.msra.mxu0 %v973
    %1147 = vmatprep.subr.mxu0 0.0
    %1148 = vmatpush1.msra.mxu0 %v922
    %1149 = vmatprep.subr.mxu0 0.0
    %1150 = vmatpush2.msra.mxu0 0.0
    %1151 = vmatprep.subr.mxu0 0.0
    %1152 = vmatpush2.msra.mxu0 0.0
    %1153 = vmatprep.subr.mxu0 0.0
    %1154 = vmatpush2.msra.mxu0 0.0
    %1155 = vmatprep.subr.mxu0 0.0
    %1156 = vmatpush2.msra.mxu0 0.0
    %1157 = vmatprep.subr.mxu0 0.0
    %1158 = vmatpush2.msra.mxu0 0.0
    %1159 = vmatprep.subr.mxu0 0.0
    %1160 = vmatpush2.msra.mxu0 0.0
    %1161 = vmatprep.subr.mxu0 0.0
    %1162 = vmatpush2.msra.mxu0 0.0
    %1163 = vmatprep.subr.mxu0 0.0
    %1164 = vmatpush2.msra.mxu0 0.0
    %1165 = vmatprep.subr.mxu0 0.0
    %1166 = vmatpush2.msra.mxu0 0.0
    %1167 = vmatprep.subr.mxu0 0.0
    %1168 = vmatpush2.msra.mxu0 0.0
    %1169 = vmatprep.subr.mxu0 0.0
    %1170 = vmatpush2.msra.mxu0 0.0
    %1171 = vmatprep.subr.mxu0 0.0
    %1172 = vmatpush2.msra.mxu0 0.0
    %1173 = vmatprep.subr.mxu0 0.0
    %1174 = vmatpush2.msra.mxu0 0.0
    %1175 = vmatprep.subr.mxu0 0.0
    %1176 = vmatpush2.msra.mxu0 0.0
    %1177 = vmatprep.subr.mxu0 0.0
    %1178 = vmatpush2.msra.mxu0 0.0
    %1179 = vmatprep.subr.mxu0 0.0
    %1180 = vmatpush2.msra.mxu0 0.0
    %1181 = vmatprep.mubr.f32.mxu0 0.0
    %1182 = vmatmul.mubr.f32.gmra.mxu0 %v957
    %v1183 = vpop.f32.mrf.mxu0
    %v1184 = vadd.f32 %v949, %v1183
    %v1185 = vpop.f32.mrf.mxu0
    %1186 = vdwg.mxu0
    %v1187 = vxor.u32 %v1042, 2147483648
    %v1188 = vmul.f32 %v1187, 1.442695
    %v1189 = vpow.pop %v1188
    %v1190 = vadd.f32 %v1189, 1.0
    %v1191 = vrcp.pop %v1190
    %v1192 = vmul.f32 1.0, %v1191
    %v1193 = vmul.f32 %v1042, %v1192
    %1195 = vrot.lane.b32.xlu0 %v1042, 96
    %v1196 = vpop.permute.xlu0 %1195
    %v1198 = vmul.f32 %v1193, %v1196
    %v1199 = vld [vmem:[%s15] sm:$0xff]
    %v1200 = vld [vmem:[%s15 + $0x8] sm:$0xff]
    %v1201 = vld [vmem:[%s15 + $0x10] sm:$0xff]
    %v1202 = vld [vmem:[%s15 + $0x18] sm:$0xff]
    %v1203 = vld [vmem:[#allocation8] sm:$0x1]
    %v1205 = vlaneseq
    %v1206 = vshrl.u32 %v1205, 7
    %v1207 = vsub.s32 0, %v1206
    %v1208 = vrot.slane %v1203, %v1207
    %vm1210 = vcmask 261120
    %v1212 = vsel %vm1210, %v1198, 0
    %1214 = vmatprep.subr.mxu0 0.0
    %1215 = vmatpush1.msra.mxu0 0.0
    %1216 = vmatprep.subr.mxu0 0.0
    %1217 = vmatpush1.msra.mxu0 0.0
    %1218 = vmatprep.subr.mxu0 0.0
    %1219 = vmatpush1.msra.mxu0 0.0
    %1220 = vmatprep.subr.mxu0 0.0
    %1221 = vmatpush1.msra.mxu0 0.0
    %1222 = vmatprep.subr.mxu0 0.0
    %1223 = vmatpush1.msra.mxu0 0.0
    %1224 = vmatprep.subr.mxu0 0.0
    %1225 = vmatpush1.msra.mxu0 0.0
    %1226 = vmatprep.subr.mxu0 0.0
    %1227 = vmatpush1.msra.mxu0 0.0
    %1228 = vmatprep.subr.mxu0 0.0
    %1229 = vmatpush1.msra.mxu0 0.0
    %1230 = vmatprep.subr.mxu0 0.0
    %1231 = vmatpush1.msra.mxu0 0.0
    %1232 = vmatprep.subr.mxu0 0.0
    %1233 = vmatpush1.msra.mxu0 0.0
    %1234 = vmatprep.subr.mxu0 0.0
    %1235 = vmatpush1.msra.mxu0 0.0
    %1236 = vmatprep.subr.mxu0 0.0
    %1237 = vmatpush1.msra.mxu0 0.0
    %1238 = vmatprep.subr.mxu0 0.0
    %1239 = vmatpush1.msra.mxu0 %v1202
    %1240 = vmatprep.subr.mxu0 0.0
    %1241 = vmatpush1.msra.mxu0 %v1201
    %1242 = vmatprep.subr.mxu0 0.0
    %1243 = vmatpush1.msra.mxu0 %v1200
    %1244 = vmatprep.subr.mxu0 0.0
    %1245 = vmatpush1.msra.mxu0 %v1199
    %1246 = vmatprep.subr.mxu0 0.0
    %1247 = vmatpush2.msra.mxu0 0.0
    %1248 = vmatprep.subr.mxu0 0.0
    %1249 = vmatpush2.msra.mxu0 0.0
    %1250 = vmatprep.subr.mxu0 0.0
    %1251 = vmatpush2.msra.mxu0 0.0
    %1252 = vmatprep.subr.mxu0 0.0
    %1253 = vmatpush2.msra.mxu0 0.0
    %1254 = vmatprep.subr.mxu0 0.0
    %1255 = vmatpush2.msra.mxu0 0.0
    %1256 = vmatprep.subr.mxu0 0.0
    %1257 = vmatpush2.msra.mxu0 0.0
    %1258 = vmatprep.subr.mxu0 0.0
    %1259 = vmatpush2.msra.mxu0 0.0
    %1260 = vmatprep.subr.mxu0 0.0
    %1261 = vmatpush2.msra.mxu0 0.0
    %1262 = vmatprep.subr.mxu0 0.0
    %1263 = vmatpush2.msra.mxu0 0.0
    %1264 = vmatprep.subr.mxu0 0.0
    %1265 = vmatpush2.msra.mxu0 0.0
    %1266 = vmatprep.subr.mxu0 0.0
    %1267 = vmatpush2.msra.mxu0 0.0
    %1268 = vmatprep.subr.mxu0 0.0
    %1269 = vmatpush2.msra.mxu0 0.0
    %1270 = vmatprep.subr.mxu0 0.0
    %1271 = vmatpush2.msra.mxu0 0.0
    %1272 = vmatprep.subr.mxu0 0.0
    %1273 = vmatpush2.msra.mxu0 0.0
    %1274 = vmatprep.subr.mxu0 0.0
    %1275 = vmatpush2.msra.mxu0 0.0
    %1276 = vmatprep.subr.mxu0 0.0
    %1277 = vmatpush2.msra.mxu0 0.0
    %1278 = vmatprep.mubr.f32.mxu0 0.0
    %1279 = vmatmul.mubr.f32.gmra.mxu0 %v1212
    %v1280 = vpop.f32.mrf.mxu0
    %v1281 = vadd.f32 %v1208, %v1280
    %v1282 = vpop.f32.mrf.mxu0
    %1283 = vdwg.mxu0
    %vm1284 = vcmp.gt.f32.partialorder %v1281, 20.0
    %v1285 = vmin.f32 %v1281, 20.0
    %v1286 = vmul.f32 %v1285, 1.442695
    %v1287 = vpow.pop %v1286
    %v1288 = vadd.f32 %v1287, 1.0
    %v1289 = vlog2.pop %v1288
    %v1290 = vmul.f32 %v1289, 0.6931472
    %v1291 = vmul.f32 -0.5, %v1287
    %v1292 = vadd.f32 %v1291, 1.0
    %v1293 = vmul.f32 %v1292, %v1287
    %v1294 = vand.u32 2147483647, %v1287
    %vm1295 = vcmp.lt.f32.partialorder %v1294, 0.0004427343
    %v1296 = vsel %vm1295, %v1293, %v1290
    %v1297 = vsel %vm1284, %v1281, %v1296
    %v1298 = vld [vmem:[#allocation7] sm:$0x1]
    %v1300 = vlaneseq
    %v1301 = vshrl.u32 %v1300, 7
    %v1302 = vsub.s32 0, %v1301
    %v1303 = vrot.slane %v1298, %v1302
    %v1305 = vsub.f32 %v683, %v1303
    %v1306 = vmul.f32 %v1305, %v1297
    %v1307 = vld [vmem:[%s19] sm:$0xff]
    %v1308 = vld [vmem:[%s19 + $0x8] sm:$0xff]
    %v1309 = vld [vmem:[%s19 + $0x10] sm:$0xff]
    %v1310 = vld [vmem:[%s19 + $0x18] sm:$0xff]
    %1311 = vrot.lane.b32.xlu0 %v1042, 64
    %v1312 = vpop.permute.xlu0 %1311
    %v1315 = vsel %vm1210, %v683, 0
    %1317 = vmatprep.subr.mxu0 0.0
    %1318 = vmatpush1.msra.mxu0 0.0
    %1319 = vmatprep.subr.mxu0 0.0
    %1320 = vmatpush1.msra.mxu0 0.0
    %1321 = vmatprep.subr.mxu0 0.0
    %1322 = vmatpush1.msra.mxu0 0.0
    %1323 = vmatprep.subr.mxu0 0.0
    %1324 = vmatpush1.msra.mxu0 0.0
    %1325 = vmatprep.subr.mxu0 0.0
    %1326 = vmatpush1.msra.mxu0 0.0
    %1327 = vmatprep.subr.mxu0 0.0
    %1328 = vmatpush1.msra.mxu0 0.0
    %1329 = vmatprep.subr.mxu0 0.0
    %1330 = vmatpush1.msra.mxu0 0.0
    %1331 = vmatprep.subr.mxu0 0.0
    %1332 = vmatpush1.msra.mxu0 0.0
    %1333 = vmatprep.subr.mxu0 0.0
    %1334 = vmatpush1.msra.mxu0 0.0
    %1335 = vmatprep.subr.mxu0 0.0
    %1336 = vmatpush1.msra.mxu0 0.0
    %1337 = vmatprep.subr.mxu0 0.0
    %1338 = vmatpush1.msra.mxu0 0.0
    %1339 = vmatprep.subr.mxu0 0.0
    %1340 = vmatpush1.msra.mxu0 0.0
    %1341 = vmatprep.subr.mxu0 0.0
    %1342 = vmatpush1.msra.mxu0 %v1310
    %1343 = vmatprep.subr.mxu0 0.0
    %1344 = vmatpush1.msra.mxu0 %v1309
    %1345 = vmatprep.subr.mxu0 0.0
    %1346 = vmatpush1.msra.mxu0 %v1308
    %1347 = vmatprep.subr.mxu0 0.0
    %1348 = vmatpush1.msra.mxu0 %v1307
    %1349 = vmatprep.subr.mxu0 0.0
    %1350 = vmatpush2.msra.mxu0 0.0
    %1351 = vmatprep.subr.mxu0 0.0
    %1352 = vmatpush2.msra.mxu0 0.0
    %1353 = vmatprep.subr.mxu0 0.0
    %1354 = vmatpush2.msra.mxu0 0.0
    %1355 = vmatprep.subr.mxu0 0.0
    %1356 = vmatpush2.msra.mxu0 0.0
    %1357 = vmatprep.subr.mxu0 0.0
    %1358 = vmatpush2.msra.mxu0 0.0
    %1359 = vmatprep.subr.mxu0 0.0
    %1360 = vmatpush2.msra.mxu0 0.0
    %1361 = vmatprep.subr.mxu0 0.0
    %1362 = vmatpush2.msra.mxu0 0.0
    %1363 = vmatprep.subr.mxu0 0.0
    %1364 = vmatpush2.msra.mxu0 0.0
    %1365 = vmatprep.subr.mxu0 0.0
    %1366 = vmatpush2.msra.mxu0 0.0
    %1367 = vmatprep.subr.mxu0 0.0
    %1368 = vmatpush2.msra.mxu0 0.0
    %1369 = vmatprep.subr.mxu0 0.0
    %1370 = vmatpush2.msra.mxu0 0.0
    %1371 = vmatprep.subr.mxu0 0.0
    %1372 = vmatpush2.msra.mxu0 0.0
    %1373 = vmatprep.subr.mxu0 0.0
    %1374 = vmatpush2.msra.mxu0 0.0
    %1375 = vmatprep.subr.mxu0 0.0
    %1376 = vmatpush2.msra.mxu0 0.0
    %1377 = vmatprep.subr.mxu0 0.0
    %1378 = vmatpush2.msra.mxu0 0.0
    %1379 = vmatprep.subr.mxu0 0.0
    %1380 = vmatpush2.msra.mxu0 0.0
    %1381 = vmatprep.mubr.f32.mxu0 0.0
    %1382 = vmatmul.mubr.f32.gmra.mxu0 %v1315
    %v1383 = vpop.f32.mrf.mxu0
    %v1384 = vadd.f32 %v1312, %v1383
    %v1385 = vpop.f32.mrf.mxu0
    %1386 = vdwg.mxu0
    %v1387 = vxor.u32 %v1384, 2147483648
    %v1388 = vmul.f32 %v1387, 1.442695
    %v1389 = vpow.pop %v1388
    %v1390 = vadd.f32 %v1389, 1.0
    %v1391 = vrcp.pop %v1390
    %v1392 = vmul.f32 1.0, %v1391
    %v1393 = vmul.f32 %v1384, %v1392
    %1395 = vrot.lane.b32.xlu0 %v1384, 112
    %v1396 = vpop.permute.xlu0 %1395
    %v1398 = vmul.f32 %v1393, %v1396
    %v1399 = vld [vmem:[%s21] sm:$0xff]
    %v1400 = vld [vmem:[%s21 + $0x8] sm:$0xff]
    %v1401 = vld [vmem:[#allocation10] sm:$0x1]
    %v1403 = vlaneseq
    %v1404 = vshrl.u32 %v1403, 7
    %v1405 = vsub.s32 0, %v1404
    %v1406 = vrot.slane %v1401, %v1405
    %vm1408 = vcmask 130048
    %v1410 = vsel %vm1408, %v1398, 0
    %1412 = vmatprep.subr.mxu0 0.0
    %1413 = vmatpush1.msra.mxu0 0.0
    %1414 = vmatprep.subr.mxu0 0.0
    %1415 = vmatpush1.msra.mxu0 0.0
    %1416 = vmatprep.subr.mxu0 0.0
    %1417 = vmatpush1.msra.mxu0 0.0
    %1418 = vmatprep.subr.mxu0 0.0
    %1419 = vmatpush1.msra.mxu0 0.0
    %1420 = vmatprep.subr.mxu0 0.0
    %1421 = vmatpush1.msra.mxu0 0.0
    %1422 = vmatprep.subr.mxu0 0.0
    %1423 = vmatpush1.msra.mxu0 0.0
    %1424 = vmatprep.subr.mxu0 0.0
    %1425 = vmatpush1.msra.mxu0 0.0
    %1426 = vmatprep.subr.mxu0 0.0
    %1427 = vmatpush1.msra.mxu0 0.0
    %1428 = vmatprep.subr.mxu0 0.0
    %1429 = vmatpush1.msra.mxu0 0.0
    %1430 = vmatprep.subr.mxu0 0.0
    %1431 = vmatpush1.msra.mxu0 0.0
    %1432 = vmatprep.subr.mxu0 0.0
    %1433 = vmatpush1.msra.mxu0 0.0
    %1434 = vmatprep.subr.mxu0 0.0
    %1435 = vmatpush1.msra.mxu0 0.0
    %1436 = vmatprep.subr.mxu0 0.0
    %1437 = vmatpush1.msra.mxu0 0.0
    %1438 = vmatprep.subr.mxu0 0.0
    %1439 = vmatpush1.msra.mxu0 0.0
    %1440 = vmatprep.subr.mxu0 0.0
    %1441 = vmatpush1.msra.mxu0 %v1400
    %1442 = vmatprep.subr.mxu0 0.0
    %1443 = vmatpush1.msra.mxu0 %v1399
    %1444 = vmatprep.subr.mxu0 0.0
    %1445 = vmatpush2.msra.mxu0 0.0
    %1446 = vmatprep.subr.mxu0 0.0
    %1447 = vmatpush2.msra.mxu0 0.0
    %1448 = vmatprep.subr.mxu0 0.0
    %1449 = vmatpush2.msra.mxu0 0.0
    %1450 = vmatprep.subr.mxu0 0.0
    %1451 = vmatpush2.msra.mxu0 0.0
    %1452 = vmatprep.subr.mxu0 0.0
    %1453 = vmatpush2.msra.mxu0 0.0
    %1454 = vmatprep.subr.mxu0 0.0
    %1455 = vmatpush2.msra.mxu0 0.0
    %1456 = vmatprep.subr.mxu0 0.0
    %1457 = vmatpush2.msra.mxu0 0.0
    %1458 = vmatprep.subr.mxu0 0.0
    %1459 = vmatpush2.msra.mxu0 0.0
    %1460 = vmatprep.subr.mxu0 0.0
    %1461 = vmatpush2.msra.mxu0 0.0
    %1462 = vmatprep.subr.mxu0 0.0
    %1463 = vmatpush2.msra.mxu0 0.0
    %1464 = vmatprep.subr.mxu0 0.0
    %1465 = vmatpush2.msra.mxu0 0.0
    %1466 = vmatprep.subr.mxu0 0.0
    %1467 = vmatpush2.msra.mxu0 0.0
    %1468 = vmatprep.subr.mxu0 0.0
    %1469 = vmatpush2.msra.mxu0 0.0
    %1470 = vmatprep.subr.mxu0 0.0
    %1471 = vmatpush2.msra.mxu0 0.0
    %1472 = vmatprep.subr.mxu0 0.0
    %1473 = vmatpush2.msra.mxu0 0.0
    %1474 = vmatprep.subr.mxu0 0.0
    %1475 = vmatpush2.msra.mxu0 0.0
    %1476 = vmatprep.mubr.f32.mxu0 0.0
    %1477 = vmatmul.mubr.f32.gmra.mxu0 %v1410
    %v1478 = vpop.f32.mrf.mxu0
    %v1479 = vadd.f32 %v1406, %v1478
    %v1480 = vpop.f32.mrf.mxu0
    %1481 = vdwg.mxu0
    %v1482 = vxor.u32 %v1479, 2147483648
    %v1483 = vmul.f32 %v1482, 1.442695
    %v1484 = vpow.pop %v1483
    %v1485 = vadd.f32 %v1484, 1.0
    %v1486 = vrcp.pop %v1485
    %v1487 = vmul.f32 1.0, %v1486
    %v1488 = vmul.f32 %v1479, %v1487
    %v1489 = vld [vmem:[%s25] sm:$0xff]
    %v1490 = vld [vmem:[%s25 + $0x8] sm:$0xff]
    %1492 = vrot.lane.b32.xlu0 %v1042, 32
    %v1493 = vpop.permute.xlu0 %1492
    %1494 = vrot.lane.b32.xlu0 %v1044, 32
    %v1495 = vpop.permute.xlu0 %1494
    %v1496 = vsel %vm1210, %v1493, %v1495
    %v1499 = vsel %vm1408, %v1488, 0
    %1501 = vmatprep.subr.mxu0 0.0
    %1502 = vmatpush1.msra.mxu0 0.0
    %1503 = vmatprep.subr.mxu0 0.0
    %1504 = vmatpush1.msra.mxu0 0.0
    %1505 = vmatprep.subr.mxu0 0.0
    %1506 = vmatpush1.msra.mxu0 0.0
    %1507 = vmatprep.subr.mxu0 0.0
    %1508 = vmatpush1.msra.mxu0 0.0
    %1509 = vmatprep.subr.mxu0 0.0
    %1510 = vmatpush1.msra.mxu0 0.0
    %1511 = vmatprep.subr.mxu0 0.0
    %1512 = vmatpush1.msra.mxu0 0.0
    %1513 = vmatprep.subr.mxu0 0.0
    %1514 = vmatpush1.msra.mxu0 0.0
    %1515 = vmatprep.subr.mxu0 0.0
    %1516 = vmatpush1.msra.mxu0 0.0
    %1517 = vmatprep.subr.mxu0 0.0
    %1518 = vmatpush1.msra.mxu0 0.0
    %1519 = vmatprep.subr.mxu0 0.0
    %1520 = vmatpush1.msra.mxu0 0.0
    %1521 = vmatprep.subr.mxu0 0.0
    %1522 = vmatpush1.msra.mxu0 0.0
    %1523 = vmatprep.subr.mxu0 0.0
    %1524 = vmatpush1.msra.mxu0 0.0
    %1525 = vmatprep.subr.mxu0 0.0
    %1526 = vmatpush1.msra.mxu0 0.0
    %1527 = vmatprep.subr.mxu0 0.0
    %1528 = vmatpush1.msra.mxu0 0.0
    %1529 = vmatprep.subr.mxu0 0.0
    %1530 = vmatpush1.msra.mxu0 %v1490
    %1531 = vmatprep.subr.mxu0 0.0
    %1532 = vmatpush1.msra.mxu0 %v1489
    %1533 = vmatprep.subr.mxu0 0.0
    %1534 = vmatpush2.msra.mxu0 0.0
    %1535 = vmatprep.subr.mxu0 0.0
    %1536 = vmatpush2.msra.mxu0 0.0
    %1537 = vmatprep.subr.mxu0 0.0
    %1538 = vmatpush2.msra.mxu0 0.0
    %1539 = vmatprep.subr.mxu0 0.0
    %1540 = vmatpush2.msra.mxu0 0.0
    %1541 = vmatprep.subr.mxu0 0.0
    %1542 = vmatpush2.msra.mxu0 0.0
    %1543 = vmatprep.subr.mxu0 0.0
    %1544 = vmatpush2.msra.mxu0 0.0
    %1545 = vmatprep.subr.mxu0 0.0
    %1546 = vmatpush2.msra.mxu0 0.0
    %1547 = vmatprep.subr.mxu0 0.0
    %1548 = vmatpush2.msra.mxu0 0.0
    %1549 = vmatprep.subr.mxu0 0.0
    %1550 = vmatpush2.msra.mxu0 0.0
    %1551 = vmatprep.subr.mxu0 0.0
    %1552 = vmatpush2.msra.mxu0 0.0
    %1553 = vmatprep.subr.mxu0 0.0
    %1554 = vmatpush2.msra.mxu0 0.0
    %1555 = vmatprep.subr.mxu0 0.0
    %1556 = vmatpush2.msra.mxu0 0.0
    %1557 = vmatprep.subr.mxu0 0.0
    %1558 = vmatpush2.msra.mxu0 0.0
    %1559 = vmatprep.subr.mxu0 0.0
    %1560 = vmatpush2.msra.mxu0 0.0
    %1561 = vmatprep.subr.mxu0 0.0
    %1562 = vmatpush2.msra.mxu0 0.0
    %1563 = vmatprep.subr.mxu0 0.0
    %1564 = vmatpush2.msra.mxu0 0.0
    %1565 = vmatprep.mubr.f32.mxu0 0.0
    %1566 = vmatmul.mubr.f32.gmra.mxu0 %v1499
    %v1567 = vpop.f32.mrf.mxu0
    %v1568 = vadd.f32 %v1496, %v1567
    %v1569 = vpop.f32.mrf.mxu0
    %1570 = vdwg.mxu0
    %v1571 = vxor.u32 %v1568, 2147483648
    %v1572 = vmul.f32 %v1571, 1.442695
    %v1573 = vpow.pop %v1572
    %v1574 = vadd.f32 %v1573, 1.0
    %v1575 = vrcp.pop %v1574
    %v1576 = vmul.f32 1.0, %v1575
    %v1577 = vmul.f32 %v1568, %v1576
    %1579 = vrot.lane.b32.xlu0 %v1568, 96
    %v1580 = vpop.permute.xlu0 %1579
    %v1582 = vmul.f32 %v1577, %v1580
    %v1583 = vld [vmem:[%s27] sm:$0xff]
    %v1584 = vld [vmem:[%s27 + $0x8] sm:$0xff]
    %v1585 = vld [vmem:[%s27 + $0x10] sm:$0xff]
    %v1586 = vld [vmem:[%s27 + $0x18] sm:$0xff]
    %v1587 = vld [vmem:[#allocation11] sm:$0x1]
    %v1589 = vlaneseq
    %v1590 = vshrl.u32 %v1589, 7
    %v1591 = vsub.s32 0, %v1590
    %v1592 = vrot.slane %v1587, %v1591
    %v1595 = vsel %vm1210, %v1582, 0
    %1597 = vmatprep.subr.mxu0 0.0
    %1598 = vmatpush1.msra.mxu0 0.0
    %1599 = vmatprep.subr.mxu0 0.0
    %1600 = vmatpush1.msra.mxu0 0.0
    %1601 = vmatprep.subr.mxu0 0.0
    %1602 = vmatpush1.msra.mxu0 0.0
    %1603 = vmatprep.subr.mxu0 0.0
    %1604 = vmatpush1.msra.mxu0 0.0
    %1605 = vmatprep.subr.mxu0 0.0
    %1606 = vmatpush1.msra.mxu0 0.0
    %1607 = vmatprep.subr.mxu0 0.0
    %1608 = vmatpush1.msra.mxu0 0.0
    %1609 = vmatprep.subr.mxu0 0.0
    %1610 = vmatpush1.msra.mxu0 0.0
    %1611 = vmatprep.subr.mxu0 0.0
    %1612 = vmatpush1.msra.mxu0 0.0
    %1613 = vmatprep.subr.mxu0 0.0
    %1614 = vmatpush1.msra.mxu0 0.0
    %1615 = vmatprep.subr.mxu0 0.0
    %1616 = vmatpush1.msra.mxu0 0.0
    %1617 = vmatprep.subr.mxu0 0.0
    %1618 = vmatpush1.msra.mxu0 0.0
    %1619 = vmatprep.subr.mxu0 0.0
    %1620 = vmatpush1.msra.mxu0 0.0
    %1621 = vmatprep.subr.mxu0 0.0
    %1622 = vmatpush1.msra.mxu0 %v1586
    %1623 = vmatprep.subr.mxu0 0.0
    %1624 = vmatpush1.msra.mxu0 %v1585
    %1625 = vmatprep.subr.mxu0 0.0
    %1626 = vmatpush1.msra.mxu0 %v1584
    %1627 = vmatprep.subr.mxu0 0.0
    %1628 = vmatpush1.msra.mxu0 %v1583
    %1629 = vmatprep.subr.mxu0 0.0
    %1630 = vmatpush2.msra.mxu0 0.0
    %1631 = vmatprep.subr.mxu0 0.0
    %1632 = vmatpush2.msra.mxu0 0.0
    %1633 = vmatprep.subr.mxu0 0.0
    %1634 = vmatpush2.msra.mxu0 0.0
    %1635 = vmatprep.subr.mxu0 0.0
    %1636 = vmatpush2.msra.mxu0 0.0
    %1637 = vmatprep.subr.mxu0 0.0
    %1638 = vmatpush2.msra.mxu0 0.0
    %1639 = vmatprep.subr.mxu0 0.0
    %1640 = vmatpush2.msra.mxu0 0.0
    %1641 = vmatprep.subr.mxu0 0.0
    %1642 = vmatpush2.msra.mxu0 0.0
    %1643 = vmatprep.subr.mxu0 0.0
    %1644 = vmatpush2.msra.mxu0 0.0
    %1645 = vmatprep.subr.mxu0 0.0
    %1646 = vmatpush2.msra.mxu0 0.0
    %1647 = vmatprep.subr.mxu0 0.0
    %1648 = vmatpush2.msra.mxu0 0.0
    %1649 = vmatprep.subr.mxu0 0.0
    %1650 = vmatpush2.msra.mxu0 0.0
    %1651 = vmatprep.subr.mxu0 0.0
    %1652 = vmatpush2.msra.mxu0 0.0
    %1653 = vmatprep.subr.mxu0 0.0
    %1654 = vmatpush2.msra.mxu0 0.0
    %1655 = vmatprep.subr.mxu0 0.0
    %1656 = vmatpush2.msra.mxu0 0.0
    %1657 = vmatprep.subr.mxu0 0.0
    %1658 = vmatpush2.msra.mxu0 0.0
    %1659 = vmatprep.subr.mxu0 0.0
    %1660 = vmatpush2.msra.mxu0 0.0
    %1661 = vmatprep.mubr.f32.mxu0 0.0
    %1662 = vmatmul.mubr.f32.gmra.mxu0 %v1595
    %v1663 = vpop.f32.mrf.mxu0
    %v1664 = vadd.f32 %v1592, %v1663
    %v1665 = vpop.f32.mrf.mxu0
    %1666 = vdwg.mxu0
    %v1667 = vadd.f32 %v683, %v1664
    %v1668 = vld [vmem:[%s31] sm:$0xff]
    %v1669 = vld [vmem:[%s31 + $0x8] sm:$0xff]
    %1670 = vrot.lane.b32.xlu0 %v1044, 96
    %v1671 = vpop.permute.xlu0 %1670
    %v1674 = vsel %vm1408, %v1479, 0
    %1676 = vmatprep.subr.mxu0 0.0
    %1677 = vmatpush1.msra.mxu0 0.0
    %1678 = vmatprep.subr.mxu0 0.0
    %1679 = vmatpush1.msra.mxu0 0.0
    %1680 = vmatprep.subr.mxu0 0.0
    %1681 = vmatpush1.msra.mxu0 0.0
    %1682 = vmatprep.subr.mxu0 0.0
    %1683 = vmatpush1.msra.mxu0 0.0
    %1684 = vmatprep.subr.mxu0 0.0
    %1685 = vmatpush1.msra.mxu0 0.0
    %1686 = vmatprep.subr.mxu0 0.0
    %1687 = vmatpush1.msra.mxu0 0.0
    %1688 = vmatprep.subr.mxu0 0.0
    %1689 = vmatpush1.msra.mxu0 0.0
    %1690 = vmatprep.subr.mxu0 0.0
    %1691 = vmatpush1.msra.mxu0 0.0
    %1692 = vmatprep.subr.mxu0 0.0
    %1693 = vmatpush1.msra.mxu0 0.0
    %1694 = vmatprep.subr.mxu0 0.0
    %1695 = vmatpush1.msra.mxu0 0.0
    %1696 = vmatprep.subr.mxu0 0.0
    %1697 = vmatpush1.msra.mxu0 0.0
    %1698 = vmatprep.subr.mxu0 0.0
    %1699 = vmatpush1.msra.mxu0 0.0
    %1700 = vmatprep.subr.mxu0 0.0
    %1701 = vmatpush1.msra.mxu0 0.0
    %1702 = vmatprep.subr.mxu0 0.0
    %1703 = vmatpush1.msra.mxu0 0.0
    %1704 = vmatprep.subr.mxu0 0.0
    %1705 = vmatpush1.msra.mxu0 %v1669
    %1706 = vmatprep.subr.mxu0 0.0
    %1707 = vmatpush1.msra.mxu0 %v1668
    %1708 = vmatprep.subr.mxu0 0.0
    %1709 = vmatpush2.msra.mxu0 0.0
    %1710 = vmatprep.subr.mxu0 0.0
    %1711 = vmatpush2.msra.mxu0 0.0
    %1712 = vmatprep.subr.mxu0 0.0
    %1713 = vmatpush2.msra.mxu0 0.0
    %1714 = vmatprep.subr.mxu0 0.0
    %1715 = vmatpush2.msra.mxu0 0.0
    %1716 = vmatprep.subr.mxu0 0.0
    %1717 = vmatpush2.msra.mxu0 0.0
    %1718 = vmatprep.subr.mxu0 0.0
    %1719 = vmatpush2.msra.mxu0 0.0
    %1720 = vmatprep.subr.mxu0 0.0
    %1721 = vmatpush2.msra.mxu0 0.0
    %1722 = vmatprep.subr.mxu0 0.0
    %1723 = vmatpush2.msra.mxu0 0.0
    %1724 = vmatprep.subr.mxu0 0.0
    %1725 = vmatpush2.msra.mxu0 0.0
    %1726 = vmatprep.subr.mxu0 0.0
    %1727 = vmatpush2.msra.mxu0 0.0
    %1728 = vmatprep.subr.mxu0 0.0
    %1729 = vmatpush2.msra.mxu0 0.0
    %1730 = vmatprep.subr.mxu0 0.0
    %1731 = vmatpush2.msra.mxu0 0.0
    %1732 = vmatprep.subr.mxu0 0.0
    %1733 = vmatpush2.msra.mxu0 0.0
    %1734 = vmatprep.subr.mxu0 0.0
    %1735 = vmatpush2.msra.mxu0 0.0
    %1736 = vmatprep.subr.mxu0 0.0
    %1737 = vmatpush2.msra.mxu0 0.0
    %1738 = vmatprep.subr.mxu0 0.0
    %1739 = vmatpush2.msra.mxu0 0.0
    %1740 = vmatprep.mubr.f32.mxu0 0.0
    %1741 = vmatmul.mubr.f32.gmra.mxu0 %v1674
    %v1742 = vpop.f32.mrf.mxu0
    %v1743 = vadd.f32 %v1671, %v1742
    %v1744 = vpop.f32.mrf.mxu0
    %1745 = vdwg.mxu0
    %v1746 = vxor.u32 %v1743, 2147483648
    %v1747 = vmul.f32 %v1746, 1.442695
    %v1748 = vpow.pop %v1747
    %v1749 = vadd.f32 %v1748, 1.0
    %v1750 = vrcp.pop %v1749
    %v1751 = vmul.f32 1.0, %v1750
    %v1752 = vmul.f32 %v1743, %v1751
    %1754 = vrot.lane.b32.xlu0 %v1743, 120
    %v1755 = vpop.permute.xlu0 %1754
    %v1757 = vmul.f32 %v1752, %v1755
    %v1758 = vld [vmem:[%s33] sm:$0xff]
    %v1759 = vld [vmem:[#allocation13] sm:$0x1]
    %v1761 = vlaneseq
    %v1762 = vshrl.u32 %v1761, 7
    %v1763 = vsub.s32 0, %v1762
    %v1764 = vrot.slane %v1759, %v1763
    %v1767 = vsel %vm916, %v1757, 0
    %1769 = vmatprep.subr.mxu0 0.0
    %1770 = vmatpush1.msra.mxu0 0.0
    %1771 = vmatprep.subr.mxu0 0.0
    %1772 = vmatpush1.msra.mxu0 0.0
    %1773 = vmatprep.subr.mxu0 0.0
    %1774 = vmatpush1.msra.mxu0 0.0
    %1775 = vmatprep.subr.mxu0 0.0
    %1776 = vmatpush1.msra.mxu0 0.0
    %1777 = vmatprep.subr.mxu0 0.0
    %1778 = vmatpush1.msra.mxu0 0.0
    %1779 = vmatprep.subr.mxu0 0.0
    %1780 = vmatpush1.msra.mxu0 0.0
    %1781 = vmatprep.subr.mxu0 0.0
    %1782 = vmatpush1.msra.mxu0 0.0
    %1783 = vmatprep.subr.mxu0 0.0
    %1784 = vmatpush1.msra.mxu0 0.0
    %1785 = vmatprep.subr.mxu0 0.0
    %1786 = vmatpush1.msra.mxu0 0.0
    %1787 = vmatprep.subr.mxu0 0.0
    %1788 = vmatpush1.msra.mxu0 0.0
    %1789 = vmatprep.subr.mxu0 0.0
    %1790 = vmatpush1.msra.mxu0 0.0
    %1791 = vmatprep.subr.mxu0 0.0
    %1792 = vmatpush1.msra.mxu0 0.0
    %1793 = vmatprep.subr.mxu0 0.0
    %1794 = vmatpush1.msra.mxu0 0.0
    %1795 = vmatprep.subr.mxu0 0.0
    %1796 = vmatpush1.msra.mxu0 0.0
    %1797 = vmatprep.subr.mxu0 0.0
    %1798 = vmatpush1.msra.mxu0 0.0
    %1799 = vmatprep.subr.mxu0 0.0
    %1800 = vmatpush1.msra.mxu0 %v1758
    %1801 = vmatprep.subr.mxu0 0.0
    %1802 = vmatpush2.msra.mxu0 0.0
    %1803 = vmatprep.subr.mxu0 0.0
    %1804 = vmatpush2.msra.mxu0 0.0
    %1805 = vmatprep.subr.mxu0 0.0
    %1806 = vmatpush2.msra.mxu0 0.0
    %1807 = vmatprep.subr.mxu0 0.0
    %1808 = vmatpush2.msra.mxu0 0.0
    %1809 = vmatprep.subr.mxu0 0.0
    %1810 = vmatpush2.msra.mxu0 0.0
    %1811 = vmatprep.subr.mxu0 0.0
    %1812 = vmatpush2.msra.mxu0 0.0
    %1813 = vmatprep.subr.mxu0 0.0
    %1814 = vmatpush2.msra.mxu0 0.0
    %1815 = vmatprep.subr.mxu0 0.0
    %1816 = vmatpush2.msra.mxu0 0.0
    %1817 = vmatprep.subr.mxu0 0.0
    %1818 = vmatpush2.msra.mxu0 0.0
    %1819 = vmatprep.subr.mxu0 0.0
    %1820 = vmatpush2.msra.mxu0 0.0
    %1821 = vmatprep.subr.mxu0 0.0
    %1822 = vmatpush2.msra.mxu0 0.0
    %1823 = vmatprep.subr.mxu0 0.0
    %1824 = vmatpush2.msra.mxu0 0.0
    %1825 = vmatprep.subr.mxu0 0.0
    %1826 = vmatpush2.msra.mxu0 0.0
    %1827 = vmatprep.subr.mxu0 0.0
    %1828 = vmatpush2.msra.mxu0 0.0
    %1829 = vmatprep.subr.mxu0 0.0
    %1830 = vmatpush2.msra.mxu0 0.0
    %1831 = vmatprep.subr.mxu0 0.0
    %1832 = vmatpush2.msra.mxu0 0.0
    %1833 = vmatprep.mubr.f32.mxu0 0.0
    %1834 = vmatmul.mubr.f32.gmra.mxu0 %v1767
    %v1835 = vpop.f32.mrf.mxu0
    %v1836 = vadd.f32 %v1764, %v1835
    %v1837 = vpop.f32.mrf.mxu0
    %1838 = vdwg.mxu0
    %v1839 = vxor.u32 %v1836, 2147483648
    %v1840 = vmul.f32 %v1839, 1.442695
    %v1841 = vpow.pop %v1840
    %v1842 = vadd.f32 %v1841, 1.0
    %v1843 = vrcp.pop %v1842
    %v1844 = vmul.f32 1.0, %v1843
    %v1845 = vmul.f32 %v1836, %v1844
    %v1846 = vld [vmem:[#allocation14] sm:$0xff]
    %1847 = vrot.lane.b32.xlu0 %v1044, 80
    %v1848 = vpop.permute.xlu0 %1847
    %v1851 = vsel %vm916, %v1845, 0
    %1853 = vmatprep.subr.mxu0 0.0
    %1854 = vmatpush1.msra.mxu0 0.0
    %1855 = vmatprep.subr.mxu0 0.0
    %1856 = vmatpush1.msra.mxu0 0.0
    %1857 = vmatprep.subr.mxu0 0.0
    %1858 = vmatpush1.msra.mxu0 0.0
    %1859 = vmatprep.subr.mxu0 0.0
    %1860 = vmatpush1.msra.mxu0 0.0
    %1861 = vmatprep.subr.mxu0 0.0
    %1862 = vmatpush1.msra.mxu0 0.0
    %1863 = vmatprep.subr.mxu0 0.0
    %1864 = vmatpush1.msra.mxu0 0.0
    %1865 = vmatprep.subr.mxu0 0.0
    %1866 = vmatpush1.msra.mxu0 0.0
    %1867 = vmatprep.subr.mxu0 0.0
    %1868 = vmatpush1.msra.mxu0 0.0
    %1869 = vmatprep.subr.mxu0 0.0
    %1870 = vmatpush1.msra.mxu0 0.0
    %1871 = vmatprep.subr.mxu0 0.0
    %1872 = vmatpush1.msra.mxu0 0.0
    %1873 = vmatprep.subr.mxu0 0.0
    %1874 = vmatpush1.msra.mxu0 0.0
    %1875 = vmatprep.subr.mxu0 0.0
    %1876 = vmatpush1.msra.mxu0 0.0
    %1877 = vmatprep.subr.mxu0 0.0
    %1878 = vmatpush1.msra.mxu0 0.0
    %1879 = vmatprep.subr.mxu0 0.0
    %1880 = vmatpush1.msra.mxu0 0.0
    %1881 = vmatprep.subr.mxu0 0.0
    %1882 = vmatpush1.msra.mxu0 0.0
    %1883 = vmatprep.subr.mxu0 0.0
    %1884 = vmatpush1.msra.mxu0 %v1846
    %1885 = vmatprep.subr.mxu0 0.0
    %1886 = vmatpush2.msra.mxu0 0.0
    %1887 = vmatprep.subr.mxu0 0.0
    %1888 = vmatpush2.msra.mxu0 0.0
    %1889 = vmatprep.subr.mxu0 0.0
    %1890 = vmatpush2.msra.mxu0 0.0
    %1891 = vmatprep.subr.mxu0 0.0
    %1892 = vmatpush2.msra.mxu0 0.0
    %1893 = vmatprep.subr.mxu0 0.0
    %1894 = vmatpush2.msra.mxu0 0.0
    %1895 = vmatprep.subr.mxu0 0.0
    %1896 = vmatpush2.msra.mxu0 0.0
    %1897 = vmatprep.subr.mxu0 0.0
    %1898 = vmatpush2.msra.mxu0 0.0
    %1899 = vmatprep.subr.mxu0 0.0
    %1900 = vmatpush2.msra.mxu0 0.0
    %1901 = vmatprep.subr.mxu0 0.0
    %1902 = vmatpush2.msra.mxu0 0.0
    %1903 = vmatprep.subr.mxu0 0.0
    %1904 = vmatpush2.msra.mxu0 0.0
    %1905 = vmatprep.subr.mxu0 0.0
    %1906 = vmatpush2.msra.mxu0 0.0
    %1907 = vmatprep.subr.mxu0 0.0
    %1908 = vmatpush2.msra.mxu0 0.0
    %1909 = vmatprep.subr.mxu0 0.0
    %1910 = vmatpush2.msra.mxu0 0.0
    %1911 = vmatprep.subr.mxu0 0.0
    %1912 = vmatpush2.msra.mxu0 0.0
    %1913 = vmatprep.subr.mxu0 0.0
    %1914 = vmatpush2.msra.mxu0 0.0
    %1915 = vmatprep.subr.mxu0 0.0
    %1916 = vmatpush2.msra.mxu0 0.0
    %1917 = vmatprep.mubr.f32.mxu0 0.0
    %1918 = vmatmul.mubr.f32.gmra.mxu0 %v1851
    %v1919 = vpop.f32.mrf.mxu0
    %v1920 = vadd.f32 %v1848, %v1919
    %v1921 = vpop.f32.mrf.mxu0
    %1922 = vdwg.mxu0
    %v1923 = vxor.u32 %v1920, 2147483648
    %v1924 = vmul.f32 %v1923, 1.442695
    %v1925 = vpow.pop %v1924
    %v1926 = vadd.f32 %v1925, 1.0
    %v1927 = vrcp.pop %v1926
    %v1928 = vmul.f32 1.0, %v1927
    %v1929 = vmul.f32 %v1920, %v1928
    %1931 = vrot.lane.b32.xlu0 %v1920, 112
    %v1932 = vpop.permute.xlu0 %1931
    %v1934 = vmul.f32 %v1929, %v1932
    %v1935 = vld [vmem:[#allocation16] sm:$0xff]
    %v1936 = vld [vmem:[#allocation16 + $0x8] sm:$0xff]
    %v1937 = vld [vmem:[#allocation17] sm:$0x1]
    %v1939 = vlaneseq
    %v1940 = vshrl.u32 %v1939, 7
    %v1941 = vsub.s32 0, %v1940
    %v1942 = vrot.slane %v1937, %v1941
    %v1945 = vsel %vm1408, %v1934, 0
    %1947 = vmatprep.subr.mxu0 0.0
    %1948 = vmatpush1.msra.mxu0 0.0
    %1949 = vmatprep.subr.mxu0 0.0
    %1950 = vmatpush1.msra.mxu0 0.0
    %1951 = vmatprep.subr.mxu0 0.0
    %1952 = vmatpush1.msra.mxu0 0.0
    %1953 = vmatprep.subr.mxu0 0.0
    %1954 = vmatpush1.msra.mxu0 0.0
    %1955 = vmatprep.subr.mxu0 0.0
    %1956 = vmatpush1.msra.mxu0 0.0
    %1957 = vmatprep.subr.mxu0 0.0
    %1958 = vmatpush1.msra.mxu0 0.0
    %1959 = vmatprep.subr.mxu0 0.0
    %1960 = vmatpush1.msra.mxu0 0.0
    %1961 = vmatprep.subr.mxu0 0.0
    %1962 = vmatpush1.msra.mxu0 0.0
    %1963 = vmatprep.subr.mxu0 0.0
    %1964 = vmatpush1.msra.mxu0 0.0
    %1965 = vmatprep.subr.mxu0 0.0
    %1966 = vmatpush1.msra.mxu0 0.0
    %1967 = vmatprep.subr.mxu0 0.0
    %1968 = vmatpush1.msra.mxu0 0.0
    %1969 = vmatprep.subr.mxu0 0.0
    %1970 = vmatpush1.msra.mxu0 0.0
    %1971 = vmatprep.subr.mxu0 0.0
    %1972 = vmatpush1.msra.mxu0 0.0
    %1973 = vmatprep.subr.mxu0 0.0
    %1974 = vmatpush1.msra.mxu0 0.0
    %1975 = vmatprep.subr.mxu0 0.0
    %1976 = vmatpush1.msra.mxu0 %v1936
    %1977 = vmatprep.subr.mxu0 0.0
    %1978 = vmatpush1.msra.mxu0 %v1935
    %1979 = vmatprep.subr.mxu0 0.0
    %1980 = vmatpush2.msra.mxu0 0.0
    %1981 = vmatprep.subr.mxu0 0.0
    %1982 = vmatpush2.msra.mxu0 0.0
    %1983 = vmatprep.subr.mxu0 0.0
    %1984 = vmatpush2.msra.mxu0 0.0
    %1985 = vmatprep.subr.mxu0 0.0
    %1986 = vmatpush2.msra.mxu0 0.0
    %1987 = vmatprep.subr.mxu0 0.0
    %1988 = vmatpush2.msra.mxu0 0.0
    %1989 = vmatprep.subr.mxu0 0.0
    %1990 = vmatpush2.msra.mxu0 0.0
    %1991 = vmatprep.subr.mxu0 0.0
    %1992 = vmatpush2.msra.mxu0 0.0
    %1993 = vmatprep.subr.mxu0 0.0
    %1994 = vmatpush2.msra.mxu0 0.0
    %1995 = vmatprep.subr.mxu0 0.0
    %1996 = vmatpush2.msra.mxu0 0.0
    %1997 = vmatprep.subr.mxu0 0.0
    %1998 = vmatpush2.msra.mxu0 0.0
    %1999 = vmatprep.subr.mxu0 0.0
    %2000 = vmatpush2.msra.mxu0 0.0
    %2001 = vmatprep.subr.mxu0 0.0
    %2002 = vmatpush2.msra.mxu0 0.0
    %2003 = vmatprep.subr.mxu0 0.0
    %2004 = vmatpush2.msra.mxu0 0.0
    %2005 = vmatprep.subr.mxu0 0.0
    %2006 = vmatpush2.msra.mxu0 0.0
    %2007 = vmatprep.subr.mxu0 0.0
    %2008 = vmatpush2.msra.mxu0 0.0
    %2009 = vmatprep.subr.mxu0 0.0
    %2010 = vmatpush2.msra.mxu0 0.0
    %2011 = vmatprep.mubr.f32.mxu0 0.0
    %2012 = vmatmul.mubr.f32.gmra.mxu0 %v1945
    %v2013 = vpop.f32.mrf.mxu0
    %v2014 = vadd.f32 %v1942, %v2013
    %v2015 = vpop.f32.mrf.mxu0
    %2016 = vdwg.mxu0
    %v2017 = vadd.f32 %v1479, %v2014
    %v2018 = vld [vmem:[#allocation19] sm:$0xff]
    %2019 = vrot.lane.b32.xlu0 %v1044, 48
    %v2020 = vpop.permute.xlu0 %2019
    %v2023 = vsel %vm916, %v1836, 0
    %2025 = vmatprep.subr.mxu0 0.0
    %2026 = vmatpush1.msra.mxu0 0.0
    %2027 = vmatprep.subr.mxu0 0.0
    %2028 = vmatpush1.msra.mxu0 0.0
    %2029 = vmatprep.subr.mxu0 0.0
    %2030 = vmatpush1.msra.mxu0 0.0
    %2031 = vmatprep.subr.mxu0 0.0
    %2032 = vmatpush1.msra.mxu0 0.0
    %2033 = vmatprep.subr.mxu0 0.0
    %2034 = vmatpush1.msra.mxu0 0.0
    %2035 = vmatprep.subr.mxu0 0.0
    %2036 = vmatpush1.msra.mxu0 0.0
    %2037 = vmatprep.subr.mxu0 0.0
    %2038 = vmatpush1.msra.mxu0 0.0
    %2039 = vmatprep.subr.mxu0 0.0
    %2040 = vmatpush1.msra.mxu0 0.0
    %2041 = vmatprep.subr.mxu0 0.0
    %2042 = vmatpush1.msra.mxu0 0.0
    %2043 = vmatprep.subr.mxu0 0.0
    %2044 = vmatpush1.msra.mxu0 0.0
    %2045 = vmatprep.subr.mxu0 0.0
    %2046 = vmatpush1.msra.mxu0 0.0
    %2047 = vmatprep.subr.mxu0 0.0
    %2048 = vmatpush1.msra.mxu0 0.0
    %2049 = vmatprep.subr.mxu0 0.0
    %2050 = vmatpush1.msra.mxu0 0.0
    %2051 = vmatprep.subr.mxu0 0.0
    %2052 = vmatpush1.msra.mxu0 0.0
    %2053 = vmatprep.subr.mxu0 0.0
    %2054 = vmatpush1.msra.mxu0 0.0
    %2055 = vmatprep.subr.mxu0 0.0
    %2056 = vmatpush1.msra.mxu0 %v2018
    %2057 = vmatprep.subr.mxu0 0.0
    %2058 = vmatpush2.msra.mxu0 0.0
    %2059 = vmatprep.subr.mxu0 0.0
    %2060 = vmatpush2.msra.mxu0 0.0
    %2061 = vmatprep.subr.mxu0 0.0
    %2062 = vmatpush2.msra.mxu0 0.0
    %2063 = vmatprep.subr.mxu0 0.0
    %2064 = vmatpush2.msra.mxu0 0.0
    %2065 = vmatprep.subr.mxu0 0.0
    %2066 = vmatpush2.msra.mxu0 0.0
    %2067 = vmatprep.subr.mxu0 0.0
    %2068 = vmatpush2.msra.mxu0 0.0
    %2069 = vmatprep.subr.mxu0 0.0
    %2070 = vmatpush2.msra.mxu0 0.0
    %2071 = vmatprep.subr.mxu0 0.0
    %2072 = vmatpush2.msra.mxu0 0.0
    %2073 = vmatprep.subr.mxu0 0.0
    %2074 = vmatpush2.msra.mxu0 0.0
    %2075 = vmatprep.subr.mxu0 0.0
    %2076 = vmatpush2.msra.mxu0 0.0
    %2077 = vmatprep.subr.mxu0 0.0
    %2078 = vmatpush2.msra.mxu0 0.0
    %2079 = vmatprep.subr.mxu0 0.0
    %2080 = vmatpush2.msra.mxu0 0.0
    %2081 = vmatprep.subr.mxu0 0.0
    %2082 = vmatpush2.msra.mxu0 0.0
    %2083 = vmatprep.subr.mxu0 0.0
    %2084 = vmatpush2.msra.mxu0 0.0
    %2085 = vmatprep.subr.mxu0 0.0
    %2086 = vmatpush2.msra.mxu0 0.0
    %2087 = vmatprep.subr.mxu0 0.0
    %2088 = vmatpush2.msra.mxu0 0.0
    %2089 = vmatprep.mubr.f32.mxu0 0.0
    %2090 = vmatmul.mubr.f32.gmra.mxu0 %v2023
    %v2091 = vpop.f32.mrf.mxu0
    %v2092 = vadd.f32 %v2020, %v2091
    %v2093 = vpop.f32.mrf.mxu0
    %2094 = vdwg.mxu0
    %v2095 = vxor.u32 %v2092, 2147483648
    %v2096 = vmul.f32 %v2095, 1.442695
    %v2097 = vpow.pop %v2096
    %v2098 = vadd.f32 %v2097, 1.0
    %v2099 = vrcp.pop %v2098
    %v2100 = vmul.f32 1.0, %v2099
    %v2101 = vmul.f32 %v2092, %v2100
    %2103 = vrot.lane.b32.xlu0 %v2092, 124
    %v2104 = vpop.permute.xlu0 %2103
    %v2106 = vmul.f32 %v2101, %v2104
    %v2107 = vld [vmem:[%s45] sm:$0xf]
    %v2108 = vld [vmem:[#allocation20] sm:$0x1]
    %v2110 = vlaneseq
    %v2111 = vshrl.u32 %v2110, 7
    %v2112 = vsub.s32 0, %v2111
    %v2113 = vrot.slane %v2108, %v2112
    %v2116 = vsel %vm910, %v2106, 0
    %v2119 = vsel %vm959, %v2107, 0
    %2121 = vmatprep.subr.mxu0 0.0
    %2122 = vmatpush1.msra.mxu0 0.0
    %2123 = vmatprep.subr.mxu0 0.0
    %2124 = vmatpush1.msra.mxu0 0.0
    %2125 = vmatprep.subr.mxu0 0.0
    %2126 = vmatpush1.msra.mxu0 0.0
    %2127 = vmatprep.subr.mxu0 0.0
    %2128 = vmatpush1.msra.mxu0 0.0
    %2129 = vmatprep.subr.mxu0 0.0
    %2130 = vmatpush1.msra.mxu0 0.0
    %2131 = vmatprep.subr.mxu0 0.0
    %2132 = vmatpush1.msra.mxu0 0.0
    %2133 = vmatprep.subr.mxu0 0.0
    %2134 = vmatpush1.msra.mxu0 0.0
    %2135 = vmatprep.subr.mxu0 0.0
    %2136 = vmatpush1.msra.mxu0 0.0
    %2137 = vmatprep.subr.mxu0 0.0
    %2138 = vmatpush1.msra.mxu0 0.0
    %2139 = vmatprep.subr.mxu0 0.0
    %2140 = vmatpush1.msra.mxu0 0.0
    %2141 = vmatprep.subr.mxu0 0.0
    %2142 = vmatpush1.msra.mxu0 0.0
    %2143 = vmatprep.subr.mxu0 0.0
    %2144 = vmatpush1.msra.mxu0 0.0
    %2145 = vmatprep.subr.mxu0 0.0
    %2146 = vmatpush1.msra.mxu0 0.0
    %2147 = vmatprep.subr.mxu0 0.0
    %2148 = vmatpush1.msra.mxu0 0.0
    %2149 = vmatprep.subr.mxu0 0.0
    %2150 = vmatpush1.msra.mxu0 0.0
    %2151 = vmatprep.subr.mxu0 0.0
    %2152 = vmatpush1.msra.mxu0 %v2119
    %2153 = vmatprep.subr.mxu0 0.0
    %2154 = vmatpush2.msra.mxu0 0.0
    %2155 = vmatprep.subr.mxu0 0.0
    %2156 = vmatpush2.msra.mxu0 0.0
    %2157 = vmatprep.subr.mxu0 0.0
    %2158 = vmatpush2.msra.mxu0 0.0
    %2159 = vmatprep.subr.mxu0 0.0
    %2160 = vmatpush2.msra.mxu0 0.0
    %2161 = vmatprep.subr.mxu0 0.0
    %2162 = vmatpush2.msra.mxu0 0.0
    %2163 = vmatprep.subr.mxu0 0.0
    %2164 = vmatpush2.msra.mxu0 0.0
    %2165 = vmatprep.subr.mxu0 0.0
    %2166 = vmatpush2.msra.mxu0 0.0
    %2167 = vmatprep.subr.mxu0 0.0
    %2168 = vmatpush2.msra.mxu0 0.0
    %2169 = vmatprep.subr.mxu0 0.0
    %2170 = vmatpush2.msra.mxu0 0.0
    %2171 = vmatprep.subr.mxu0 0.0
    %2172 = vmatpush2.msra.mxu0 0.0
    %2173 = vmatprep.subr.mxu0 0.0
    %2174 = vmatpush2.msra.mxu0 0.0
    %2175 = vmatprep.subr.mxu0 0.0
    %2176 = vmatpush2.msra.mxu0 0.0
    %2177 = vmatprep.subr.mxu0 0.0
    %2178 = vmatpush2.msra.mxu0 0.0
    %2179 = vmatprep.subr.mxu0 0.0
    %2180 = vmatpush2.msra.mxu0 0.0
    %2181 = vmatprep.subr.mxu0 0.0
    %2182 = vmatpush2.msra.mxu0 0.0
    %2183 = vmatprep.subr.mxu0 0.0
    %2184 = vmatpush2.msra.mxu0 0.0
    %2185 = vmatprep.mubr.f32.mxu0 0.0
    %2186 = vmatmul.mubr.f32.gmra.mxu0 %v2116
    %v2187 = vpop.f32.mrf.mxu0
    %v2188 = vadd.f32 %v2113, %v2187
    %v2189 = vpop.f32.mrf.mxu0
    %2190 = vdwg.mxu0
    %v2191 = vxor.u32 %v2188, 2147483648
    %v2192 = vmul.f32 %v2191, 1.442695
    %v2193 = vpow.pop %v2192
    %v2194 = vadd.f32 %v2193, 1.0
    %v2195 = vrcp.pop %v2194
    %v2196 = vmul.f32 1.0, %v2195
    %v2197 = vmul.f32 %v2188, %v2196
    %v2198 = vld [vmem:[#allocation22] sm:$0xf]
    %2199 = vrot.lane.b32.xlu0 %v1044, 40
    %v2200 = vpop.permute.xlu0 %2199
    %v2203 = vsel %vm910, %v2197, 0
    %v2206 = vsel %vm959, %v2198, 0
    %2208 = vmatprep.subr.mxu0 0.0
    %2209 = vmatpush1.msra.mxu0 0.0
    %2210 = vmatprep.subr.mxu0 0.0
    %2211 = vmatpush1.msra.mxu0 0.0
    %2212 = vmatprep.subr.mxu0 0.0
    %2213 = vmatpush1.msra.mxu0 0.0
    %2214 = vmatprep.subr.mxu0 0.0
    %2215 = vmatpush1.msra.mxu0 0.0
    %2216 = vmatprep.subr.mxu0 0.0
    %2217 = vmatpush1.msra.mxu0 0.0
    %2218 = vmatprep.subr.mxu0 0.0
    %2219 = vmatpush1.msra.mxu0 0.0
    %2220 = vmatprep.subr.mxu0 0.0
    %2221 = vmatpush1.msra.mxu0 0.0
    %2222 = vmatprep.subr.mxu0 0.0
    %2223 = vmatpush1.msra.mxu0 0.0
    %2224 = vmatprep.subr.mxu0 0.0
    %2225 = vmatpush1.msra.mxu0 0.0
    %2226 = vmatprep.subr.mxu0 0.0
    %2227 = vmatpush1.msra.mxu0 0.0
    %2228 = vmatprep.subr.mxu0 0.0
    %2229 = vmatpush1.msra.mxu0 0.0
    %2230 = vmatprep.subr.mxu0 0.0
    %2231 = vmatpush1.msra.mxu0 0.0
    %2232 = vmatprep.subr.mxu0 0.0
    %2233 = vmatpush1.msra.mxu0 0.0
    %2234 = vmatprep.subr.mxu0 0.0
    %2235 = vmatpush1.msra.mxu0 0.0
    %2236 = vmatprep.subr.mxu0 0.0
    %2237 = vmatpush1.msra.mxu0 0.0
    %2238 = vmatprep.subr.mxu0 0.0
    %2239 = vmatpush1.msra.mxu0 %v2206
    %2240 = vmatprep.subr.mxu0 0.0
    %2241 = vmatpush2.msra.mxu0 0.0
    %2242 = vmatprep.subr.mxu0 0.0
    %2243 = vmatpush2.msra.mxu0 0.0
    %2244 = vmatprep.subr.mxu0 0.0
    %2245 = vmatpush2.msra.mxu0 0.0
    %2246 = vmatprep.subr.mxu0 0.0
    %2247 = vmatpush2.msra.mxu0 0.0
    %2248 = vmatprep.subr.mxu0 0.0
    %2249 = vmatpush2.msra.mxu0 0.0
    %2250 = vmatprep.subr.mxu0 0.0
    %2251 = vmatpush2.msra.mxu0 0.0
    %2252 = vmatprep.subr.mxu0 0.0
    %2253 = vmatpush2.msra.mxu0 0.0
    %2254 = vmatprep.subr.mxu0 0.0
    %2255 = vmatpush2.msra.mxu0 0.0
    %2256 = vmatprep.subr.mxu0 0.0
    %2257 = vmatpush2.msra.mxu0 0.0
    %2258 = vmatprep.subr.mxu0 0.0
    %2259 = vmatpush2.msra.mxu0 0.0
    %2260 = vmatprep.subr.mxu0 0.0
    %2261 = vmatpush2.msra.mxu0 0.0
    %2262 = vmatprep.subr.mxu0 0.0
    %2263 = vmatpush2.msra.mxu0 0.0
    %2264 = vmatprep.subr.mxu0 0.0
    %2265 = vmatpush2.msra.mxu0 0.0
    %2266 = vmatprep.subr.mxu0 0.0
    %2267 = vmatpush2.msra.mxu0 0.0
    %2268 = vmatprep.subr.mxu0 0.0
    %2269 = vmatpush2.msra.mxu0 0.0
    %2270 = vmatprep.subr.mxu0 0.0
    %2271 = vmatpush2.msra.mxu0 0.0
    %2272 = vmatprep.mubr.f32.mxu0 0.0
    %2273 = vmatmul.mubr.f32.gmra.mxu0 %v2203
    %v2274 = vpop.f32.mrf.mxu0
    %v2275 = vadd.f32 %v2200, %v2274
    %v2276 = vpop.f32.mrf.mxu0
    %2277 = vdwg.mxu0
    %v2278 = vxor.u32 %v2275, 2147483648
    %v2279 = vmul.f32 %v2278, 1.442695
    %v2280 = vpow.pop %v2279
    %v2281 = vadd.f32 %v2280, 1.0
    %v2282 = vrcp.pop %v2281
    %v2283 = vmul.f32 1.0, %v2282
    %v2284 = vmul.f32 %v2275, %v2283
    %2286 = vrot.lane.b32.xlu0 %v2275, 120
    %v2287 = vpop.permute.xlu0 %2286
    %v2289 = vmul.f32 %v2284, %v2287
    %v2290 = vld [vmem:[#allocation23] sm:$0xff]
    %v2291 = vld [vmem:[#allocation25] sm:$0x1]
    %v2293 = vlaneseq
    %v2294 = vshrl.u32 %v2293, 7
    %v2295 = vsub.s32 0, %v2294
    %v2296 = vrot.slane %v2291, %v2295
    %v2299 = vsel %vm916, %v2289, 0
    %2301 = vmatprep.subr.mxu0 0.0
    %2302 = vmatpush1.msra.mxu0 0.0
    %2303 = vmatprep.subr.mxu0 0.0
    %2304 = vmatpush1.msra.mxu0 0.0
    %2305 = vmatprep.subr.mxu0 0.0
    %2306 = vmatpush1.msra.mxu0 0.0
    %2307 = vmatprep.subr.mxu0 0.0
    %2308 = vmatpush1.msra.mxu0 0.0
    %2309 = vmatprep.subr.mxu0 0.0
    %2310 = vmatpush1.msra.mxu0 0.0
    %2311 = vmatprep.subr.mxu0 0.0
    %2312 = vmatpush1.msra.mxu0 0.0
    %2313 = vmatprep.subr.mxu0 0.0
    %2314 = vmatpush1.msra.mxu0 0.0
    %2315 = vmatprep.subr.mxu0 0.0
    %2316 = vmatpush1.msra.mxu0 0.0
    %2317 = vmatprep.subr.mxu0 0.0
    %2318 = vmatpush1.msra.mxu0 0.0
    %2319 = vmatprep.subr.mxu0 0.0
    %2320 = vmatpush1.msra.mxu0 0.0
    %2321 = vmatprep.subr.mxu0 0.0
    %2322 = vmatpush1.msra.mxu0 0.0
    %2323 = vmatprep.subr.mxu0 0.0
    %2324 = vmatpush1.msra.mxu0 0.0
    %2325 = vmatprep.subr.mxu0 0.0
    %2326 = vmatpush1.msra.mxu0 0.0
    %2327 = vmatprep.subr.mxu0 0.0
    %2328 = vmatpush1.msra.mxu0 0.0
    %2329 = vmatprep.subr.mxu0 0.0
    %2330 = vmatpush1.msra.mxu0 0.0
    %2331 = vmatprep.subr.mxu0 0.0
    %2332 = vmatpush1.msra.mxu0 %v2290
    %2333 = vmatprep.subr.mxu0 0.0
    %2334 = vmatpush2.msra.mxu0 0.0
    %2335 = vmatprep.subr.mxu0 0.0
    %2336 = vmatpush2.msra.mxu0 0.0
    %2337 = vmatprep.subr.mxu0 0.0
    %2338 = vmatpush2.msra.mxu0 0.0
    %2339 = vmatprep.subr.mxu0 0.0
    %2340 = vmatpush2.msra.mxu0 0.0
    %2341 = vmatprep.subr.mxu0 0.0
    %2342 = vmatpush2.msra.mxu0 0.0
    %2343 = vmatprep.subr.mxu0 0.0
    %2344 = vmatpush2.msra.mxu0 0.0
    %2345 = vmatprep.subr.mxu0 0.0
    %2346 = vmatpush2.msra.mxu0 0.0
    %2347 = vmatprep.subr.mxu0 0.0
    %2348 = vmatpush2.msra.mxu0 0.0
    %2349 = vmatprep.subr.mxu0 0.0
    %2350 = vmatpush2.msra.mxu0 0.0
    %2351 = vmatprep.subr.mxu0 0.0
    %2352 = vmatpush2.msra.mxu0 0.0
    %2353 = vmatprep.subr.mxu0 0.0
    %2354 = vmatpush2.msra.mxu0 0.0
    %2355 = vmatprep.subr.mxu0 0.0
    %2356 = vmatpush2.msra.mxu0 0.0
    %2357 = vmatprep.subr.mxu0 0.0
    %2358 = vmatpush2.msra.mxu0 0.0
    %2359 = vmatprep.subr.mxu0 0.0
    %2360 = vmatpush2.msra.mxu0 0.0
    %2361 = vmatprep.subr.mxu0 0.0
    %2362 = vmatpush2.msra.mxu0 0.0
    %2363 = vmatprep.subr.mxu0 0.0
    %2364 = vmatpush2.msra.mxu0 0.0
    %2365 = vmatprep.mubr.f32.mxu0 0.0
    %2366 = vmatmul.mubr.f32.gmra.mxu0 %v2299
    %v2367 = vpop.f32.mrf.mxu0
    %v2368 = vadd.f32 %v2296, %v2367
    %v2369 = vpop.f32.mrf.mxu0
    %2370 = vdwg.mxu0
    %v2371 = vadd.f32 %v1836, %v2368
    %v2372 = vld [vmem:[#allocation26] sm:$0xf]
    %2373 = vrot.lane.b32.xlu0 %v1044, 24
    %v2374 = vpop.permute.xlu0 %2373
    %v2377 = vsel %vm910, %v2188, 0
    %v2380 = vsel %vm959, %v2372, 0
    %2382 = vmatprep.subr.mxu0 0.0
    %2383 = vmatpush1.msra.mxu0 0.0
    %2384 = vmatprep.subr.mxu0 0.0
    %2385 = vmatpush1.msra.mxu0 0.0
    %2386 = vmatprep.subr.mxu0 0.0
    %2387 = vmatpush1.msra.mxu0 0.0
    %2388 = vmatprep.subr.mxu0 0.0
    %2389 = vmatpush1.msra.mxu0 0.0
    %2390 = vmatprep.subr.mxu0 0.0
    %2391 = vmatpush1.msra.mxu0 0.0
    %2392 = vmatprep.subr.mxu0 0.0
    %2393 = vmatpush1.msra.mxu0 0.0
    %2394 = vmatprep.subr.mxu0 0.0
    %2395 = vmatpush1.msra.mxu0 0.0
    %2396 = vmatprep.subr.mxu0 0.0
    %2397 = vmatpush1.msra.mxu0 0.0
    %2398 = vmatprep.subr.mxu0 0.0
    %2399 = vmatpush1.msra.mxu0 0.0
    %2400 = vmatprep.subr.mxu0 0.0
    %2401 = vmatpush1.msra.mxu0 0.0
    %2402 = vmatprep.subr.mxu0 0.0
    %2403 = vmatpush1.msra.mxu0 0.0
    %2404 = vmatprep.subr.mxu0 0.0
    %2405 = vmatpush1.msra.mxu0 0.0
    %2406 = vmatprep.subr.mxu0 0.0
    %2407 = vmatpush1.msra.mxu0 0.0
    %2408 = vmatprep.subr.mxu0 0.0
    %2409 = vmatpush1.msra.mxu0 0.0
    %2410 = vmatprep.subr.mxu0 0.0
    %2411 = vmatpush1.msra.mxu0 0.0
    %2412 = vmatprep.subr.mxu0 0.0
    %2413 = vmatpush1.msra.mxu0 %v2380
    %2414 = vmatprep.subr.mxu0 0.0
    %2415 = vmatpush2.msra.mxu0 0.0
    %2416 = vmatprep.subr.mxu0 0.0
    %2417 = vmatpush2.msra.mxu0 0.0
    %2418 = vmatprep.subr.mxu0 0.0
    %2419 = vmatpush2.msra.mxu0 0.0
    %2420 = vmatprep.subr.mxu0 0.0
    %2421 = vmatpush2.msra.mxu0 0.0
    %2422 = vmatprep.subr.mxu0 0.0
    %2423 = vmatpush2.msra.mxu0 0.0
    %2424 = vmatprep.subr.mxu0 0.0
    %2425 = vmatpush2.msra.mxu0 0.0
    %2426 = vmatprep.subr.mxu0 0.0
    %2427 = vmatpush2.msra.mxu0 0.0
    %2428 = vmatprep.subr.mxu0 0.0
    %2429 = vmatpush2.msra.mxu0 0.0
    %2430 = vmatprep.subr.mxu0 0.0
    %2431 = vmatpush2.msra.mxu0 0.0
    %2432 = vmatprep.subr.mxu0 0.0
    %2433 = vmatpush2.msra.mxu0 0.0
    %2434 = vmatprep.subr.mxu0 0.0
    %2435 = vmatpush2.msra.mxu0 0.0
    %2436 = vmatprep.subr.mxu0 0.0
    %2437 = vmatpush2.msra.mxu0 0.0
    %2438 = vmatprep.subr.mxu0 0.0
    %2439 = vmatpush2.msra.mxu0 0.0
    %2440 = vmatprep.subr.mxu0 0.0
    %2441 = vmatpush2.msra.mxu0 0.0
    %2442 = vmatprep.subr.mxu0 0.0
    %2443 = vmatpush2.msra.mxu0 0.0
    %2444 = vmatprep.subr.mxu0 0.0
    %2445 = vmatpush2.msra.mxu0 0.0
    %2446 = vmatprep.mubr.f32.mxu0 0.0
    %2447 = vmatmul.mubr.f32.gmra.mxu0 %v2377
    %v2448 = vpop.f32.mrf.mxu0
    %v2449 = vadd.f32 %v2374, %v2448
    %v2450 = vpop.f32.mrf.mxu0
    %2451 = vdwg.mxu0
    %v2452 = vxor.u32 %v2449, 2147483648
    %v2453 = vmul.f32 %v2452, 1.442695
    %v2454 = vpow.pop %v2453
    %v2455 = vadd.f32 %v2454, 1.0
    %v2456 = vrcp.pop %v2455
    %v2457 = vmul.f32 1.0, %v2456
    %v2458 = vmul.f32 %v2449, %v2457
    %2460 = vrot.lane.b32.xlu0 %v2449, 124
    %v2461 = vpop.permute.xlu0 %2460
    %v2463 = vmul.f32 %v2458, %v2461
    %v2464 = vld [vmem:[#allocation28] sm:$0xf]
    %v2465 = vld [vmem:[#allocation29] sm:$0x1]
    %v2467 = vlaneseq
    %v2468 = vshrl.u32 %v2467, 7
    %v2469 = vsub.s32 0, %v2468
    %v2470 = vrot.slane %v2465, %v2469
    %v2473 = vsel %vm910, %v2463, 0
    %v2476 = vsel %vm959, %v2464, 0
    %2478 = vmatprep.subr.mxu0 0.0
    %2479 = vmatpush1.msra.mxu0 0.0
    %2480 = vmatprep.subr.mxu0 0.0
    %2481 = vmatpush1.msra.mxu0 0.0
    %2482 = vmatprep.subr.mxu0 0.0
    %2483 = vmatpush1.msra.mxu0 0.0
    %2484 = vmatprep.subr.mxu0 0.0
    %2485 = vmatpush1.msra.mxu0 0.0
    %2486 = vmatprep.subr.mxu0 0.0
    %2487 = vmatpush1.msra.mxu0 0.0
    %2488 = vmatprep.subr.mxu0 0.0
    %2489 = vmatpush1.msra.mxu0 0.0
    %2490 = vmatprep.subr.mxu0 0.0
    %2491 = vmatpush1.msra.mxu0 0.0
    %2492 = vmatprep.subr.mxu0 0.0
    %2493 = vmatpush1.msra.mxu0 0.0
    %2494 = vmatprep.subr.mxu0 0.0
    %2495 = vmatpush1.msra.mxu0 0.0
    %2496 = vmatprep.subr.mxu0 0.0
    %2497 = vmatpush1.msra.mxu0 0.0
    %2498 = vmatprep.subr.mxu0 0.0
    %2499 = vmatpush1.msra.mxu0 0.0
    %2500 = vmatprep.subr.mxu0 0.0
    %2501 = vmatpush1.msra.mxu0 0.0
    %2502 = vmatprep.subr.mxu0 0.0
    %2503 = vmatpush1.msra.mxu0 0.0
    %2504 = vmatprep.subr.mxu0 0.0
    %2505 = vmatpush1.msra.mxu0 0.0
    %2506 = vmatprep.subr.mxu0 0.0
    %2507 = vmatpush1.msra.mxu0 0.0
    %2508 = vmatprep.subr.mxu0 0.0
    %2509 = vmatpush1.msra.mxu0 %v2476
    %2510 = vmatprep.subr.mxu0 0.0
    %2511 = vmatpush2.msra.mxu0 0.0
    %2512 = vmatprep.subr.mxu0 0.0
    %2513 = vmatpush2.msra.mxu0 0.0
    %2514 = vmatprep.subr.mxu0 0.0
    %2515 = vmatpush2.msra.mxu0 0.0
    %2516 = vmatprep.subr.mxu0 0.0
    %2517 = vmatpush2.msra.mxu0 0.0
    %2518 = vmatprep.subr.mxu0 0.0
    %2519 = vmatpush2.msra.mxu0 0.0
    %2520 = vmatprep.subr.mxu0 0.0
    %2521 = vmatpush2.msra.mxu0 0.0
    %2522 = vmatprep.subr.mxu0 0.0
    %2523 = vmatpush2.msra.mxu0 0.0
    %2524 = vmatprep.subr.mxu0 0.0
    %2525 = vmatpush2.msra.mxu0 0.0
    %2526 = vmatprep.subr.mxu0 0.0
    %2527 = vmatpush2.msra.mxu0 0.0
    %2528 = vmatprep.subr.mxu0 0.0
    %2529 = vmatpush2.msra.mxu0 0.0
    %2530 = vmatprep.subr.mxu0 0.0
    %2531 = vmatpush2.msra.mxu0 0.0
    %2532 = vmatprep.subr.mxu0 0.0
    %2533 = vmatpush2.msra.mxu0 0.0
    %2534 = vmatprep.subr.mxu0 0.0
    %2535 = vmatpush2.msra.mxu0 0.0
    %2536 = vmatprep.subr.mxu0 0.0
    %2537 = vmatpush2.msra.mxu0 0.0
    %2538 = vmatprep.subr.mxu0 0.0
    %2539 = vmatpush2.msra.mxu0 0.0
    %2540 = vmatprep.subr.mxu0 0.0
    %2541 = vmatpush2.msra.mxu0 0.0
    %2542 = vmatprep.mubr.f32.mxu0 0.0
    %2543 = vmatmul.mubr.f32.gmra.mxu0 %v2473
    %v2544 = vpop.f32.mrf.mxu0
    %v2545 = vadd.f32 %v2470, %v2544
    %v2546 = vpop.f32.mrf.mxu0
    %2547 = vdwg.mxu0
    %v2548 = vxor.u32 %v2545, 2147483648
    %v2549 = vmul.f32 %v2548, 1.442695
    %v2550 = vpow.pop %v2549
    %v2551 = vadd.f32 %v2550, 1.0
    %v2552 = vrcp.pop %v2551
    %v2553 = vmul.f32 1.0, %v2552
    %v2554 = vmul.f32 %v2545, %v2553
    %v2555 = vadd.f32 %v2188, %v2554
    %v2556 = vld [vmem:[#allocation31] sm:$0xf]
    %2557 = vrot.lane.b32.xlu0 %v1044, 16
    %v2558 = vpop.permute.xlu0 %2557
    %v2561 = vsel %vm910, %v2555, 0
    %v2564 = vsel %vm959, %v2556, 0
    %2566 = vmatprep.subr.mxu0 0.0
    %2567 = vmatpush1.msra.mxu0 0.0
    %2568 = vmatprep.subr.mxu0 0.0
    %2569 = vmatpush1.msra.mxu0 0.0
    %2570 = vmatprep.subr.mxu0 0.0
    %2571 = vmatpush1.msra.mxu0 0.0
    %2572 = vmatprep.subr.mxu0 0.0
    %2573 = vmatpush1.msra.mxu0 0.0
    %2574 = vmatprep.subr.mxu0 0.0
    %2575 = vmatpush1.msra.mxu0 0.0
    %2576 = vmatprep.subr.mxu0 0.0
    %2577 = vmatpush1.msra.mxu0 0.0
    %2578 = vmatprep.subr.mxu0 0.0
    %2579 = vmatpush1.msra.mxu0 0.0
    %2580 = vmatprep.subr.mxu0 0.0
    %2581 = vmatpush1.msra.mxu0 0.0
    %2582 = vmatprep.subr.mxu0 0.0
    %2583 = vmatpush1.msra.mxu0 0.0
    %2584 = vmatprep.subr.mxu0 0.0
    %2585 = vmatpush1.msra.mxu0 0.0
    %2586 = vmatprep.subr.mxu0 0.0
    %2587 = vmatpush1.msra.mxu0 0.0
    %2588 = vmatprep.subr.mxu0 0.0
    %2589 = vmatpush1.msra.mxu0 0.0
    %2590 = vmatprep.subr.mxu0 0.0
    %2591 = vmatpush1.msra.mxu0 0.0
    %2592 = vmatprep.subr.mxu0 0.0
    %2593 = vmatpush1.msra.mxu0 0.0
    %2594 = vmatprep.subr.mxu0 0.0
    %2595 = vmatpush1.msra.mxu0 0.0
    %2596 = vmatprep.subr.mxu0 0.0
    %2597 = vmatpush1.msra.mxu0 %v2564
    %2598 = vmatprep.subr.mxu0 0.0
    %2599 = vmatpush2.msra.mxu0 0.0
    %2600 = vmatprep.subr.mxu0 0.0
    %2601 = vmatpush2.msra.mxu0 0.0
    %2602 = vmatprep.subr.mxu0 0.0
    %2603 = vmatpush2.msra.mxu0 0.0
    %2604 = vmatprep.subr.mxu0 0.0
    %2605 = vmatpush2.msra.mxu0 0.0
    %2606 = vmatprep.subr.mxu0 0.0
    %2607 = vmatpush2.msra.mxu0 0.0
    %2608 = vmatprep.subr.mxu0 0.0
    %2609 = vmatpush2.msra.mxu0 0.0
    %2610 = vmatprep.subr.mxu0 0.0
    %2611 = vmatpush2.msra.mxu0 0.0
    %2612 = vmatprep.subr.mxu0 0.0
    %2613 = vmatpush2.msra.mxu0 0.0
    %2614 = vmatprep.subr.mxu0 0.0
    %2615 = vmatpush2.msra.mxu0 0.0
    %2616 = vmatprep.subr.mxu0 0.0
    %2617 = vmatpush2.msra.mxu0 0.0
    %2618 = vmatprep.subr.mxu0 0.0
    %2619 = vmatpush2.msra.mxu0 0.0
    %2620 = vmatprep.subr.mxu0 0.0
    %2621 = vmatpush2.msra.mxu0 0.0
    %2622 = vmatprep.subr.mxu0 0.0
    %2623 = vmatpush2.msra.mxu0 0.0
    %2624 = vmatprep.subr.mxu0 0.0
    %2625 = vmatpush2.msra.mxu0 0.0
    %2626 = vmatprep.subr.mxu0 0.0
    %2627 = vmatpush2.msra.mxu0 0.0
    %2628 = vmatprep.subr.mxu0 0.0
    %2629 = vmatpush2.msra.mxu0 0.0
    %2630 = vmatprep.mubr.f32.mxu0 0.0
    %2631 = vmatmul.mubr.f32.gmra.mxu0 %v2561
    %v2632 = vpop.f32.mrf.mxu0
    %v2633 = vadd.f32 %v2558, %v2632
    %v2634 = vpop.f32.mrf.mxu0
    %2635 = vdwg.mxu0
    %v2636 = vxor.u32 %v2633, 2147483648
    %v2637 = vmul.f32 %v2636, 1.442695
    %v2638 = vpow.pop %v2637
    %v2639 = vadd.f32 %v2638, 1.0
    %v2640 = vrcp.pop %v2639
    %v2641 = vmul.f32 1.0, %v2640
    %v2642 = vmul.f32 %v2633, %v2641
    %2644 = vrot.lane.b32.xlu0 %v2633, 124
    %v2645 = vpop.permute.xlu0 %2644
    %v2647 = vmul.f32 %v2642, %v2645
    %v2648 = vld [vmem:[#allocation32] sm:$0xf]
    %v2649 = vld [vmem:[#allocation34] sm:$0x1]
    %v2651 = vlaneseq
    %v2652 = vshrl.u32 %v2651, 7
    %v2653 = vsub.s32 0, %v2652
    %v2654 = vrot.slane %v2649, %v2653
    %v2657 = vsel %vm910, %v2647, 0
    %v2660 = vsel %vm959, %v2648, 0
    %2662 = vmatprep.subr.mxu0 0.0
    %2663 = vmatpush1.msra.mxu0 0.0
    %2664 = vmatprep.subr.mxu0 0.0
    %2665 = vmatpush1.msra.mxu0 0.0
    %2666 = vmatprep.subr.mxu0 0.0
    %2667 = vmatpush1.msra.mxu0 0.0
    %2668 = vmatprep.subr.mxu0 0.0
    %2669 = vmatpush1.msra.mxu0 0.0
    %2670 = vmatprep.subr.mxu0 0.0
    %2671 = vmatpush1.msra.mxu0 0.0
    %2672 = vmatprep.subr.mxu0 0.0
    %2673 = vmatpush1.msra.mxu0 0.0
    %2674 = vmatprep.subr.mxu0 0.0
    %2675 = vmatpush1.msra.mxu0 0.0
    %2676 = vmatprep.subr.mxu0 0.0
    %2677 = vmatpush1.msra.mxu0 0.0
    %2678 = vmatprep.subr.mxu0 0.0
    %2679 = vmatpush1.msra.mxu0 0.0
    %2680 = vmatprep.subr.mxu0 0.0
    %2681 = vmatpush1.msra.mxu0 0.0
    %2682 = vmatprep.subr.mxu0 0.0
    %2683 = vmatpush1.msra.mxu0 0.0
    %2684 = vmatprep.subr.mxu0 0.0
    %2685 = vmatpush1.msra.mxu0 0.0
    %2686 = vmatprep.subr.mxu0 0.0
    %2687 = vmatpush1.msra.mxu0 0.0
    %2688 = vmatprep.subr.mxu0 0.0
    %2689 = vmatpush1.msra.mxu0 0.0
    %2690 = vmatprep.subr.mxu0 0.0
    %2691 = vmatpush1.msra.mxu0 0.0
    %2692 = vmatprep.subr.mxu0 0.0
    %2693 = vmatpush1.msra.mxu0 %v2660
    %2694 = vmatprep.subr.mxu0 0.0
    %2695 = vmatpush2.msra.mxu0 0.0
    %2696 = vmatprep.subr.mxu0 0.0
    %2697 = vmatpush2.msra.mxu0 0.0
    %2698 = vmatprep.subr.mxu0 0.0
    %2699 = vmatpush2.msra.mxu0 0.0
    %2700 = vmatprep.subr.mxu0 0.0
    %2701 = vmatpush2.msra.mxu0 0.0
    %2702 = vmatprep.subr.mxu0 0.0
    %2703 = vmatpush2.msra.mxu0 0.0
    %2704 = vmatprep.subr.mxu0 0.0
    %2705 = vmatpush2.msra.mxu0 0.0
    %2706 = vmatprep.subr.mxu0 0.0
    %2707 = vmatpush2.msra.mxu0 0.0
    %2708 = vmatprep.subr.mxu0 0.0
    %2709 = vmatpush2.msra.mxu0 0.0
    %2710 = vmatprep.subr.mxu0 0.0
    %2711 = vmatpush2.msra.mxu0 0.0
    %2712 = vmatprep.subr.mxu0 0.0
    %2713 = vmatpush2.msra.mxu0 0.0
    %2714 = vmatprep.subr.mxu0 0.0
    %2715 = vmatpush2.msra.mxu0 0.0
    %2716 = vmatprep.subr.mxu0 0.0
    %2717 = vmatpush2.msra.mxu0 0.0
    %2718 = vmatprep.subr.mxu0 0.0
    %2719 = vmatpush2.msra.mxu0 0.0
    %2720 = vmatprep.subr.mxu0 0.0
    %2721 = vmatpush2.msra.mxu0 0.0
    %2722 = vmatprep.subr.mxu0 0.0
    %2723 = vmatpush2.msra.mxu0 0.0
    %2724 = vmatprep.subr.mxu0 0.0
    %2725 = vmatpush2.msra.mxu0 0.0
    %2726 = vmatprep.mubr.f32.mxu0 0.0
    %2727 = vmatmul.mubr.f32.gmra.mxu0 %v2657
    %v2728 = vpop.f32.mrf.mxu0
    %v2729 = vadd.f32 %v2654, %v2728
    %v2730 = vpop.f32.mrf.mxu0
    %2731 = vdwg.mxu0
    %v2732 = vadd.f32 %v2188, %v2729
    %v2733 = vld [vmem:[#allocation35] sm:$0xf]
    %2735 = vrot.lane.b32.xlu0 %v1044, 8
    %v2736 = vpop.permute.xlu0 %2735
    %2737 = vrot.lane.b32.xlu0 %v1113, 8
    %v2738 = vpop.permute.xlu0 %2737
    %v2739 = vsel %vm916, %v2736, %v2738
    %v2742 = vsel %vm910, %v2732, 0
    %v2745 = vsel %vm959, %v2733, 0
    %2747 = vmatprep.subr.mxu0 0.0
    %2748 = vmatpush1.msra.mxu0 0.0
    %2749 = vmatprep.subr.mxu0 0.0
    %2750 = vmatpush1.msra.mxu0 0.0
    %2751 = vmatprep.subr.mxu0 0.0
    %2752 = vmatpush1.msra.mxu0 0.0
    %2753 = vmatprep.subr.mxu0 0.0
    %2754 = vmatpush1.msra.mxu0 0.0
    %2755 = vmatprep.subr.mxu0 0.0
    %2756 = vmatpush1.msra.mxu0 0.0
    %2757 = vmatprep.subr.mxu0 0.0
    %2758 = vmatpush1.msra.mxu0 0.0
    %2759 = vmatprep.subr.mxu0 0.0
    %2760 = vmatpush1.msra.mxu0 0.0
    %2761 = vmatprep.subr.mxu0 0.0
    %2762 = vmatpush1.msra.mxu0 0.0
    %2763 = vmatprep.subr.mxu0 0.0
    %2764 = vmatpush1.msra.mxu0 0.0
    %2765 = vmatprep.subr.mxu0 0.0
    %2766 = vmatpush1.msra.mxu0 0.0
    %2767 = vmatprep.subr.mxu0 0.0
    %2768 = vmatpush1.msra.mxu0 0.0
    %2769 = vmatprep.subr.mxu0 0.0
    %2770 = vmatpush1.msra.mxu0 0.0
    %2771 = vmatprep.subr.mxu0 0.0
    %2772 = vmatpush1.msra.mxu0 0.0
    %2773 = vmatprep.subr.mxu0 0.0
    %2774 = vmatpush1.msra.mxu0 0.0
    %2775 = vmatprep.subr.mxu0 0.0
    %2776 = vmatpush1.msra.mxu0 0.0
    %2777 = vmatprep.subr.mxu0 0.0
    %2778 = vmatpush1.msra.mxu0 %v2745
    %2779 = vmatprep.subr.mxu0 0.0
    %2780 = vmatpush2.msra.mxu0 0.0
    %2781 = vmatprep.subr.mxu0 0.0
    %2782 = vmatpush2.msra.mxu0 0.0
    %2783 = vmatprep.subr.mxu0 0.0
    %2784 = vmatpush2.msra.mxu0 0.0
    %2785 = vmatprep.subr.mxu0 0.0
    %2786 = vmatpush2.msra.mxu0 0.0
    %2787 = vmatprep.subr.mxu0 0.0
    %2788 = vmatpush2.msra.mxu0 0.0
    %2789 = vmatprep.subr.mxu0 0.0
    %2790 = vmatpush2.msra.mxu0 0.0
    %2791 = vmatprep.subr.mxu0 0.0
    %2792 = vmatpush2.msra.mxu0 0.0
    %2793 = vmatprep.subr.mxu0 0.0
    %2794 = vmatpush2.msra.mxu0 0.0
    %2795 = vmatprep.subr.mxu0 0.0
    %2796 = vmatpush2.msra.mxu0 0.0
    %2797 = vmatprep.subr.mxu0 0.0
    %2798 = vmatpush2.msra.mxu0 0.0
    %2799 = vmatprep.subr.mxu0 0.0
    %2800 = vmatpush2.msra.mxu0 0.0
    %2801 = vmatprep.subr.mxu0 0.0
    %2802 = vmatpush2.msra.mxu0 0.0
    %2803 = vmatprep.subr.mxu0 0.0
    %2804 = vmatpush2.msra.mxu0 0.0
    %2805 = vmatprep.subr.mxu0 0.0
    %2806 = vmatpush2.msra.mxu0 0.0
    %2807 = vmatprep.subr.mxu0 0.0
    %2808 = vmatpush2.msra.mxu0 0.0
    %2809 = vmatprep.subr.mxu0 0.0
    %2810 = vmatpush2.msra.mxu0 0.0
    %2811 = vmatprep.mubr.f32.mxu0 0.0
    %2812 = vmatmul.mubr.f32.gmra.mxu0 %v2742
    %v2813 = vpop.f32.mrf.mxu0
    %v2814 = vadd.f32 %v2739, %v2813
    %v2815 = vpop.f32.mrf.mxu0
    %2816 = vdwg.mxu0
    %v2817 = vxor.u32 %v2814, 2147483648
    %v2818 = vmul.f32 %v2817, 1.442695
    %v2819 = vpow.pop %v2818
    %v2820 = vadd.f32 %v2819, 1.0
    %v2821 = vrcp.pop %v2820
    %v2822 = vmul.f32 1.0, %v2821
    %v2823 = vmul.f32 %v2814, %v2822
    %2825 = vrot.lane.b32.xlu0 %v2814, 120
    %v2826 = vpop.permute.xlu0 %2825
    %v2828 = vmul.f32 %v2823, %v2826
    %v2829 = vld [vmem:[#allocation37] sm:$0xff]
    %v2830 = vld [vmem:[#allocation38] sm:$0x1]
    %v2832 = vlaneseq
    %v2833 = vshrl.u32 %v2832, 7
    %v2834 = vsub.s32 0, %v2833
    %v2835 = vrot.slane %v2830, %v2834
    %v2838 = vsel %vm916, %v2828, 0
    %2840 = vmatprep.subr.mxu0 0.0
    %2841 = vmatpush1.msra.mxu0 0.0
    %2842 = vmatprep.subr.mxu0 0.0
    %2843 = vmatpush1.msra.mxu0 0.0
    %2844 = vmatprep.subr.mxu0 0.0
    %2845 = vmatpush1.msra.mxu0 0.0
    %2846 = vmatprep.subr.mxu0 0.0
    %2847 = vmatpush1.msra.mxu0 0.0
    %2848 = vmatprep.subr.mxu0 0.0
    %2849 = vmatpush1.msra.mxu0 0.0
    %2850 = vmatprep.subr.mxu0 0.0
    %2851 = vmatpush1.msra.mxu0 0.0
    %2852 = vmatprep.subr.mxu0 0.0
    %2853 = vmatpush1.msra.mxu0 0.0
    %2854 = vmatprep.subr.mxu0 0.0
    %2855 = vmatpush1.msra.mxu0 0.0
    %2856 = vmatprep.subr.mxu0 0.0
    %2857 = vmatpush1.msra.mxu0 0.0
    %2858 = vmatprep.subr.mxu0 0.0
    %2859 = vmatpush1.msra.mxu0 0.0
    %2860 = vmatprep.subr.mxu0 0.0
    %2861 = vmatpush1.msra.mxu0 0.0
    %2862 = vmatprep.subr.mxu0 0.0
    %2863 = vmatpush1.msra.mxu0 0.0
    %2864 = vmatprep.subr.mxu0 0.0
    %2865 = vmatpush1.msra.mxu0 0.0
    %2866 = vmatprep.subr.mxu0 0.0
    %2867 = vmatpush1.msra.mxu0 0.0
    %2868 = vmatprep.subr.mxu0 0.0
    %2869 = vmatpush1.msra.mxu0 0.0
    %2870 = vmatprep.subr.mxu0 0.0
    %2871 = vmatpush1.msra.mxu0 %v2829
    %2872 = vmatprep.subr.mxu0 0.0
    %2873 = vmatpush2.msra.mxu0 0.0
    %2874 = vmatprep.subr.mxu0 0.0
    %2875 = vmatpush2.msra.mxu0 0.0
    %2876 = vmatprep.subr.mxu0 0.0
    %2877 = vmatpush2.msra.mxu0 0.0
    %2878 = vmatprep.subr.mxu0 0.0
    %2879 = vmatpush2.msra.mxu0 0.0
    %2880 = vmatprep.subr.mxu0 0.0
    %2881 = vmatpush2.msra.mxu0 0.0
    %2882 = vmatprep.subr.mxu0 0.0
    %2883 = vmatpush2.msra.mxu0 0.0
    %2884 = vmatprep.subr.mxu0 0.0
    %2885 = vmatpush2.msra.mxu0 0.0
    %2886 = vmatprep.subr.mxu0 0.0
    %2887 = vmatpush2.msra.mxu0 0.0
    %2888 = vmatprep.subr.mxu0 0.0
    %2889 = vmatpush2.msra.mxu0 0.0
    %2890 = vmatprep.subr.mxu0 0.0
    %2891 = vmatpush2.msra.mxu0 0.0
    %2892 = vmatprep.subr.mxu0 0.0
    %2893 = vmatpush2.msra.mxu0 0.0
    %2894 = vmatprep.subr.mxu0 0.0
    %2895 = vmatpush2.msra.mxu0 0.0
    %2896 = vmatprep.subr.mxu0 0.0
    %2897 = vmatpush2.msra.mxu0 0.0
    %2898 = vmatprep.subr.mxu0 0.0
    %2899 = vmatpush2.msra.mxu0 0.0
    %2900 = vmatprep.subr.mxu0 0.0
    %2901 = vmatpush2.msra.mxu0 0.0
    %2902 = vmatprep.subr.mxu0 0.0
    %2903 = vmatpush2.msra.mxu0 0.0
    %2904 = vmatprep.mubr.f32.mxu0 0.0
    %2905 = vmatmul.mubr.f32.gmra.mxu0 %v2838
    %v2906 = vpop.f32.mrf.mxu0
    %v2907 = vadd.f32 %v2835, %v2906
    %v2908 = vpop.f32.mrf.mxu0
    %2909 = vdwg.mxu0
    %v2910 = vxor.u32 %v2907, 2147483648
    %v2911 = vmul.f32 %v2910, 1.442695
    %v2912 = vpow.pop %v2911
    %v2913 = vadd.f32 %v2912, 1.0
    %v2914 = vrcp.pop %v2913
    %v2915 = vmul.f32 1.0, %v2914
    %v2916 = vmul.f32 %v2907, %v2915
    %v2917 = vld [vmem:[#allocation40] sm:$0xff]
    %2918 = vrot.lane.b32.xlu0 %v1113, 120
    %v2919 = vpop.permute.xlu0 %2918
    %v2922 = vsel %vm916, %v2916, 0
    %2924 = vmatprep.subr.mxu0 0.0
    %2925 = vmatpush1.msra.mxu0 0.0
    %2926 = vmatprep.subr.mxu0 0.0
    %2927 = vmatpush1.msra.mxu0 0.0
    %2928 = vmatprep.subr.mxu0 0.0
    %2929 = vmatpush1.msra.mxu0 0.0
    %2930 = vmatprep.subr.mxu0 0.0
    %2931 = vmatpush1.msra.mxu0 0.0
    %2932 = vmatprep.subr.mxu0 0.0
    %2933 = vmatpush1.msra.mxu0 0.0
    %2934 = vmatprep.subr.mxu0 0.0
    %2935 = vmatpush1.msra.mxu0 0.0
    %2936 = vmatprep.subr.mxu0 0.0
    %2937 = vmatpush1.msra.mxu0 0.0
    %2938 = vmatprep.subr.mxu0 0.0
    %2939 = vmatpush1.msra.mxu0 0.0
    %2940 = vmatprep.subr.mxu0 0.0
    %2941 = vmatpush1.msra.mxu0 0.0
    %2942 = vmatprep.subr.mxu0 0.0
    %2943 = vmatpush1.msra.mxu0 0.0
    %2944 = vmatprep.subr.mxu0 0.0
    %2945 = vmatpush1.msra.mxu0 0.0
    %2946 = vmatprep.subr.mxu0 0.0
    %2947 = vmatpush1.msra.mxu0 0.0
    %2948 = vmatprep.subr.mxu0 0.0
    %2949 = vmatpush1.msra.mxu0 0.0
    %2950 = vmatprep.subr.mxu0 0.0
    %2951 = vmatpush1.msra.mxu0 0.0
    %2952 = vmatprep.subr.mxu0 0.0
    %2953 = vmatpush1.msra.mxu0 0.0
    %2954 = vmatprep.subr.mxu0 0.0
    %2955 = vmatpush1.msra.mxu0 %v2917
    %2956 = vmatprep.subr.mxu0 0.0
    %2957 = vmatpush2.msra.mxu0 0.0
    %2958 = vmatprep.subr.mxu0 0.0
    %2959 = vmatpush2.msra.mxu0 0.0
    %2960 = vmatprep.subr.mxu0 0.0
    %2961 = vmatpush2.msra.mxu0 0.0
    %2962 = vmatprep.subr.mxu0 0.0
    %2963 = vmatpush2.msra.mxu0 0.0
    %2964 = vmatprep.subr.mxu0 0.0
    %2965 = vmatpush2.msra.mxu0 0.0
    %2966 = vmatprep.subr.mxu0 0.0
    %2967 = vmatpush2.msra.mxu0 0.0
    %2968 = vmatprep.subr.mxu0 0.0
    %2969 = vmatpush2.msra.mxu0 0.0
    %2970 = vmatprep.subr.mxu0 0.0
    %2971 = vmatpush2.msra.mxu0 0.0
    %2972 = vmatprep.subr.mxu0 0.0
    %2973 = vmatpush2.msra.mxu0 0.0
    %2974 = vmatprep.subr.mxu0 0.0
    %2975 = vmatpush2.msra.mxu0 0.0
    %2976 = vmatprep.subr.mxu0 0.0
    %2977 = vmatpush2.msra.mxu0 0.0
    %2978 = vmatprep.subr.mxu0 0.0
    %2979 = vmatpush2.msra.mxu0 0.0
    %2980 = vmatprep.subr.mxu0 0.0
    %2981 = vmatpush2.msra.mxu0 0.0
    %2982 = vmatprep.subr.mxu0 0.0
    %2983 = vmatpush2.msra.mxu0 0.0
    %2984 = vmatprep.subr.mxu0 0.0
    %2985 = vmatpush2.msra.mxu0 0.0
    %2986 = vmatprep.subr.mxu0 0.0
    %2987 = vmatpush2.msra.mxu0 0.0
    %2988 = vmatprep.mubr.f32.mxu0 0.0
    %2989 = vmatmul.mubr.f32.gmra.mxu0 %v2922
    %v2990 = vpop.f32.mrf.mxu0
    %v2991 = vadd.f32 %v2919, %v2990
    %v2992 = vpop.f32.mrf.mxu0
    %2993 = vdwg.mxu0
    %v2994 = vxor.u32 %v2991, 2147483648
    %v2995 = vmul.f32 %v2994, 1.442695
    %v2996 = vpow.pop %v2995
    %v2997 = vadd.f32 %v2996, 1.0
    %v2998 = vrcp.pop %v2997
    %v2999 = vmul.f32 1.0, %v2998
    %v3000 = vmul.f32 %v2991, %v2999
    %3002 = vrot.lane.b32.xlu0 %v2991, 120
    %v3003 = vpop.permute.xlu0 %3002
    %v3005 = vmul.f32 %v3000, %v3003
    %v3006 = vld [vmem:[#allocation41] sm:$0xff]
    %v3007 = vld [vmem:[#allocation43] sm:$0x1]
    %v3009 = vlaneseq
    %v3010 = vshrl.u32 %v3009, 7
    %v3011 = vsub.s32 0, %v3010
    %v3012 = vrot.slane %v3007, %v3011
    %v3015 = vsel %vm916, %v3005, 0
    %3017 = vmatprep.subr.mxu0 0.0
    %3018 = vmatpush1.msra.mxu0 0.0
    %3019 = vmatprep.subr.mxu0 0.0
    %3020 = vmatpush1.msra.mxu0 0.0
    %3021 = vmatprep.subr.mxu0 0.0
    %3022 = vmatpush1.msra.mxu0 0.0
    %3023 = vmatprep.subr.mxu0 0.0
    %3024 = vmatpush1.msra.mxu0 0.0
    %3025 = vmatprep.subr.mxu0 0.0
    %3026 = vmatpush1.msra.mxu0 0.0
    %3027 = vmatprep.subr.mxu0 0.0
    %3028 = vmatpush1.msra.mxu0 0.0
    %3029 = vmatprep.subr.mxu0 0.0
    %3030 = vmatpush1.msra.mxu0 0.0
    %3031 = vmatprep.subr.mxu0 0.0
    %3032 = vmatpush1.msra.mxu0 0.0
    %3033 = vmatprep.subr.mxu0 0.0
    %3034 = vmatpush1.msra.mxu0 0.0
    %3035 = vmatprep.subr.mxu0 0.0
    %3036 = vmatpush1.msra.mxu0 0.0
    %3037 = vmatprep.subr.mxu0 0.0
    %3038 = vmatpush1.msra.mxu0 0.0
    %3039 = vmatprep.subr.mxu0 0.0
    %3040 = vmatpush1.msra.mxu0 0.0
    %3041 = vmatprep.subr.mxu0 0.0
    %3042 = vmatpush1.msra.mxu0 0.0
    %3043 = vmatprep.subr.mxu0 0.0
    %3044 = vmatpush1.msra.mxu0 0.0
    %3045 = vmatprep.subr.mxu0 0.0
    %3046 = vmatpush1.msra.mxu0 0.0
    %3047 = vmatprep.subr.mxu0 0.0
    %3048 = vmatpush1.msra.mxu0 %v3006
    %3049 = vmatprep.subr.mxu0 0.0
    %3050 = vmatpush2.msra.mxu0 0.0
    %3051 = vmatprep.subr.mxu0 0.0
    %3052 = vmatpush2.msra.mxu0 0.0
    %3053 = vmatprep.subr.mxu0 0.0
    %3054 = vmatpush2.msra.mxu0 0.0
    %3055 = vmatprep.subr.mxu0 0.0
    %3056 = vmatpush2.msra.mxu0 0.0
    %3057 = vmatprep.subr.mxu0 0.0
    %3058 = vmatpush2.msra.mxu0 0.0
    %3059 = vmatprep.subr.mxu0 0.0
    %3060 = vmatpush2.msra.mxu0 0.0
    %3061 = vmatprep.subr.mxu0 0.0
    %3062 = vmatpush2.msra.mxu0 0.0
    %3063 = vmatprep.subr.mxu0 0.0
    %3064 = vmatpush2.msra.mxu0 0.0
    %3065 = vmatprep.subr.mxu0 0.0
    %3066 = vmatpush2.msra.mxu0 0.0
    %3067 = vmatprep.subr.mxu0 0.0
    %3068 = vmatpush2.msra.mxu0 0.0
    %3069 = vmatprep.subr.mxu0 0.0
    %3070 = vmatpush2.msra.mxu0 0.0
    %3071 = vmatprep.subr.mxu0 0.0
    %3072 = vmatpush2.msra.mxu0 0.0
    %3073 = vmatprep.subr.mxu0 0.0
    %3074 = vmatpush2.msra.mxu0 0.0
    %3075 = vmatprep.subr.mxu0 0.0
    %3076 = vmatpush2.msra.mxu0 0.0
    %3077 = vmatprep.subr.mxu0 0.0
    %3078 = vmatpush2.msra.mxu0 0.0
    %3079 = vmatprep.subr.mxu0 0.0
    %3080 = vmatpush2.msra.mxu0 0.0
    %3081 = vmatprep.mubr.f32.mxu0 0.0
    %3082 = vmatmul.mubr.f32.gmra.mxu0 %v3015
    %v3083 = vpop.f32.mrf.mxu0
    %v3084 = vadd.f32 %v3012, %v3083
    %v3085 = vpop.f32.mrf.mxu0
    %3086 = vdwg.mxu0
    %v3087 = vadd.f32 %v2907, %v3084
    %v3088 = vadd.f32 %v3087, %v2371
    %v3089 = vld [vmem:[#allocation44] sm:$0xff]
    %3090 = vrot.lane.b32.xlu0 %v1113, 104
    %v3091 = vpop.permute.xlu0 %3090
    %v3094 = vsel %vm916, %v3088, 0
    %3096 = vmatprep.subr.mxu0 0.0
    %3097 = vmatpush1.msra.mxu0 0.0
    %3098 = vmatprep.subr.mxu0 0.0
    %3099 = vmatpush1.msra.mxu0 0.0
    %3100 = vmatprep.subr.mxu0 0.0
    %3101 = vmatpush1.msra.mxu0 0.0
    %3102 = vmatprep.subr.mxu0 0.0
    %3103 = vmatpush1.msra.mxu0 0.0
    %3104 = vmatprep.subr.mxu0 0.0
    %3105 = vmatpush1.msra.mxu0 0.0
    %3106 = vmatprep.subr.mxu0 0.0
    %3107 = vmatpush1.msra.mxu0 0.0
    %3108 = vmatprep.subr.mxu0 0.0
    %3109 = vmatpush1.msra.mxu0 0.0
    %3110 = vmatprep.subr.mxu0 0.0
    %3111 = vmatpush1.msra.mxu0 0.0
    %3112 = vmatprep.subr.mxu0 0.0
    %3113 = vmatpush1.msra.mxu0 0.0
    %3114 = vmatprep.subr.mxu0 0.0
    %3115 = vmatpush1.msra.mxu0 0.0
    %3116 = vmatprep.subr.mxu0 0.0
    %3117 = vmatpush1.msra.mxu0 0.0
    %3118 = vmatprep.subr.mxu0 0.0
    %3119 = vmatpush1.msra.mxu0 0.0
    %3120 = vmatprep.subr.mxu0 0.0
    %3121 = vmatpush1.msra.mxu0 0.0
    %3122 = vmatprep.subr.mxu0 0.0
    %3123 = vmatpush1.msra.mxu0 0.0
    %3124 = vmatprep.subr.mxu0 0.0
    %3125 = vmatpush1.msra.mxu0 0.0
    %3126 = vmatprep.subr.mxu0 0.0
    %3127 = vmatpush1.msra.mxu0 %v3089
    %3128 = vmatprep.subr.mxu0 0.0
    %3129 = vmatpush2.msra.mxu0 0.0
    %3130 = vmatprep.subr.mxu0 0.0
    %3131 = vmatpush2.msra.mxu0 0.0
    %3132 = vmatprep.subr.mxu0 0.0
    %3133 = vmatpush2.msra.mxu0 0.0
    %3134 = vmatprep.subr.mxu0 0.0
    %3135 = vmatpush2.msra.mxu0 0.0
    %3136 = vmatprep.subr.mxu0 0.0
    %3137 = vmatpush2.msra.mxu0 0.0
    %3138 = vmatprep.subr.mxu0 0.0
    %3139 = vmatpush2.msra.mxu0 0.0
    %3140 = vmatprep.subr.mxu0 0.0
    %3141 = vmatpush2.msra.mxu0 0.0
    %3142 = vmatprep.subr.mxu0 0.0
    %3143 = vmatpush2.msra.mxu0 0.0
    %3144 = vmatprep.subr.mxu0 0.0
    %3145 = vmatpush2.msra.mxu0 0.0
    %3146 = vmatprep.subr.mxu0 0.0
    %3147 = vmatpush2.msra.mxu0 0.0
    %3148 = vmatprep.subr.mxu0 0.0
    %3149 = vmatpush2.msra.mxu0 0.0
    %3150 = vmatprep.subr.mxu0 0.0
    %3151 = vmatpush2.msra.mxu0 0.0
    %3152 = vmatprep.subr.mxu0 0.0
    %3153 = vmatpush2.msra.mxu0 0.0
    %3154 = vmatprep.subr.mxu0 0.0
    %3155 = vmatpush2.msra.mxu0 0.0
    %3156 = vmatprep.subr.mxu0 0.0
    %3157 = vmatpush2.msra.mxu0 0.0
    %3158 = vmatprep.subr.mxu0 0.0
    %3159 = vmatpush2.msra.mxu0 0.0
    %3160 = vmatprep.mubr.f32.mxu0 0.0
    %3161 = vmatmul.mubr.f32.gmra.mxu0 %v3094
    %v3162 = vpop.f32.mrf.mxu0
    %v3163 = vadd.f32 %v3091, %v3162
    %v3164 = vpop.f32.mrf.mxu0
    %3165 = vdwg.mxu0
    %v3166 = vxor.u32 %v3163, 2147483648
    %v3167 = vmul.f32 %v3166, 1.442695
    %v3168 = vpow.pop %v3167
    %v3169 = vadd.f32 %v3168, 1.0
    %v3170 = vrcp.pop %v3169
    %v3171 = vmul.f32 1.0, %v3170
    %v3172 = vmul.f32 %v3163, %v3171
    %3174 = vrot.lane.b32.xlu0 %v3163, 112
    %v3175 = vpop.permute.xlu0 %3174
    %v3177 = vmul.f32 %v3172, %v3175
    %v3178 = vld [vmem:[#allocation46] sm:$0xff]
    %v3179 = vld [vmem:[#allocation46 + $0x8] sm:$0xff]
    %v3180 = vld [vmem:[#allocation47] sm:$0x1]
    %v3182 = vlaneseq
    %v3183 = vshrl.u32 %v3182, 7
    %v3184 = vsub.s32 0, %v3183
    %v3185 = vrot.slane %v3180, %v3184
    %v3188 = vsel %vm1408, %v3177, 0
    %3190 = vmatprep.subr.mxu0 0.0
    %3191 = vmatpush1.msra.mxu0 0.0
    %3192 = vmatprep.subr.mxu0 0.0
    %3193 = vmatpush1.msra.mxu0 0.0
    %3194 = vmatprep.subr.mxu0 0.0
    %3195 = vmatpush1.msra.mxu0 0.0
    %3196 = vmatprep.subr.mxu0 0.0
    %3197 = vmatpush1.msra.mxu0 0.0
    %3198 = vmatprep.subr.mxu0 0.0
    %3199 = vmatpush1.msra.mxu0 0.0
    %3200 = vmatprep.subr.mxu0 0.0
    %3201 = vmatpush1.msra.mxu0 0.0
    %3202 = vmatprep.subr.mxu0 0.0
    %3203 = vmatpush1.msra.mxu0 0.0
    %3204 = vmatprep.subr.mxu0 0.0
    %3205 = vmatpush1.msra.mxu0 0.0
    %3206 = vmatprep.subr.mxu0 0.0
    %3207 = vmatpush1.msra.mxu0 0.0
    %3208 = vmatprep.subr.mxu0 0.0
    %3209 = vmatpush1.msra.mxu0 0.0
    %3210 = vmatprep.subr.mxu0 0.0
    %3211 = vmatpush1.msra.mxu0 0.0
    %3212 = vmatprep.subr.mxu0 0.0
    %3213 = vmatpush1.msra.mxu0 0.0
    %3214 = vmatprep.subr.mxu0 0.0
    %3215 = vmatpush1.msra.mxu0 0.0
    %3216 = vmatprep.subr.mxu0 0.0
    %3217 = vmatpush1.msra.mxu0 0.0
    %3218 = vmatprep.subr.mxu0 0.0
    %3219 = vmatpush1.msra.mxu0 %v3179
    %3220 = vmatprep.subr.mxu0 0.0
    %3221 = vmatpush1.msra.mxu0 %v3178
    %3222 = vmatprep.subr.mxu0 0.0
    %3223 = vmatpush2.msra.mxu0 0.0
    %3224 = vmatprep.subr.mxu0 0.0
    %3225 = vmatpush2.msra.mxu0 0.0
    %3226 = vmatprep.subr.mxu0 0.0
    %3227 = vmatpush2.msra.mxu0 0.0
    %3228 = vmatprep.subr.mxu0 0.0
    %3229 = vmatpush2.msra.mxu0 0.0
    %3230 = vmatprep.subr.mxu0 0.0
    %3231 = vmatpush2.msra.mxu0 0.0
    %3232 = vmatprep.subr.mxu0 0.0
    %3233 = vmatpush2.msra.mxu0 0.0
    %3234 = vmatprep.subr.mxu0 0.0
    %3235 = vmatpush2.msra.mxu0 0.0
    %3236 = vmatprep.subr.mxu0 0.0
    %3237 = vmatpush2.msra.mxu0 0.0
    %3238 = vmatprep.subr.mxu0 0.0
    %3239 = vmatpush2.msra.mxu0 0.0
    %3240 = vmatprep.subr.mxu0 0.0
    %3241 = vmatpush2.msra.mxu0 0.0
    %3242 = vmatprep.subr.mxu0 0.0
    %3243 = vmatpush2.msra.mxu0 0.0
    %3244 = vmatprep.subr.mxu0 0.0
    %3245 = vmatpush2.msra.mxu0 0.0
    %3246 = vmatprep.subr.mxu0 0.0
    %3247 = vmatpush2.msra.mxu0 0.0
    %3248 = vmatprep.subr.mxu0 0.0
    %3249 = vmatpush2.msra.mxu0 0.0
    %3250 = vmatprep.subr.mxu0 0.0
    %3251 = vmatpush2.msra.mxu0 0.0
    %3252 = vmatprep.subr.mxu0 0.0
    %3253 = vmatpush2.msra.mxu0 0.0
    %3254 = vmatprep.mubr.f32.mxu0 0.0
    %3255 = vmatmul.mubr.f32.gmra.mxu0 %v3188
    %v3256 = vpop.f32.mrf.mxu0
    %v3257 = vadd.f32 %v3185, %v3256
    %v3258 = vpop.f32.mrf.mxu0
    %3259 = vdwg.mxu0
    %v3260 = vxor.u32 %v3257, 2147483648
    %v3261 = vmul.f32 %v3260, 1.442695
    %v3262 = vpow.pop %v3261
    %v3263 = vadd.f32 %v3262, 1.0
    %v3264 = vrcp.pop %v3263
    %v3265 = vmul.f32 1.0, %v3264
    %v3266 = vmul.f32 %v3257, %v3265
    %v3267 = vld [vmem:[#allocation49] sm:$0xff]
    %v3268 = vld [vmem:[#allocation49 + $0x8] sm:$0xff]
    %3269 = vrot.lane.b32.xlu0 %v1113, 72
    %v3270 = vpop.permute.xlu0 %3269
    %v3273 = vsel %vm1408, %v3266, 0
    %3275 = vmatprep.subr.mxu0 0.0
    %3276 = vmatpush1.msra.mxu0 0.0
    %3277 = vmatprep.subr.mxu0 0.0
    %3278 = vmatpush1.msra.mxu0 0.0
    %3279 = vmatprep.subr.mxu0 0.0
    %3280 = vmatpush1.msra.mxu0 0.0
    %3281 = vmatprep.subr.mxu0 0.0
    %3282 = vmatpush1.msra.mxu0 0.0
    %3283 = vmatprep.subr.mxu0 0.0
    %3284 = vmatpush1.msra.mxu0 0.0
    %3285 = vmatprep.subr.mxu0 0.0
    %3286 = vmatpush1.msra.mxu0 0.0
    %3287 = vmatprep.subr.mxu0 0.0
    %3288 = vmatpush1.msra.mxu0 0.0
    %3289 = vmatprep.subr.mxu0 0.0
    %3290 = vmatpush1.msra.mxu0 0.0
    %3291 = vmatprep.subr.mxu0 0.0
    %3292 = vmatpush1.msra.mxu0 0.0
    %3293 = vmatprep.subr.mxu0 0.0
    %3294 = vmatpush1.msra.mxu0 0.0
    %3295 = vmatprep.subr.mxu0 0.0
    %3296 = vmatpush1.msra.mxu0 0.0
    %3297 = vmatprep.subr.mxu0 0.0
    %3298 = vmatpush1.msra.mxu0 0.0
    %3299 = vmatprep.subr.mxu0 0.0
    %3300 = vmatpush1.msra.mxu0 0.0
    %3301 = vmatprep.subr.mxu0 0.0
    %3302 = vmatpush1.msra.mxu0 0.0
    %3303 = vmatprep.subr.mxu0 0.0
    %3304 = vmatpush1.msra.mxu0 %v3268
    %3305 = vmatprep.subr.mxu0 0.0
    %3306 = vmatpush1.msra.mxu0 %v3267
    %3307 = vmatprep.subr.mxu0 0.0
    %3308 = vmatpush2.msra.mxu0 0.0
    %3309 = vmatprep.subr.mxu0 0.0
    %3310 = vmatpush2.msra.mxu0 0.0
    %3311 = vmatprep.subr.mxu0 0.0
    %3312 = vmatpush2.msra.mxu0 0.0
    %3313 = vmatprep.subr.mxu0 0.0
    %3314 = vmatpush2.msra.mxu0 0.0
    %3315 = vmatprep.subr.mxu0 0.0
    %3316 = vmatpush2.msra.mxu0 0.0
    %3317 = vmatprep.subr.mxu0 0.0
    %3318 = vmatpush2.msra.mxu0 0.0
    %3319 = vmatprep.subr.mxu0 0.0
    %3320 = vmatpush2.msra.mxu0 0.0
    %3321 = vmatprep.subr.mxu0 0.0
    %3322 = vmatpush2.msra.mxu0 0.0
    %3323 = vmatprep.subr.mxu0 0.0
    %3324 = vmatpush2.msra.mxu0 0.0
    %3325 = vmatprep.subr.mxu0 0.0
    %3326 = vmatpush2.msra.mxu0 0.0
    %3327 = vmatprep.subr.mxu0 0.0
    %3328 = vmatpush2.msra.mxu0 0.0
    %3329 = vmatprep.subr.mxu0 0.0
    %3330 = vmatpush2.msra.mxu0 0.0
    %3331 = vmatprep.subr.mxu0 0.0
    %3332 = vmatpush2.msra.mxu0 0.0
    %3333 = vmatprep.subr.mxu0 0.0
    %3334 = vmatpush2.msra.mxu0 0.0
    %3335 = vmatprep.subr.mxu0 0.0
    %3336 = vmatpush2.msra.mxu0 0.0
    %3337 = vmatprep.subr.mxu0 0.0
    %3338 = vmatpush2.msra.mxu0 0.0
    %3339 = vmatprep.mubr.f32.mxu0 0.0
    %3340 = vmatmul.mubr.f32.gmra.mxu0 %v3273
    %v3341 = vpop.f32.mrf.mxu0
    %v3342 = vadd.f32 %v3270, %v3341
    %v3343 = vpop.f32.mrf.mxu0
    %3344 = vdwg.mxu0
    %v3345 = vxor.u32 %v3342, 2147483648
    %v3346 = vmul.f32 %v3345, 1.442695
    %v3347 = vpow.pop %v3346
    %v3348 = vadd.f32 %v3347, 1.0
    %v3349 = vrcp.pop %v3348
    %v3350 = vmul.f32 1.0, %v3349
    %v3351 = vmul.f32 %v3342, %v3350
    %3353 = vrot.lane.b32.xlu0 %v3342, 112
    %v3354 = vpop.permute.xlu0 %3353
    %v3356 = vmul.f32 %v3351, %v3354
    %v3357 = vld [vmem:[#allocation50] sm:$0xff]
    %v3358 = vld [vmem:[#allocation50 + $0x8] sm:$0xff]
    %v3359 = vld [vmem:[#allocation52] sm:$0x1]
    %v3361 = vlaneseq
    %v3362 = vshrl.u32 %v3361, 7
    %v3363 = vsub.s32 0, %v3362
    %v3364 = vrot.slane %v3359, %v3363
    %v3367 = vsel %vm1408, %v3356, 0
    %3369 = vmatprep.subr.mxu0 0.0
    %3370 = vmatpush1.msra.mxu0 0.0
    %3371 = vmatprep.subr.mxu0 0.0
    %3372 = vmatpush1.msra.mxu0 0.0
    %3373 = vmatprep.subr.mxu0 0.0
    %3374 = vmatpush1.msra.mxu0 0.0
    %3375 = vmatprep.subr.mxu0 0.0
    %3376 = vmatpush1.msra.mxu0 0.0
    %3377 = vmatprep.subr.mxu0 0.0
    %3378 = vmatpush1.msra.mxu0 0.0
    %3379 = vmatprep.subr.mxu0 0.0
    %3380 = vmatpush1.msra.mxu0 0.0
    %3381 = vmatprep.subr.mxu0 0.0
    %3382 = vmatpush1.msra.mxu0 0.0
    %3383 = vmatprep.subr.mxu0 0.0
    %3384 = vmatpush1.msra.mxu0 0.0
    %3385 = vmatprep.subr.mxu0 0.0
    %3386 = vmatpush1.msra.mxu0 0.0
    %3387 = vmatprep.subr.mxu0 0.0
    %3388 = vmatpush1.msra.mxu0 0.0
    %3389 = vmatprep.subr.mxu0 0.0
    %3390 = vmatpush1.msra.mxu0 0.0
    %3391 = vmatprep.subr.mxu0 0.0
    %3392 = vmatpush1.msra.mxu0 0.0
    %3393 = vmatprep.subr.mxu0 0.0
    %3394 = vmatpush1.msra.mxu0 0.0
    %3395 = vmatprep.subr.mxu0 0.0
    %3396 = vmatpush1.msra.mxu0 0.0
    %3397 = vmatprep.subr.mxu0 0.0
    %3398 = vmatpush1.msra.mxu0 %v3358
    %3399 = vmatprep.subr.mxu0 0.0
    %3400 = vmatpush1.msra.mxu0 %v3357
    %3401 = vmatprep.subr.mxu0 0.0
    %3402 = vmatpush2.msra.mxu0 0.0
    %3403 = vmatprep.subr.mxu0 0.0
    %3404 = vmatpush2.msra.mxu0 0.0
    %3405 = vmatprep.subr.mxu0 0.0
    %3406 = vmatpush2.msra.mxu0 0.0
    %3407 = vmatprep.subr.mxu0 0.0
    %3408 = vmatpush2.msra.mxu0 0.0
    %3409 = vmatprep.subr.mxu0 0.0
    %3410 = vmatpush2.msra.mxu0 0.0
    %3411 = vmatprep.subr.mxu0 0.0
    %3412 = vmatpush2.msra.mxu0 0.0
    %3413 = vmatprep.subr.mxu0 0.0
    %3414 = vmatpush2.msra.mxu0 0.0
    %3415 = vmatprep.subr.mxu0 0.0
    %3416 = vmatpush2.msra.mxu0 0.0
    %3417 = vmatprep.subr.mxu0 0.0
    %3418 = vmatpush2.msra.mxu0 0.0
    %3419 = vmatprep.subr.mxu0 0.0
    %3420 = vmatpush2.msra.mxu0 0.0
    %3421 = vmatprep.subr.mxu0 0.0
    %3422 = vmatpush2.msra.mxu0 0.0
    %3423 = vmatprep.subr.mxu0 0.0
    %3424 = vmatpush2.msra.mxu0 0.0
    %3425 = vmatprep.subr.mxu0 0.0
    %3426 = vmatpush2.msra.mxu0 0.0
    %3427 = vmatprep.subr.mxu0 0.0
    %3428 = vmatpush2.msra.mxu0 0.0
    %3429 = vmatprep.subr.mxu0 0.0
    %3430 = vmatpush2.msra.mxu0 0.0
    %3431 = vmatprep.subr.mxu0 0.0
    %3432 = vmatpush2.msra.mxu0 0.0
    %3433 = vmatprep.mubr.f32.mxu0 0.0
    %3434 = vmatmul.mubr.f32.gmra.mxu0 %v3367
    %v3435 = vpop.f32.mrf.mxu0
    %v3436 = vadd.f32 %v3364, %v3435
    %v3437 = vpop.f32.mrf.mxu0
    %3438 = vdwg.mxu0
    %v3439 = vadd.f32 %v3257, %v3436
    %v3440 = vadd.f32 %v2017, %v3439
    %v3441 = vld [vmem:[#allocation53] sm:$0xff]
    %v3442 = vld [vmem:[#allocation53 + $0x8] sm:$0xff]
    %3444 = vrot.lane.b32.xlu0 %v1113, 40
    %v3445 = vpop.permute.xlu0 %3444
    %3446 = vrot.lane.b32.xlu0 %v1115, 40
    %v3447 = vpop.permute.xlu0 %3446
    %vm3448 = vcmask 326656
    %v3449 = vsel %vm3448, %v3445, %v3447
    %v3452 = vsel %vm1408, %v3440, 0
    %3454 = vmatprep.subr.mxu0 0.0
    %3455 = vmatpush1.msra.mxu0 0.0
    %3456 = vmatprep.subr.mxu0 0.0
    %3457 = vmatpush1.msra.mxu0 0.0
    %3458 = vmatprep.subr.mxu0 0.0
    %3459 = vmatpush1.msra.mxu0 0.0
    %3460 = vmatprep.subr.mxu0 0.0
    %3461 = vmatpush1.msra.mxu0 0.0
    %3462 = vmatprep.subr.mxu0 0.0
    %3463 = vmatpush1.msra.mxu0 0.0
    %3464 = vmatprep.subr.mxu0 0.0
    %3465 = vmatpush1.msra.mxu0 0.0
    %3466 = vmatprep.subr.mxu0 0.0
    %3467 = vmatpush1.msra.mxu0 0.0
    %3468 = vmatprep.subr.mxu0 0.0
    %3469 = vmatpush1.msra.mxu0 0.0
    %3470 = vmatprep.subr.mxu0 0.0
    %3471 = vmatpush1.msra.mxu0 0.0
    %3472 = vmatprep.subr.mxu0 0.0
    %3473 = vmatpush1.msra.mxu0 0.0
    %3474 = vmatprep.subr.mxu0 0.0
    %3475 = vmatpush1.msra.mxu0 0.0
    %3476 = vmatprep.subr.mxu0 0.0
    %3477 = vmatpush1.msra.mxu0 0.0
    %3478 = vmatprep.subr.mxu0 0.0
    %3479 = vmatpush1.msra.mxu0 0.0
    %3480 = vmatprep.subr.mxu0 0.0
    %3481 = vmatpush1.msra.mxu0 0.0
    %3482 = vmatprep.subr.mxu0 0.0
    %3483 = vmatpush1.msra.mxu0 %v3442
    %3484 = vmatprep.subr.mxu0 0.0
    %3485 = vmatpush1.msra.mxu0 %v3441
    %3486 = vmatprep.subr.mxu0 0.0
    %3487 = vmatpush2.msra.mxu0 0.0
    %3488 = vmatprep.subr.mxu0 0.0
    %3489 = vmatpush2.msra.mxu0 0.0
    %3490 = vmatprep.subr.mxu0 0.0
    %3491 = vmatpush2.msra.mxu0 0.0
    %3492 = vmatprep.subr.mxu0 0.0
    %3493 = vmatpush2.msra.mxu0 0.0
    %3494 = vmatprep.subr.mxu0 0.0
    %3495 = vmatpush2.msra.mxu0 0.0
    %3496 = vmatprep.subr.mxu0 0.0
    %3497 = vmatpush2.msra.mxu0 0.0
    %3498 = vmatprep.subr.mxu0 0.0
    %3499 = vmatpush2.msra.mxu0 0.0
    %3500 = vmatprep.subr.mxu0 0.0
    %3501 = vmatpush2.msra.mxu0 0.0
    %3502 = vmatprep.subr.mxu0 0.0
    %3503 = vmatpush2.msra.mxu0 0.0
    %3504 = vmatprep.subr.mxu0 0.0
    %3505 = vmatpush2.msra.mxu0 0.0
    %3506 = vmatprep.subr.mxu0 0.0
    %3507 = vmatpush2.msra.mxu0 0.0
    %3508 = vmatprep.subr.mxu0 0.0
    %3509 = vmatpush2.msra.mxu0 0.0
    %3510 = vmatprep.subr.mxu0 0.0
    %3511 = vmatpush2.msra.mxu0 0.0
    %3512 = vmatprep.subr.mxu0 0.0
    %3513 = vmatpush2.msra.mxu0 0.0
    %3514 = vmatprep.subr.mxu0 0.0
    %3515 = vmatpush2.msra.mxu0 0.0
    %3516 = vmatprep.subr.mxu0 0.0
    %3517 = vmatpush2.msra.mxu0 0.0
    %3518 = vmatprep.mubr.f32.mxu0 0.0
    %3519 = vmatmul.mubr.f32.gmra.mxu0 %v3452
    %v3520 = vpop.f32.mrf.mxu0
    %v3521 = vadd.f32 %v3449, %v3520
    %v3522 = vpop.f32.mrf.mxu0
    %3523 = vdwg.mxu0
    %v3524 = vxor.u32 %v3521, 2147483648
    %v3525 = vmul.f32 %v3524, 1.442695
    %v3526 = vpow.pop %v3525
    %v3527 = vadd.f32 %v3526, 1.0
    %v3528 = vrcp.pop %v3527
    %v3529 = vmul.f32 1.0, %v3528
    %v3530 = vmul.f32 %v3521, %v3529
    %3532 = vrot.lane.b32.xlu0 %v3521, 96
    %v3533 = vpop.permute.xlu0 %3532
    %v3535 = vmul.f32 %v3530, %v3533
    %v3536 = vld [vmem:[%s93] sm:$0xff]
    %v3537 = vld [vmem:[%s93 + $0x8] sm:$0xff]
    %v3538 = vld [vmem:[%s93 + $0x10] sm:$0xff]
    %v3539 = vld [vmem:[%s93 + $0x18] sm:$0xff]
    %v3540 = vld [vmem:[#allocation55] sm:$0x1]
    %v3542 = vlaneseq
    %v3543 = vshrl.u32 %v3542, 7
    %v3544 = vsub.s32 0, %v3543
    %v3545 = vrot.slane %v3540, %v3544
    %v3548 = vsel %vm1210, %v3535, 0
    %3550 = vmatprep.subr.mxu0 0.0
    %3551 = vmatpush1.msra.mxu0 0.0
    %3552 = vmatprep.subr.mxu0 0.0
    %3553 = vmatpush1.msra.mxu0 0.0
    %3554 = vmatprep.subr.mxu0 0.0
    %3555 = vmatpush1.msra.mxu0 0.0
    %3556 = vmatprep.subr.mxu0 0.0
    %3557 = vmatpush1.msra.mxu0 0.0
    %3558 = vmatprep.subr.mxu0 0.0
    %3559 = vmatpush1.msra.mxu0 0.0
    %3560 = vmatprep.subr.mxu0 0.0
    %3561 = vmatpush1.msra.mxu0 0.0
    %3562 = vmatprep.subr.mxu0 0.0
    %3563 = vmatpush1.msra.mxu0 0.0
    %3564 = vmatprep.subr.mxu0 0.0
    %3565 = vmatpush1.msra.mxu0 0.0
    %3566 = vmatprep.subr.mxu0 0.0
    %3567 = vmatpush1.msra.mxu0 0.0
    %3568 = vmatprep.subr.mxu0 0.0
    %3569 = vmatpush1.msra.mxu0 0.0
    %3570 = vmatprep.subr.mxu0 0.0
    %3571 = vmatpush1.msra.mxu0 0.0
    %3572 = vmatprep.subr.mxu0 0.0
    %3573 = vmatpush1.msra.mxu0 0.0
    %3574 = vmatprep.subr.mxu0 0.0
    %3575 = vmatpush1.msra.mxu0 %v3539
    %3576 = vmatprep.subr.mxu0 0.0
    %3577 = vmatpush1.msra.mxu0 %v3538
    %3578 = vmatprep.subr.mxu0 0.0
    %3579 = vmatpush1.msra.mxu0 %v3537
    %3580 = vmatprep.subr.mxu0 0.0
    %3581 = vmatpush1.msra.mxu0 %v3536
    %3582 = vmatprep.subr.mxu0 0.0
    %3583 = vmatpush2.msra.mxu0 0.0
    %3584 = vmatprep.subr.mxu0 0.0
    %3585 = vmatpush2.msra.mxu0 0.0
    %3586 = vmatprep.subr.mxu0 0.0
    %3587 = vmatpush2.msra.mxu0 0.0
    %3588 = vmatprep.subr.mxu0 0.0
    %3589 = vmatpush2.msra.mxu0 0.0
    %3590 = vmatprep.subr.mxu0 0.0
    %3591 = vmatpush2.msra.mxu0 0.0
    %3592 = vmatprep.subr.mxu0 0.0
    %3593 = vmatpush2.msra.mxu0 0.0
    %3594 = vmatprep.subr.mxu0 0.0
    %3595 = vmatpush2.msra.mxu0 0.0
    %3596 = vmatprep.subr.mxu0 0.0
    %3597 = vmatpush2.msra.mxu0 0.0
    %3598 = vmatprep.subr.mxu0 0.0
    %3599 = vmatpush2.msra.mxu0 0.0
    %3600 = vmatprep.subr.mxu0 0.0
    %3601 = vmatpush2.msra.mxu0 0.0
    %3602 = vmatprep.subr.mxu0 0.0
    %3603 = vmatpush2.msra.mxu0 0.0
    %3604 = vmatprep.subr.mxu0 0.0
    %3605 = vmatpush2.msra.mxu0 0.0
    %3606 = vmatprep.subr.mxu0 0.0
    %3607 = vmatpush2.msra.mxu0 0.0
    %3608 = vmatprep.subr.mxu0 0.0
    %3609 = vmatpush2.msra.mxu0 0.0
    %3610 = vmatprep.subr.mxu0 0.0
    %3611 = vmatpush2.msra.mxu0 0.0
    %3612 = vmatprep.subr.mxu0 0.0
    %3613 = vmatpush2.msra.mxu0 0.0
    %3614 = vmatprep.mubr.f32.mxu0 0.0
    %3615 = vmatmul.mubr.f32.gmra.mxu0 %v3548
    %v3616 = vpop.f32.mrf.mxu0
    %v3617 = vadd.f32 %v3545, %v3616
    %v3618 = vpop.f32.mrf.mxu0
    %3619 = vdwg.mxu0
    %v3620 = vxor.u32 %v3617, 2147483648
    %v3621 = vmul.f32 %v3620, 1.442695
    %v3622 = vpow.pop %v3621
    %v3623 = vadd.f32 %v3622, 1.0
    %v3624 = vrcp.pop %v3623
    %v3625 = vmul.f32 1.0, %v3624
    %v3626 = vmul.f32 %v3617, %v3625
    %v3627 = vld [vmem:[%s97] sm:$0xff]
    %v3628 = vld [vmem:[%s97 + $0x8] sm:$0xff]
    %v3629 = vld [vmem:[%s97 + $0x10] sm:$0xff]
    %v3630 = vld [vmem:[%s97 + $0x18] sm:$0xff]
    %3631 = vrot.lane.b32.xlu0 %v1115, 104
    %v3632 = vpop.permute.xlu0 %3631
    %v3635 = vsel %vm1210, %v3626, 0
    %3637 = vmatprep.subr.mxu0 0.0
    %3638 = vmatpush1.msra.mxu0 0.0
    %3639 = vmatprep.subr.mxu0 0.0
    %3640 = vmatpush1.msra.mxu0 0.0
    %3641 = vmatprep.subr.mxu0 0.0
    %3642 = vmatpush1.msra.mxu0 0.0
    %3643 = vmatprep.subr.mxu0 0.0
    %3644 = vmatpush1.msra.mxu0 0.0
    %3645 = vmatprep.subr.mxu0 0.0
    %3646 = vmatpush1.msra.mxu0 0.0
    %3647 = vmatprep.subr.mxu0 0.0
    %3648 = vmatpush1.msra.mxu0 0.0
    %3649 = vmatprep.subr.mxu0 0.0
    %3650 = vmatpush1.msra.mxu0 0.0
    %3651 = vmatprep.subr.mxu0 0.0
    %3652 = vmatpush1.msra.mxu0 0.0
    %3653 = vmatprep.subr.mxu0 0.0
    %3654 = vmatpush1.msra.mxu0 0.0
    %3655 = vmatprep.subr.mxu0 0.0
    %3656 = vmatpush1.msra.mxu0 0.0
    %3657 = vmatprep.subr.mxu0 0.0
    %3658 = vmatpush1.msra.mxu0 0.0
    %3659 = vmatprep.subr.mxu0 0.0
    %3660 = vmatpush1.msra.mxu0 0.0
    %3661 = vmatprep.subr.mxu0 0.0
    %3662 = vmatpush1.msra.mxu0 %v3630
    %3663 = vmatprep.subr.mxu0 0.0
    %3664 = vmatpush1.msra.mxu0 %v3629
    %3665 = vmatprep.subr.mxu0 0.0
    %3666 = vmatpush1.msra.mxu0 %v3628
    %3667 = vmatprep.subr.mxu0 0.0
    %3668 = vmatpush1.msra.mxu0 %v3627
    %3669 = vmatprep.subr.mxu0 0.0
    %3670 = vmatpush2.msra.mxu0 0.0
    %3671 = vmatprep.subr.mxu0 0.0
    %3672 = vmatpush2.msra.mxu0 0.0
    %3673 = vmatprep.subr.mxu0 0.0
    %3674 = vmatpush2.msra.mxu0 0.0
    %3675 = vmatprep.subr.mxu0 0.0
    %3676 = vmatpush2.msra.mxu0 0.0
    %3677 = vmatprep.subr.mxu0 0.0
    %3678 = vmatpush2.msra.mxu0 0.0
    %3679 = vmatprep.subr.mxu0 0.0
    %3680 = vmatpush2.msra.mxu0 0.0
    %3681 = vmatprep.subr.mxu0 0.0
    %3682 = vmatpush2.msra.mxu0 0.0
    %3683 = vmatprep.subr.mxu0 0.0
    %3684 = vmatpush2.msra.mxu0 0.0
    %3685 = vmatprep.subr.mxu0 0.0
    %3686 = vmatpush2.msra.mxu0 0.0
    %3687 = vmatprep.subr.mxu0 0.0
    %3688 = vmatpush2.msra.mxu0 0.0
    %3689 = vmatprep.subr.mxu0 0.0
    %3690 = vmatpush2.msra.mxu0 0.0
    %3691 = vmatprep.subr.mxu0 0.0
    %3692 = vmatpush2.msra.mxu0 0.0
    %3693 = vmatprep.subr.mxu0 0.0
    %3694 = vmatpush2.msra.mxu0 0.0
    %3695 = vmatprep.subr.mxu0 0.0
    %3696 = vmatpush2.msra.mxu0 0.0
    %3697 = vmatprep.subr.mxu0 0.0
    %3698 = vmatpush2.msra.mxu0 0.0
    %3699 = vmatprep.subr.mxu0 0.0
    %3700 = vmatpush2.msra.mxu0 0.0
    %3701 = vmatprep.mubr.f32.mxu0 0.0
    %3702 = vmatmul.mubr.f32.gmra.mxu0 %v3635
    %v3703 = vpop.f32.mrf.mxu0
    %v3704 = vadd.f32 %v3632, %v3703
    %v3705 = vpop.f32.mrf.mxu0
    %3706 = vdwg.mxu0
    %v3707 = vxor.u32 %v3704, 2147483648
    %v3708 = vmul.f32 %v3707, 1.442695
    %v3709 = vpow.pop %v3708
    %v3710 = vadd.f32 %v3709, 1.0
    %v3711 = vrcp.pop %v3710
    %v3712 = vmul.f32 1.0, %v3711
    %v3713 = vmul.f32 %v3704, %v3712
    %3715 = vrot.lane.b32.xlu0 %v3704, 96
    %v3716 = vpop.permute.xlu0 %3715
    %v3718 = vmul.f32 %v3713, %v3716
    %v3719 = vld [vmem:[%s99] sm:$0xff]
    %v3720 = vld [vmem:[%s99 + $0x8] sm:$0xff]
    %v3721 = vld [vmem:[%s99 + $0x10] sm:$0xff]
    %v3722 = vld [vmem:[%s99 + $0x18] sm:$0xff]
    %v3723 = vld [vmem:[#allocation56] sm:$0x1]
    %v3725 = vlaneseq
    %v3726 = vshrl.u32 %v3725, 7
    %v3727 = vsub.s32 0, %v3726
    %v3728 = vrot.slane %v3723, %v3727
    %v3731 = vsel %vm1210, %v3718, 0
    %3733 = vmatprep.subr.mxu0 0.0
    %3734 = vmatpush1.msra.mxu0 0.0
    %3735 = vmatprep.subr.mxu0 0.0
    %3736 = vmatpush1.msra.mxu0 0.0
    %3737 = vmatprep.subr.mxu0 0.0
    %3738 = vmatpush1.msra.mxu0 0.0
    %3739 = vmatprep.subr.mxu0 0.0
    %3740 = vmatpush1.msra.mxu0 0.0
    %3741 = vmatprep.subr.mxu0 0.0
    %3742 = vmatpush1.msra.mxu0 0.0
    %3743 = vmatprep.subr.mxu0 0.0
    %3744 = vmatpush1.msra.mxu0 0.0
    %3745 = vmatprep.subr.mxu0 0.0
    %3746 = vmatpush1.msra.mxu0 0.0
    %3747 = vmatprep.subr.mxu0 0.0
    %3748 = vmatpush1.msra.mxu0 0.0
    %3749 = vmatprep.subr.mxu0 0.0
    %3750 = vmatpush1.msra.mxu0 0.0
    %3751 = vmatprep.subr.mxu0 0.0
    %3752 = vmatpush1.msra.mxu0 0.0
    %3753 = vmatprep.subr.mxu0 0.0
    %3754 = vmatpush1.msra.mxu0 0.0
    %3755 = vmatprep.subr.mxu0 0.0
    %3756 = vmatpush1.msra.mxu0 0.0
    %3757 = vmatprep.subr.mxu0 0.0
    %3758 = vmatpush1.msra.mxu0 %v3722
    %3759 = vmatprep.subr.mxu0 0.0
    %3760 = vmatpush1.msra.mxu0 %v3721
    %3761 = vmatprep.subr.mxu0 0.0
    %3762 = vmatpush1.msra.mxu0 %v3720
    %3763 = vmatprep.subr.mxu0 0.0
    %3764 = vmatpush1.msra.mxu0 %v3719
    %3765 = vmatprep.subr.mxu0 0.0
    %3766 = vmatpush2.msra.mxu0 0.0
    %3767 = vmatprep.subr.mxu0 0.0
    %3768 = vmatpush2.msra.mxu0 0.0
    %3769 = vmatprep.subr.mxu0 0.0
    %3770 = vmatpush2.msra.mxu0 0.0
    %3771 = vmatprep.subr.mxu0 0.0
    %3772 = vmatpush2.msra.mxu0 0.0
    %3773 = vmatprep.subr.mxu0 0.0
    %3774 = vmatpush2.msra.mxu0 0.0
    %3775 = vmatprep.subr.mxu0 0.0
    %3776 = vmatpush2.msra.mxu0 0.0
    %3777 = vmatprep.subr.mxu0 0.0
    %3778 = vmatpush2.msra.mxu0 0.0
    %3779 = vmatprep.subr.mxu0 0.0
    %3780 = vmatpush2.msra.mxu0 0.0
    %3781 = vmatprep.subr.mxu0 0.0
    %3782 = vmatpush2.msra.mxu0 0.0
    %3783 = vmatprep.subr.mxu0 0.0
    %3784 = vmatpush2.msra.mxu0 0.0
    %3785 = vmatprep.subr.mxu0 0.0
    %3786 = vmatpush2.msra.mxu0 0.0
    %3787 = vmatprep.subr.mxu0 0.0
    %3788 = vmatpush2.msra.mxu0 0.0
    %3789 = vmatprep.subr.mxu0 0.0
    %3790 = vmatpush2.msra.mxu0 0.0
    %3791 = vmatprep.subr.mxu0 0.0
    %3792 = vmatpush2.msra.mxu0 0.0
    %3793 = vmatprep.subr.mxu0 0.0
    %3794 = vmatpush2.msra.mxu0 0.0
    %3795 = vmatprep.subr.mxu0 0.0
    %3796 = vmatpush2.msra.mxu0 0.0
    %3797 = vmatprep.mubr.f32.mxu0 0.0
    %3798 = vmatmul.mubr.f32.gmra.mxu0 %v3731
    %v3799 = vpop.f32.mrf.mxu0
    %v3800 = vadd.f32 %v3728, %v3799
    %v3801 = vpop.f32.mrf.mxu0
    %3802 = vdwg.mxu0
    %v3803 = vadd.f32 %v3617, %v3800
    %v3804 = vadd.f32 %v1667, %v3803
    %v3805 = vadd.f32 %v3804, %v1306
    %v3806 = vld [vmem:[%s103] sm:$0xff]
    %v3807 = vld [vmem:[%s103 + $0x8] sm:$0xff]
    %v3808 = vld [vmem:[%s103 + $0x10] sm:$0xff]
    %v3809 = vld [vmem:[%s103 + $0x18] sm:$0xff]
    %3811 = vrot.lane.b32.xlu0 %v1184, 40
    %v3812 = vpop.permute.xlu0 %3811
    %v3813 = vsel %vm3448, %v3447, %v3812
    %v3816 = vsel %vm1210, %v3805, 0
    %3818 = vmatprep.subr.mxu0 0.0
    %3819 = vmatpush1.msra.mxu0 0.0
    %3820 = vmatprep.subr.mxu0 0.0
    %3821 = vmatpush1.msra.mxu0 0.0
    %3822 = vmatprep.subr.mxu0 0.0
    %3823 = vmatpush1.msra.mxu0 0.0
    %3824 = vmatprep.subr.mxu0 0.0
    %3825 = vmatpush1.msra.mxu0 0.0
    %3826 = vmatprep.subr.mxu0 0.0
    %3827 = vmatpush1.msra.mxu0 0.0
    %3828 = vmatprep.subr.mxu0 0.0
    %3829 = vmatpush1.msra.mxu0 0.0
    %3830 = vmatprep.subr.mxu0 0.0
    %3831 = vmatpush1.msra.mxu0 0.0
    %3832 = vmatprep.subr.mxu0 0.0
    %3833 = vmatpush1.msra.mxu0 0.0
    %3834 = vmatprep.subr.mxu0 0.0
    %3835 = vmatpush1.msra.mxu0 0.0
    %3836 = vmatprep.subr.mxu0 0.0
    %3837 = vmatpush1.msra.mxu0 0.0
    %3838 = vmatprep.subr.mxu0 0.0
    %3839 = vmatpush1.msra.mxu0 0.0
    %3840 = vmatprep.subr.mxu0 0.0
    %3841 = vmatpush1.msra.mxu0 0.0
    %3842 = vmatprep.subr.mxu0 0.0
    %3843 = vmatpush1.msra.mxu0 %v3809
    %3844 = vmatprep.subr.mxu0 0.0
    %3845 = vmatpush1.msra.mxu0 %v3808
    %3846 = vmatprep.subr.mxu0 0.0
    %3847 = vmatpush1.msra.mxu0 %v3807
    %3848 = vmatprep.subr.mxu0 0.0
    %3849 = vmatpush1.msra.mxu0 %v3806
    %3850 = vmatprep.subr.mxu0 0.0
    %3851 = vmatpush2.msra.mxu0 0.0
    %3852 = vmatprep.subr.mxu0 0.0
    %3853 = vmatpush2.msra.mxu0 0.0
    %3854 = vmatprep.subr.mxu0 0.0
    %3855 = vmatpush2.msra.mxu0 0.0
    %3856 = vmatprep.subr.mxu0 0.0
    %3857 = vmatpush2.msra.mxu0 0.0
    %3858 = vmatprep.subr.mxu0 0.0
    %3859 = vmatpush2.msra.mxu0 0.0
    %3860 = vmatprep.subr.mxu0 0.0
    %3861 = vmatpush2.msra.mxu0 0.0
    %3862 = vmatprep.subr.mxu0 0.0
    %3863 = vmatpush2.msra.mxu0 0.0
    %3864 = vmatprep.subr.mxu0 0.0
    %3865 = vmatpush2.msra.mxu0 0.0
    %3866 = vmatprep.subr.mxu0 0.0
    %3867 = vmatpush2.msra.mxu0 0.0
    %3868 = vmatprep.subr.mxu0 0.0
    %3869 = vmatpush2.msra.mxu0 0.0
    %3870 = vmatprep.subr.mxu0 0.0
    %3871 = vmatpush2.msra.mxu0 0.0
    %3872 = vmatprep.subr.mxu0 0.0
    %3873 = vmatpush2.msra.mxu0 0.0
    %3874 = vmatprep.subr.mxu0 0.0
    %3875 = vmatpush2.msra.mxu0 0.0
    %3876 = vmatprep.subr.mxu0 0.0
    %3877 = vmatpush2.msra.mxu0 0.0
    %3878 = vmatprep.subr.mxu0 0.0
    %3879 = vmatpush2.msra.mxu0 0.0
    %3880 = vmatprep.subr.mxu0 0.0
    %3881 = vmatpush2.msra.mxu0 0.0
    %3882 = vmatprep.mubr.f32.mxu0 0.0
    %3883 = vmatmul.mubr.f32.gmra.mxu0 %v3816
    %v3884 = vpop.f32.mrf.mxu0
    %v3885 = vadd.f32 %v3813, %v3884
    %v3886 = vpop.f32.mrf.mxu0
    %3887 = vdwg.mxu0
    %v3888 = vxor.u32 %v3885, 2147483648
    %v3889 = vmul.f32 %v3888, 1.442695
    %v3890 = vpow.pop %v3889
    %v3891 = vadd.f32 %v3890, 1.0
    %v3892 = vrcp.pop %v3891
    %v3893 = vmul.f32 1.0, %v3892
    %v3894 = vmul.f32 %v3885, %v3893
    %3896 = vrot.lane.b32.xlu0 %v3885, 96
    %v3897 = vpop.permute.xlu0 %3896
    %v3899 = vmul.f32 %v3894, %v3897
    %v3900 = vld [vmem:[%s105] sm:$0xff]
    %v3901 = vld [vmem:[%s105 + $0x8] sm:$0xff]
    %v3902 = vld [vmem:[%s105 + $0x10] sm:$0xff]
    %v3903 = vld [vmem:[%s105 + $0x18] sm:$0xff]
    %v3904 = vld [vmem:[#allocation58] sm:$0x1]
    %v3906 = vlaneseq
    %v3907 = vshrl.u32 %v3906, 7
    %v3908 = vsub.s32 0, %v3907
    %v3909 = vrot.slane %v3904, %v3908
    %v3912 = vsel %vm1210, %v3899, 0
    %3914 = vmatprep.subr.mxu0 0.0
    %3915 = vmatpush1.msra.mxu0 0.0
    %3916 = vmatprep.subr.mxu0 0.0
    %3917 = vmatpush1.msra.mxu0 0.0
    %3918 = vmatprep.subr.mxu0 0.0
    %3919 = vmatpush1.msra.mxu0 0.0
    %3920 = vmatprep.subr.mxu0 0.0
    %3921 = vmatpush1.msra.mxu0 0.0
    %3922 = vmatprep.subr.mxu0 0.0
    %3923 = vmatpush1.msra.mxu0 0.0
    %3924 = vmatprep.subr.mxu0 0.0
    %3925 = vmatpush1.msra.mxu0 0.0
    %3926 = vmatprep.subr.mxu0 0.0
    %3927 = vmatpush1.msra.mxu0 0.0
    %3928 = vmatprep.subr.mxu0 0.0
    %3929 = vmatpush1.msra.mxu0 0.0
    %3930 = vmatprep.subr.mxu0 0.0
    %3931 = vmatpush1.msra.mxu0 0.0
    %3932 = vmatprep.subr.mxu0 0.0
    %3933 = vmatpush1.msra.mxu0 0.0
    %3934 = vmatprep.subr.mxu0 0.0
    %3935 = vmatpush1.msra.mxu0 0.0
    %3936 = vmatprep.subr.mxu0 0.0
    %3937 = vmatpush1.msra.mxu0 0.0
    %3938 = vmatprep.subr.mxu0 0.0
    %3939 = vmatpush1.msra.mxu0 %v3903
    %3940 = vmatprep.subr.mxu0 0.0
    %3941 = vmatpush1.msra.mxu0 %v3902
    %3942 = vmatprep.subr.mxu0 0.0
    %3943 = vmatpush1.msra.mxu0 %v3901
    %3944 = vmatprep.subr.mxu0 0.0
    %3945 = vmatpush1.msra.mxu0 %v3900
    %3946 = vmatprep.subr.mxu0 0.0
    %3947 = vmatpush2.msra.mxu0 0.0
    %3948 = vmatprep.subr.mxu0 0.0
    %3949 = vmatpush2.msra.mxu0 0.0
    %3950 = vmatprep.subr.mxu0 0.0
    %3951 = vmatpush2.msra.mxu0 0.0
    %3952 = vmatprep.subr.mxu0 0.0
    %3953 = vmatpush2.msra.mxu0 0.0
    %3954 = vmatprep.subr.mxu0 0.0
    %3955 = vmatpush2.msra.mxu0 0.0
    %3956 = vmatprep.subr.mxu0 0.0
    %3957 = vmatpush2.msra.mxu0 0.0
    %3958 = vmatprep.subr.mxu0 0.0
    %3959 = vmatpush2.msra.mxu0 0.0
    %3960 = vmatprep.subr.mxu0 0.0
    %3961 = vmatpush2.msra.mxu0 0.0
    %3962 = vmatprep.subr.mxu0 0.0
    %3963 = vmatpush2.msra.mxu0 0.0
    %3964 = vmatprep.subr.mxu0 0.0
    %3965 = vmatpush2.msra.mxu0 0.0
    %3966 = vmatprep.subr.mxu0 0.0
    %3967 = vmatpush2.msra.mxu0 0.0
    %3968 = vmatprep.subr.mxu0 0.0
    %3969 = vmatpush2.msra.mxu0 0.0
    %3970 = vmatprep.subr.mxu0 0.0
    %3971 = vmatpush2.msra.mxu0 0.0
    %3972 = vmatprep.subr.mxu0 0.0
    %3973 = vmatpush2.msra.mxu0 0.0
    %3974 = vmatprep.subr.mxu0 0.0
    %3975 = vmatpush2.msra.mxu0 0.0
    %3976 = vmatprep.subr.mxu0 0.0
    %3977 = vmatpush2.msra.mxu0 0.0
    %3978 = vmatprep.mubr.f32.mxu0 0.0
    %3979 = vmatmul.mubr.f32.gmra.mxu0 %v3912
    %v3980 = vpop.f32.mrf.mxu0
    %v3981 = vadd.f32 %v3909, %v3980
    %v3982 = vpop.f32.mrf.mxu0
    %3983 = vdwg.mxu0
    %v3984 = vxor.u32 %v3981, 2147483648
    %v3985 = vmul.f32 %v3984, 1.442695
    %v3986 = vpow.pop %v3985
    %v3987 = vadd.f32 %v3986, 1.0
    %v3988 = vrcp.pop %v3987
    %v3989 = vmul.f32 1.0, %v3988
    %v3990 = vmul.f32 %v3981, %v3989
    %v3991 = vadd.f32 %v3805, %v3990
    %v3992 = vld [vmem:[%s109] sm:$0xff]
    %v3993 = vld [vmem:[%s109 + $0x8] sm:$0xff]
    %v3994 = vld [vmem:[%s109 + $0x10] sm:$0xff]
    %v3995 = vld [vmem:[%s109 + $0x18] sm:$0xff]
    %3996 = vrot.lane.b32.xlu0 %v1184, 104
    %v3997 = vpop.permute.xlu0 %3996
    %v4000 = vsel %vm1210, %v3991, 0
    %4002 = vmatprep.subr.mxu0 0.0
    %4003 = vmatpush1.msra.mxu0 0.0
    %4004 = vmatprep.subr.mxu0 0.0
    %4005 = vmatpush1.msra.mxu0 0.0
    %4006 = vmatprep.subr.mxu0 0.0
    %4007 = vmatpush1.msra.mxu0 0.0
    %4008 = vmatprep.subr.mxu0 0.0
    %4009 = vmatpush1.msra.mxu0 0.0
    %4010 = vmatprep.subr.mxu0 0.0
    %4011 = vmatpush1.msra.mxu0 0.0
    %4012 = vmatprep.subr.mxu0 0.0
    %4013 = vmatpush1.msra.mxu0 0.0
    %4014 = vmatprep.subr.mxu0 0.0
    %4015 = vmatpush1.msra.mxu0 0.0
    %4016 = vmatprep.subr.mxu0 0.0
    %4017 = vmatpush1.msra.mxu0 0.0
    %4018 = vmatprep.subr.mxu0 0.0
    %4019 = vmatpush1.msra.mxu0 0.0
    %4020 = vmatprep.subr.mxu0 0.0
    %4021 = vmatpush1.msra.mxu0 0.0
    %4022 = vmatprep.subr.mxu0 0.0
    %4023 = vmatpush1.msra.mxu0 0.0
    %4024 = vmatprep.subr.mxu0 0.0
    %4025 = vmatpush1.msra.mxu0 0.0
    %4026 = vmatprep.subr.mxu0 0.0
    %4027 = vmatpush1.msra.mxu0 %v3995
    %4028 = vmatprep.subr.mxu0 0.0
    %4029 = vmatpush1.msra.mxu0 %v3994
    %4030 = vmatprep.subr.mxu0 0.0
    %4031 = vmatpush1.msra.mxu0 %v3993
    %4032 = vmatprep.subr.mxu0 0.0
    %4033 = vmatpush1.msra.mxu0 %v3992
    %4034 = vmatprep.subr.mxu0 0.0
    %4035 = vmatpush2.msra.mxu0 0.0
    %4036 = vmatprep.subr.mxu0 0.0
    %4037 = vmatpush2.msra.mxu0 0.0
    %4038 = vmatprep.subr.mxu0 0.0
    %4039 = vmatpush2.msra.mxu0 0.0
    %4040 = vmatprep.subr.mxu0 0.0
    %4041 = vmatpush2.msra.mxu0 0.0
    %4042 = vmatprep.subr.mxu0 0.0
    %4043 = vmatpush2.msra.mxu0 0.0
    %4044 = vmatprep.subr.mxu0 0.0
    %4045 = vmatpush2.msra.mxu0 0.0
    %4046 = vmatprep.subr.mxu0 0.0
    %4047 = vmatpush2.msra.mxu0 0.0
    %4048 = vmatprep.subr.mxu0 0.0
    %4049 = vmatpush2.msra.mxu0 0.0
    %4050 = vmatprep.subr.mxu0 0.0
    %4051 = vmatpush2.msra.mxu0 0.0
    %4052 = vmatprep.subr.mxu0 0.0
    %4053 = vmatpush2.msra.mxu0 0.0
    %4054 = vmatprep.subr.mxu0 0.0
    %4055 = vmatpush2.msra.mxu0 0.0
    %4056 = vmatprep.subr.mxu0 0.0
    %4057 = vmatpush2.msra.mxu0 0.0
    %4058 = vmatprep.subr.mxu0 0.0
    %4059 = vmatpush2.msra.mxu0 0.0
    %4060 = vmatprep.subr.mxu0 0.0
    %4061 = vmatpush2.msra.mxu0 0.0
    %4062 = vmatprep.subr.mxu0 0.0
    %4063 = vmatpush2.msra.mxu0 0.0
    %4064 = vmatprep.subr.mxu0 0.0
    %4065 = vmatpush2.msra.mxu0 0.0
    %4066 = vmatprep.mubr.f32.mxu0 0.0
    %4067 = vmatmul.mubr.f32.gmra.mxu0 %v4000
    %v4068 = vpop.f32.mrf.mxu0
    %v4069 = vadd.f32 %v3997, %v4068
    %v4070 = vpop.f32.mrf.mxu0
    %4071 = vdwg.mxu0
    %v4072 = vxor.u32 %v4069, 2147483648
    %v4073 = vmul.f32 %v4072, 1.442695
    %v4074 = vpow.pop %v4073
    %v4075 = vadd.f32 %v4074, 1.0
    %v4076 = vrcp.pop %v4075
    %v4077 = vmul.f32 1.0, %v4076
    %v4078 = vmul.f32 %v4069, %v4077
    %4080 = vrot.lane.b32.xlu0 %v4069, 96
    %v4081 = vpop.permute.xlu0 %4080
    %v4083 = vmul.f32 %v4078, %v4081
    %v4084 = vld [vmem:[%s111] sm:$0xff]
    %v4085 = vld [vmem:[%s111 + $0x8] sm:$0xff]
    %v4086 = vld [vmem:[%s111 + $0x10] sm:$0xff]
    %v4087 = vld [vmem:[%s111 + $0x18] sm:$0xff]
    %v4088 = vld [vmem:[#allocation59] sm:$0x1]
    %v4090 = vlaneseq
    %v4091 = vshrl.u32 %v4090, 7
    %v4092 = vsub.s32 0, %v4091
    %v4093 = vrot.slane %v4088, %v4092
    %v4096 = vsel %vm1210, %v4083, 0
    %4098 = vmatprep.subr.mxu0 0.0
    %4099 = vmatpush1.msra.mxu0 0.0
    %4100 = vmatprep.subr.mxu0 0.0
    %4101 = vmatpush1.msra.mxu0 0.0
    %4102 = vmatprep.subr.mxu0 0.0
    %4103 = vmatpush1.msra.mxu0 0.0
    %4104 = vmatprep.subr.mxu0 0.0
    %4105 = vmatpush1.msra.mxu0 0.0
    %4106 = vmatprep.subr.mxu0 0.0
    %4107 = vmatpush1.msra.mxu0 0.0
    %4108 = vmatprep.subr.mxu0 0.0
    %4109 = vmatpush1.msra.mxu0 0.0
    %4110 = vmatprep.subr.mxu0 0.0
    %4111 = vmatpush1.msra.mxu0 0.0
    %4112 = vmatprep.subr.mxu0 0.0
    %4113 = vmatpush1.msra.mxu0 0.0
    %4114 = vmatprep.subr.mxu0 0.0
    %4115 = vmatpush1.msra.mxu0 0.0
    %4116 = vmatprep.subr.mxu0 0.0
    %4117 = vmatpush1.msra.mxu0 0.0
    %4118 = vmatprep.subr.mxu0 0.0
    %4119 = vmatpush1.msra.mxu0 0.0
    %4120 = vmatprep.subr.mxu0 0.0
    %4121 = vmatpush1.msra.mxu0 0.0
    %4122 = vmatprep.subr.mxu0 0.0
    %4123 = vmatpush1.msra.mxu0 %v4087
    %4124 = vmatprep.subr.mxu0 0.0
    %4125 = vmatpush1.msra.mxu0 %v4086
    %4126 = vmatprep.subr.mxu0 0.0
    %4127 = vmatpush1.msra.mxu0 %v4085
    %4128 = vmatprep.subr.mxu0 0.0
    %4129 = vmatpush1.msra.mxu0 %v4084
    %4130 = vmatprep.subr.mxu0 0.0
    %4131 = vmatpush2.msra.mxu0 0.0
    %4132 = vmatprep.subr.mxu0 0.0
    %4133 = vmatpush2.msra.mxu0 0.0
    %4134 = vmatprep.subr.mxu0 0.0
    %4135 = vmatpush2.msra.mxu0 0.0
    %4136 = vmatprep.subr.mxu0 0.0
    %4137 = vmatpush2.msra.mxu0 0.0
    %4138 = vmatprep.subr.mxu0 0.0
    %4139 = vmatpush2.msra.mxu0 0.0
    %4140 = vmatprep.subr.mxu0 0.0
    %4141 = vmatpush2.msra.mxu0 0.0
    %4142 = vmatprep.subr.mxu0 0.0
    %4143 = vmatpush2.msra.mxu0 0.0
    %4144 = vmatprep.subr.mxu0 0.0
    %4145 = vmatpush2.msra.mxu0 0.0
    %4146 = vmatprep.subr.mxu0 0.0
    %4147 = vmatpush2.msra.mxu0 0.0
    %4148 = vmatprep.subr.mxu0 0.0
    %4149 = vmatpush2.msra.mxu0 0.0
    %4150 = vmatprep.subr.mxu0 0.0
    %4151 = vmatpush2.msra.mxu0 0.0
    %4152 = vmatprep.subr.mxu0 0.0
    %4153 = vmatpush2.msra.mxu0 0.0
    %4154 = vmatprep.subr.mxu0 0.0
    %4155 = vmatpush2.msra.mxu0 0.0
    %4156 = vmatprep.subr.mxu0 0.0
    %4157 = vmatpush2.msra.mxu0 0.0
    %4158 = vmatprep.subr.mxu0 0.0
    %4159 = vmatpush2.msra.mxu0 0.0
    %4160 = vmatprep.subr.mxu0 0.0
    %4161 = vmatpush2.msra.mxu0 0.0
    %4162 = vmatprep.mubr.f32.mxu0 0.0
    %4163 = vmatmul.mubr.f32.gmra.mxu0 %v4096
    %v4164 = vpop.f32.mrf.mxu0
    %v4165 = vadd.f32 %v4093, %v4164
    %v4166 = vpop.f32.mrf.mxu0
    %4167 = vdwg.mxu0
    %v4168 = vadd.f32 %v3805, %v4165
    %vm4169 = vcmask 254976
    %4170 = vst.msk [vmem:[#allocation61] sm:$0x3] %vm4169, %v4168
    // Predicated region
    $region382: #{non_conv_unet_forward.1} parent=1 // pred_check
      _
    $region383: #{non_conv_unet_forward.1} parent=1 // pred_check_branch
      %4172 = sbr.rel (0) target = $region385
    $region384: #{non_conv_unet_forward.1} parent=1 // pred_region
      %s4174 = ssub.s32 32, 32
      %4175 = vsyncadd [#allocation4], %s4174
      %s4177 = sshll.u32 [#allocation61], 4
      %s4178 = int_to_ptr.vmem [resolvable:$true] %s4177
      %4180 = dma.vmem_to_hbm [thread:$0]  %s4178, 32, %s115, [#allocation4]
    $region385: #{non_conv_unet_forward.1} parent=1 // pred_fallthru
      _
    // Predicated region
    $region386: #{non_conv_unet_forward.1} parent=1 // pred_check
      _
    $region387: #{non_conv_unet_forward.1} parent=1 // pred_check_branch
      %4182 = sbr.rel (0) target = $region389
    $region388: #{non_conv_unet_forward.1} parent=1 // pred_region
      %4183 = dma.done [#allocation4], 32
    $region389: #{non_conv_unet_forward.1} parent=1 // pred_fallthru
      _
    %4184 = vsyncpa [#allocation3], 1
    %4185 = vsyncpa [#allocation6], 1
    %4186 = vsyncpa [#allocation9], 1
    %4187 = vsyncpa [#allocation12], 1
    %4188 = vsyncpa [#allocation15], 1
    %4189 = vsyncpa [#allocation18], 1
    %4190 = vsyncpa [#allocation21], 1
    %4191 = vsyncpa [#allocation24], 1
    %4192 = vsyncpa [#allocation27], 1
    %4193 = vsyncpa [#allocation30], 1
    %4194 = vsyncpa [#allocation33], 1
    %4195 = vsyncpa [#allocation36], 1
    %4196 = vsyncpa [#allocation39], 1
    %4197 = vsyncpa [#allocation42], 1
    %4198 = vsyncpa [#allocation45], 1
    %4199 = vsyncpa [#allocation48], 1
    %4200 = vsyncpa [#allocation51], 1
    %4201 = vsyncpa [#allocation54], 1
    %4202 = vsyncpa [#allocation57], 1
    %4203 = vsyncpa [#allocation60], 1
    %4204 = vsyncpa [#allocation4], 1

</llo_original>
